<compile_context>
chip_gen: v7x
topology: tpu7x:2x2x1
jax: 0.10.0
libtpu: 0.0.40
codegen_flags: <defaults>
</compile_context>

<pallas_src>
import functools

import numpy as np
import jax
import jax.numpy as jnp
from jax import lax
from jax.experimental import pallas as pl
from jax.experimental.pallas import tpu as pltpu


def _round_up(n, m):
    return ((n + m - 1) // m) * m


# ----------------------------- fused Pallas kernel --------------------------

def _lenet_kernel(x1_ref, m1_ref, b1_ref, m2_ref, b2_ref, g1_ref, bf1_ref,
                  wf2_ref, bf2_ref, wo_ref, bo_ref, o_ref, p1_ref, p2_ref, *,
                  bt):
    f32 = jnp.float32

    def dot(a, b):
        return jnp.dot(a, b, preferred_element_type=f32)

    # ---- conv1 (5x5, 1->6) + bias + ReLU fused with 2x2 max-pool -----------
    # x1_ref[g]: (Bt, 140) with g = di*12 + q*6 + t  (row-phase di, pooled-row
    # parity q, pooled-row half t); columns = (kh, input column).
    # m1: (140, 256); lanes [0,128) are col-phase dj=0, lanes [128,256) dj=1,
    # each holding columns (qj, co, u) in [0,72), zero-padded to 128.
    b1 = b1_ref[...]                                           # (1, 128)
    for gq in range(12):                                       # gq = q*6 + t
        y0 = dot(x1_ref[gq], m1_ref[...])                      # di = 0 rows
        y1 = dot(x1_ref[12 + gq], m1_ref[...])                 # di = 1 rows
        pre = jnp.maximum(y0, y1)                              # pool over di
        pre = jnp.maximum(pre[:, :128], pre[:, 128:])          # pool over dj
        p1_ref[pl.ds(gq * bt, bt), :] = jnp.maximum(pre + b1, 0.0)

    # ---- conv2 (5x5, 6->12) + bias + ReLU fused with 2x2 max-pool ----------
    # For each output-row phase di2 and tap kh the needed pooled-conv1 rows
    # form one contiguous, 8-aligned 4*Bt-row slice of p1.  m2[kh] is
    # (128, 256) with the dj2 pair fused into the two 128-lane halves.
    b2 = b2_ref[...]                                           # (1, 128)
    pre2 = None
    for di2 in range(2):
        acc = None
        for kh in range(5):
            v = di2 + kh
            q, c = v % 2, v // 2
            xs = p1_ref[pl.ds((q * 6 + c) * bt, 4 * bt), :]    # (4Bt, 128)
            t = dot(xs, m2_ref[kh])                            # (4Bt, 256)
            acc = t if acc is None else acc + t
        blk = jnp.maximum(acc[:, :128], acc[:, 128:])          # pool over dj2
        pre2 = blk if pre2 is None else jnp.maximum(pre2, blk) # pool over di2
    p2_ref[...] = jnp.maximum(pre2 + b2, 0.0)                  # (4Bt, 128)

    # ---- fc1 -> ReLU -> fc2 -> ReLU -> out (all in-register) ---------------
    h = None
    for hp in range(4):
        t = dot(p2_ref[pl.ds(hp * bt, bt), :], g1_ref[hp])     # (Bt, 128)
        h = t if h is None else h + t
    h = jnp.maximum(h + bf1_ref[...], 0.0)                     # (Bt, 128)
    h = jnp.maximum(dot(h, wf2_ref[...]) + bf2_ref[...], 0.0)  # (Bt, 128)
    o_ref[...] = dot(h, wo_ref[...]) + bo_ref[...]             # (Bt, 128)


# ----------------------- one-time weight repacking (host) -------------------

def prepare_params(params):
    """Repack torch-layout weights into the lane-padded structured matrices
    the fused kernel consumes.  Pure numpy, run once at load time."""
    w1 = np.asarray(params["conv1_w"], np.float32)   # (6,1,5,5)
    b1 = np.asarray(params["conv1_b"], np.float32)   # (6,)
    w2 = np.asarray(params["conv2_w"], np.float32)   # (12,6,5,5)
    b2 = np.asarray(params["conv2_b"], np.float32)   # (12,)
    fc1_w = np.asarray(params["fc1_w"], np.float32)  # (120,192)

    # conv1: m1[kh*28 + w_in, dj*128 + qj*36 + co*6 + u] with conv1 output
    # column j = 4u + 2qj + dj and input column w_in = j + kw.
    m1 = np.zeros((5 * 28, 256), np.float32)
    for dj in range(2):
        for kh in range(5):
            for kw in range(5):
                for co in range(6):
                    for qj in range(2):
                        for u in range(6):
                            w_in = 4 * u + 2 * qj + dj + kw
                            m1[kh * 28 + w_in,
                               dj * 128 + qj * 36 + co * 6 + u] += w1[co, 0, kh, kw]
    b1_row = np.zeros((1, 128), np.float32)
    for qj in range(2):
        for co in range(6):
            for u in range(6):
                b1_row[0, qj * 36 + co * 6 + u] = b1[co]

    # conv2: m2[kh, qj*36 + ci*6 + u, dj2*128 + co2*4 + j2p]; pooled-conv1
    # input column wp1 = 2*j2p + dj2 + kw, with qj = wp1 % 2, u = wp1 // 2.
    m2 = np.zeros((5, 128, 256), np.float32)
    for kh in range(5):
        for dj2 in range(2):
            for co2 in range(12):
                for j2p in range(4):
                    for ci in range(6):
                        for kw in range(5):
                            wp1 = 2 * j2p + dj2 + kw
                            qj, u = wp1 % 2, wp1 // 2
                            m2[kh, qj * 36 + ci * 6 + u,
                               dj2 * 128 + co2 * 4 + j2p] += w2[co2, ci, kh, kw]
    b2_row = np.zeros((1, 128), np.float32)
    for co2 in range(12):
        for j2p in range(4):
            b2_row[0, co2 * 4 + j2p] = b2[co2]

    # fc1 weights regrouped per pooled-row index hp2 (folds the torch NCHW
    # flatten order c*16 + h*4 + w into the weights), zero-padded to 128.
    g1 = np.zeros((4, 128, 128), np.float32)
    for hp2 in range(4):
        for co2 in range(12):
            for wp2 in range(4):
                g1[hp2, co2 * 4 + wp2, :120] = fc1_w[:, co2 * 16 + hp2 * 4 + wp2]

    bf1 = np.zeros((1, 128), np.float32)
    bf1[0, :120] = np.asarray(params["fc1_b"], np.float32)

    wf2 = np.zeros((128, 128), np.float32)
    wf2[:120, :60] = np.asarray(params["fc2_w"], np.float32).T
    bf2 = np.zeros((1, 128), np.float32)
    bf2[0, :60] = np.asarray(params["fc2_b"], np.float32)

    wo = np.zeros((128, 128), np.float32)
    wo[:60, :10] = np.asarray(params["out_w"], np.float32).T
    bo = np.zeros((1, 128), np.float32)
    bo[0, :10] = np.asarray(params["out_b"], np.float32)

    return {k: jnp.asarray(v) for k, v in dict(
        m1=m1, b1=b1_row, m2=m2, b2=b2_row, g1=g1, bf1=bf1,
        wf2=wf2, bf2=bf2, wo=wo, bo=bo).items()}


# --------------------------------- x1 builder --------------------------------

def _build_x1(xs):
    """xs: (B, 28, 28) -> x1: (24, B, 140) with x1[di*12+q*6+t, b, kh*28+w] =
    xs[b, 4t+2q+di+kh, w], built from 20 static strided slices (no gather)."""
    xt = jnp.transpose(xs, (1, 0, 2))                  # (28, B, 28)
    groups = []
    for di in range(2):
        for q in range(2):
            per_kh = []
            for kh in range(5):
                s = 2 * q + di + kh
                per_kh.append(xt[s:s + 21:4])          # (6, B, 28), rows 4t+s
            groups.append(jnp.concatenate(per_kh, axis=-1))   # (6, B, 140)
    return jnp.concatenate(groups, axis=0)             # (24, B, 140)


# --------------------------------- forward -----------------------------------

def network_forward(x, aux, *, block_batch=256):
    """x: (B, 1, 28, 28) f32 -> (B, 10) f32 via one batch-tiled Pallas kernel.

    block_batch: batch tile Bt (rounded to a multiple of 8).  256 fits every
    TPU generation's default scoped VMEM; on v5e/v6e it can be raised to
    1024+ together with pltpu.CompilerParams(vmem_limit_bytes=...).
    """
    B = x.shape[0]
    xs = x.reshape(B, 28, 28)

    bt = _round_up(min(block_batch, _round_up(B, 8)), 8)
    b_pad = _round_up(B, bt)
    if b_pad != B:
        xs = jnp.pad(xs, ((0, b_pad - B), (0, 0), (0, 0)))

    x1 = _build_x1(xs)                                  # (24, b_pad, 140)
    grid = (b_pad // bt,)

    const2 = lambda i: (0, 0)
    const3 = lambda i: (0, 0, 0)
    out = pl.pallas_call(
        functools.partial(_lenet_kernel, bt=bt),
        grid=grid,
        out_shape=jax.ShapeDtypeStruct((b_pad, 128), jnp.float32),
        in_specs=[
            pl.BlockSpec((24, bt, 140), lambda i: (0, i, 0)),   # x1: batch-tiled
            pl.BlockSpec((140, 256), const2),                   # m1
            pl.BlockSpec((1, 128), const2),                     # b1
            pl.BlockSpec((5, 128, 256), const3),                # m2
            pl.BlockSpec((1, 128), const2),                     # b2
            pl.BlockSpec((4, 128, 128), const3),                # g1
            pl.BlockSpec((1, 128), const2),                     # bf1
            pl.BlockSpec((128, 128), const2),                   # wf2
            pl.BlockSpec((1, 128), const2),                     # bf2
            pl.BlockSpec((128, 128), const2),                   # wo
            pl.BlockSpec((1, 128), const2),                     # bo
        ],
        out_specs=pl.BlockSpec((bt, 128), lambda i: (i, 0)),
        scratch_shapes=[pltpu.VMEM((12 * bt, 128), jnp.float32),   # pooled conv1
                        pltpu.VMEM((4 * bt, 128), jnp.float32)],   # pooled conv2
        compiler_params=pltpu.CompilerParams(
            dimension_semantics=("parallel",)),
    )(x1, aux["m1"], aux["b1"], aux["m2"], aux["b2"], aux["g1"], aux["bf1"],
      aux["wf2"], aux["bf2"], aux["wo"], aux["bo"])

    return out[:B, :10]


# --------------------------- Pure-JAX reference ------------------------------

def reference_forward(x, params):
    dn = ("NCHW", "OIHW", "NCHW")

    def conv(x, w, b):
        y = lax.conv_general_dilated(x, w, (1, 1), "VALID", dimension_numbers=dn)
        return jnp.maximum(y + b.reshape(1, -1, 1, 1), 0.0)

    def pool(x):
        return lax.reduce_window(x, -jnp.inf, lax.max,
                                 (1, 1, 2, 2), (1, 1, 2, 2), "VALID")

    t = pool(conv(x, params["conv1_w"], params["conv1_b"]))
    t = pool(conv(t, params["conv2_w"], params["conv2_b"]))
    t = t.reshape(-1, 12 * 4 * 4)
    t = jnp.maximum(t @ params["fc1_w"].T + params["fc1_b"], 0.0)
    t = jnp.maximum(t @ params["fc2_w"].T + params["fc2_b"], 0.0)
    t = t @ params["out_w"].T + params["out_b"]
    return t


# ------------------------------ Param init -----------------------------------

def init_params(key):
    def uniform(k, shape, fan_in):
        bound = 1.0 / jnp.sqrt(float(fan_in))
        return jax.random.uniform(k, shape, jnp.float32, -bound, bound)

    ks = jax.random.split(key, 10)
    return {
        "conv1_w": uniform(ks[0], (6, 1, 5, 5), 1 * 5 * 5),
        "conv1_b": uniform(ks[1], (6,), 1 * 5 * 5),
        "conv2_w": uniform(ks[2], (12, 6, 5, 5), 6 * 5 * 5),
        "conv2_b": uniform(ks[3], (12,), 6 * 5 * 5),
        "fc1_w": uniform(ks[4], (120, 192), 192),
        "fc1_b": uniform(ks[5], (120,), 192),
        "fc2_w": uniform(ks[6], (60, 120), 120),
        "fc2_b": uniform(ks[7], (60,), 120),
        "out_w": uniform(ks[8], (10, 60), 60),
        "out_b": uniform(ks[9], (10,), 60),
    }


# --------------------------------- Main ---------------------------------------

if __name__ == "__main__":
    key = jax.random.PRNGKey(0)
    k_params, k_x = jax.random.split(key)
    params = init_params(k_params)

    # Forward pass implies 28x28 single-channel input (MNIST-like): batch=2.
    x = jax.random.normal(k_x, (2, 1, 28, 28), jnp.float32)

    aux = prepare_params(params)          # one-time weight repack (host side)
    fwd = jax.jit(network_forward)
    out = jax.block_until_ready(fwd(x, aux))

    ref = reference_forward(x, params)
    assert out.shape == (2, 10), out.shape
    err = float(jnp.max(jnp.abs(out - ref)))
    assert jnp.allclose(out, ref, atol=1e-4, rtol=1e-4), err

    print("KERNEL_OK")
</pallas_src>

<mosaic_0001>
module attributes {stable_mosaic.version = 11 : i64} {
  func.func @_lenet_kernel(%arg0: i32, %arg1: memref<24x8x140xf32, #tpu.memory_space<vmem>>, %arg2: memref<140x256xf32, #tpu.memory_space<vmem>>, %arg3: memref<1x128xf32, #tpu.memory_space<vmem>>, %arg4: memref<5x128x256xf32, #tpu.memory_space<vmem>>, %arg5: memref<1x128xf32, #tpu.memory_space<vmem>>, %arg6: memref<4x128x128xf32, #tpu.memory_space<vmem>>, %arg7: memref<1x128xf32, #tpu.memory_space<vmem>>, %arg8: memref<128x128xf32, #tpu.memory_space<vmem>>, %arg9: memref<1x128xf32, #tpu.memory_space<vmem>>, %arg10: memref<128x128xf32, #tpu.memory_space<vmem>>, %arg11: memref<1x128xf32, #tpu.memory_space<vmem>>, %arg12: memref<8x128xf32, #tpu.memory_space<vmem>>, %arg13: memref<96x128xf32, #tpu.memory_space<vmem>>, %arg14: memref<32x128xf32, #tpu.memory_space<vmem>>) attributes {dimension_semantics = [#tpu.dimension_semantics<parallel>], iteration_bounds = array<i64: 1>, scalar_prefetch = 0 : i64, scratch_operands = 2 : i64, tpu.core_type = #tpu.core_type<tc>, window_params = [{transform_indices = @transform_0, window_bounds = array<i64: 24, 8, 140>}, {pipeline_mode = #tpu.pipeline_mode<synchronous>, transform_indices = @transform_1, window_bounds = array<i64: 140, 256>}, {pipeline_mode = #tpu.pipeline_mode<synchronous>, transform_indices = @transform_2, window_bounds = array<i64: 1, 128>}, {pipeline_mode = #tpu.pipeline_mode<synchronous>, transform_indices = @transform_3, window_bounds = array<i64: 5, 128, 256>}, {pipeline_mode = #tpu.pipeline_mode<synchronous>, transform_indices = @transform_4, window_bounds = array<i64: 1, 128>}, {pipeline_mode = #tpu.pipeline_mode<synchronous>, transform_indices = @transform_5, window_bounds = array<i64: 4, 128, 128>}, {pipeline_mode = #tpu.pipeline_mode<synchronous>, transform_indices = @transform_6, window_bounds = array<i64: 1, 128>}, {pipeline_mode = #tpu.pipeline_mode<synchronous>, transform_indices = @transform_7, window_bounds = array<i64: 128, 128>}, {pipeline_mode = #tpu.pipeline_mode<synchronous>, transform_indices = @transform_8, window_bounds = array<i64: 1, 128>}, {pipeline_mode = #tpu.pipeline_mode<synchronous>, transform_indices = @transform_9, window_bounds = array<i64: 128, 128>}, {pipeline_mode = #tpu.pipeline_mode<synchronous>, transform_indices = @transform_10, window_bounds = array<i64: 1, 128>}, {transform_indices = @transform_11, window_bounds = array<i64: 8, 128>}]} {
    %c0 = arith.constant 0 : index
    %c0_0 = arith.constant 0 : index
    %0 = vector.load %arg3[%c0, %c0_0] : memref<1x128xf32, #tpu.memory_space<vmem>>, vector<1x128xf32>
    %c0_1 = arith.constant 0 : index
    %c0_2 = arith.constant 0 : index
    %c0_3 = arith.constant 0 : index
    %1 = vector.load %arg1[%c0_1, %c0_2, %c0_3] : memref<24x8x140xf32, #tpu.memory_space<vmem>>, vector<1x8x140xf32>
    %2 = vector.shape_cast %1 : vector<1x8x140xf32> to vector<8x140xf32>
    %c0_4 = arith.constant 0 : index
    %c0_5 = arith.constant 0 : index
    %3 = vector.load %arg2[%c0_4, %c0_5] : memref<140x256xf32, #tpu.memory_space<vmem>>, vector<140x256xf32>
    %cst = arith.constant dense<0.000000e+00> : vector<8x256xf32>
    %4 = tpu.matmul %2, %3, %cst {dimension_numbers = #tpu.dot_dimension_numbers<[1], [0], [0], [1], [0, 0, 1, 1], [], []>} : vector<8x140xf32>, vector<140x256xf32>, vector<8x256xf32> -> vector<8x256xf32>
    %c12 = arith.constant 12 : index
    %c0_6 = arith.constant 0 : index
    %c0_7 = arith.constant 0 : index
    %5 = vector.load %arg1[%c12, %c0_6, %c0_7] : memref<24x8x140xf32, #tpu.memory_space<vmem>>, vector<1x8x140xf32>
    %6 = vector.shape_cast %5 : vector<1x8x140xf32> to vector<8x140xf32>
    %c0_8 = arith.constant 0 : index
    %c0_9 = arith.constant 0 : index
    %7 = vector.load %arg2[%c0_8, %c0_9] : memref<140x256xf32, #tpu.memory_space<vmem>>, vector<140x256xf32>
    %cst_10 = arith.constant dense<0.000000e+00> : vector<8x256xf32>
    %8 = tpu.matmul %6, %7, %cst_10 {dimension_numbers = #tpu.dot_dimension_numbers<[1], [0], [0], [1], [0, 0, 1, 1], [], []>} : vector<8x140xf32>, vector<140x256xf32>, vector<8x256xf32> -> vector<8x256xf32>
    %9 = arith.maximumf %4, %8 : vector<8x256xf32>
    %10 = vector.extract_strided_slice %9 {offsets = [0, 0], sizes = [8, 128], strides = [1, 1]} : vector<8x256xf32> to vector<8x128xf32>
    %11 = vector.extract_strided_slice %9 {offsets = [0, 128], sizes = [8, 128], strides = [1, 1]} : vector<8x256xf32> to vector<8x128xf32>
    %12 = arith.maximumf %10, %11 : vector<8x128xf32>
    %13 = vector.broadcast %0 : vector<1x128xf32> to vector<8x128xf32>
    %14 = arith.addf %12, %13 : vector<8x128xf32>
    %cst_11 = arith.constant 0.000000e+00 : f32
    %15 = vector.broadcast %cst_11 : f32 to vector<8x128xf32>
    %16 = arith.maximumf %14, %15 : vector<8x128xf32>
    %c0_12 = arith.constant 0 : index
    %c0_13 = arith.constant 0 : index
    %17 = vector.load %arg13[%c0_12, %c0_13] : memref<96x128xf32, #tpu.memory_space<vmem>>, vector<8x128xf32>
    tpu.vector_store %arg13[%c0_12, %c0_13], %16 {strides = array<i32>} : memref<96x128xf32, #tpu.memory_space<vmem>>, vector<8x128xf32>,
    %c1 = arith.constant 1 : index
    %c0_14 = arith.constant 0 : index
    %c0_15 = arith.constant 0 : index
    %18 = vector.load %arg1[%c1, %c0_14, %c0_15] : memref<24x8x140xf32, #tpu.memory_space<vmem>>, vector<1x8x140xf32>
    %19 = vector.shape_cast %18 : vector<1x8x140xf32> to vector<8x140xf32>
    %c0_16 = arith.constant 0 : index
    %c0_17 = arith.constant 0 : index
    %20 = vector.load %arg2[%c0_16, %c0_17] : memref<140x256xf32, #tpu.memory_space<vmem>>, vector<140x256xf32>
    %cst_18 = arith.constant dense<0.000000e+00> : vector<8x256xf32>
    %21 = tpu.matmul %19, %20, %cst_18 {dimension_numbers = #tpu.dot_dimension_numbers<[1], [0], [0], [1], [0, 0, 1, 1], [], []>} : vector<8x140xf32>, vector<140x256xf32>, vector<8x256xf32> -> vector<8x256xf32>
    %c13 = arith.constant 13 : index
    %c0_19 = arith.constant 0 : index
    %c0_20 = arith.constant 0 : index
    %22 = vector.load %arg1[%c13, %c0_19, %c0_20] : memref<24x8x140xf32, #tpu.memory_space<vmem>>, vector<1x8x140xf32>
    %23 = vector.shape_cast %22 : vector<1x8x140xf32> to vector<8x140xf32>
    %c0_21 = arith.constant 0 : index
    %c0_22 = arith.constant 0 : index
    %24 = vector.load %arg2[%c0_21, %c0_22] : memref<140x256xf32, #tpu.memory_space<vmem>>, vector<140x256xf32>
    %cst_23 = arith.constant dense<0.000000e+00> : vector<8x256xf32>
    %25 = tpu.matmul %23, %24, %cst_23 {dimension_numbers = #tpu.dot_dimension_numbers<[1], [0], [0], [1], [0, 0, 1, 1], [], []>} : vector<8x140xf32>, vector<140x256xf32>, vector<8x256xf32> -> vector<8x256xf32>
    %26 = arith.maximumf %21, %25 : vector<8x256xf32>
    %27 = vector.extract_strided_slice %26 {offsets = [0, 0], sizes = [8, 128], strides = [1, 1]} : vector<8x256xf32> to vector<8x128xf32>
    %28 = vector.extract_strided_slice %26 {offsets = [0, 128], sizes = [8, 128], strides = [1, 1]} : vector<8x256xf32> to vector<8x128xf32>
    %29 = arith.maximumf %27, %28 : vector<8x128xf32>
    %30 = vector.broadcast %0 : vector<1x128xf32> to vector<8x128xf32>
    %31 = arith.addf %29, %30 : vector<8x128xf32>
    %cst_24 = arith.constant 0.000000e+00 : f32
    %32 = vector.broadcast %cst_24 : f32 to vector<8x128xf32>
    %33 = arith.maximumf %31, %32 : vector<8x128xf32>
    %c8 = arith.constant 8 : index
    %c0_25 = arith.constant 0 : index
    %34 = vector.load %arg13[%c8, %c0_25] : memref<96x128xf32, #tpu.memory_space<vmem>>, vector<8x128xf32>
    tpu.vector_store %arg13[%c8, %c0_25], %33 {strides = array<i32>} : memref<96x128xf32, #tpu.memory_space<vmem>>, vector<8x128xf32>,
    %c2 = arith.constant 2 : index
    %c0_26 = arith.constant 0 : index
    %c0_27 = arith.constant 0 : index
    %35 = vector.load %arg1[%c2, %c0_26, %c0_27] : memref<24x8x140xf32, #tpu.memory_space<vmem>>, vector<1x8x140xf32>
    %36 = vector.shape_cast %35 : vector<1x8x140xf32> to vector<8x140xf32>
    %c0_28 = arith.constant 0 : index
    %c0_29 = arith.constant 0 : index
    %37 = vector.load %arg2[%c0_28, %c0_29] : memref<140x256xf32, #tpu.memory_space<vmem>>, vector<140x256xf32>
    %cst_30 = arith.constant dense<0.000000e+00> : vector<8x256xf32>
    %38 = tpu.matmul %36, %37, %cst_30 {dimension_numbers = #tpu.dot_dimension_numbers<[1], [0], [0], [1], [0, 0, 1, 1], [], []>} : vector<8x140xf32>, vector<140x256xf32>, vector<8x256xf32> -> vector<8x256xf32>
    %c14 = arith.constant 14 : index
    %c0_31 = arith.constant 0 : index
    %c0_32 = arith.constant 0 : index
    %39 = vector.load %arg1[%c14, %c0_31, %c0_32] : memref<24x8x140xf32, #tpu.memory_space<vmem>>, vector<1x8x140xf32>
    %40 = vector.shape_cast %39 : vector<1x8x140xf32> to vector<8x140xf32>
    %c0_33 = arith.constant 0 : index
    %c0_34 = arith.constant 0 : index
    %41 = vector.load %arg2[%c0_33, %c0_34] : memref<140x256xf32, #tpu.memory_space<vmem>>, vector<140x256xf32>
    %cst_35 = arith.constant dense<0.000000e+00> : vector<8x256xf32>
    %42 = tpu.matmul %40, %41, %cst_35 {dimension_numbers = #tpu.dot_dimension_numbers<[1], [0], [0], [1], [0, 0, 1, 1], [], []>} : vector<8x140xf32>, vector<140x256xf32>, vector<8x256xf32> -> vector<8x256xf32>
    %43 = arith.maximumf %38, %42 : vector<8x256xf32>
    %44 = vector.extract_strided_slice %43 {offsets = [0, 0], sizes = [8, 128], strides = [1, 1]} : vector<8x256xf32> to vector<8x128xf32>
    %45 = vector.extract_strided_slice %43 {offsets = [0, 128], sizes = [8, 128], strides = [1, 1]} : vector<8x256xf32> to vector<8x128xf32>
    %46 = arith.maximumf %44, %45 : vector<8x128xf32>
    %47 = vector.broadcast %0 : vector<1x128xf32> to vector<8x128xf32>
    %48 = arith.addf %46, %47 : vector<8x128xf32>
    %cst_36 = arith.constant 0.000000e+00 : f32
    %49 = vector.broadcast %cst_36 : f32 to vector<8x128xf32>
    %50 = arith.maximumf %48, %49 : vector<8x128xf32>
    %c16 = arith.constant 16 : index
    %c0_37 = arith.constant 0 : index
    %51 = vector.load %arg13[%c16, %c0_37] : memref<96x128xf32, #tpu.memory_space<vmem>>, vector<8x128xf32>
    tpu.vector_store %arg13[%c16, %c0_37], %50 {strides = array<i32>} : memref<96x128xf32, #tpu.memory_space<vmem>>, vector<8x128xf32>,
    %c3 = arith.constant 3 : index
    %c0_38 = arith.constant 0 : index
    %c0_39 = arith.constant 0 : index
    %52 = vector.load %arg1[%c3, %c0_38, %c0_39] : memref<24x8x140xf32, #tpu.memory_space<vmem>>, vector<1x8x140xf32>
    %53 = vector.shape_cast %52 : vector<1x8x140xf32> to vector<8x140xf32>
    %c0_40 = arith.constant 0 : index
    %c0_41 = arith.constant 0 : index
    %54 = vector.load %arg2[%c0_40, %c0_41] : memref<140x256xf32, #tpu.memory_space<vmem>>, vector<140x256xf32>
    %cst_42 = arith.constant dense<0.000000e+00> : vector<8x256xf32>
    %55 = tpu.matmul %53, %54, %cst_42 {dimension_numbers = #tpu.dot_dimension_numbers<[1], [0], [0], [1], [0, 0, 1, 1], [], []>} : vector<8x140xf32>, vector<140x256xf32>, vector<8x256xf32> -> vector<8x256xf32>
    %c15 = arith.constant 15 : index
    %c0_43 = arith.constant 0 : index
    %c0_44 = arith.constant 0 : index
    %56 = vector.load %arg1[%c15, %c0_43, %c0_44] : memref<24x8x140xf32, #tpu.memory_space<vmem>>, vector<1x8x140xf32>
    %57 = vector.shape_cast %56 : vector<1x8x140xf32> to vector<8x140xf32>
    %c0_45 = arith.constant 0 : index
    %c0_46 = arith.constant 0 : index
    %58 = vector.load %arg2[%c0_45, %c0_46] : memref<140x256xf32, #tpu.memory_space<vmem>>, vector<140x256xf32>
    %cst_47 = arith.constant dense<0.000000e+00> : vector<8x256xf32>
    %59 = tpu.matmul %57, %58, %cst_47 {dimension_numbers = #tpu.dot_dimension_numbers<[1], [0], [0], [1], [0, 0, 1, 1], [], []>} : vector<8x140xf32>, vector<140x256xf32>, vector<8x256xf32> -> vector<8x256xf32>
    %60 = arith.maximumf %55, %59 : vector<8x256xf32>
    %61 = vector.extract_strided_slice %60 {offsets = [0, 0], sizes = [8, 128], strides = [1, 1]} : vector<8x256xf32> to vector<8x128xf32>
    %62 = vector.extract_strided_slice %60 {offsets = [0, 128], sizes = [8, 128], strides = [1, 1]} : vector<8x256xf32> to vector<8x128xf32>
    %63 = arith.maximumf %61, %62 : vector<8x128xf32>
    %64 = vector.broadcast %0 : vector<1x128xf32> to vector<8x128xf32>
    %65 = arith.addf %63, %64 : vector<8x128xf32>
    %cst_48 = arith.constant 0.000000e+00 : f32
    %66 = vector.broadcast %cst_48 : f32 to vector<8x128xf32>
    %67 = arith.maximumf %65, %66 : vector<8x128xf32>
    %c24 = arith.constant 24 : index
    %c0_49 = arith.constant 0 : index
    %68 = vector.load %arg13[%c24, %c0_49] : memref<96x128xf32, #tpu.memory_space<vmem>>, vector<8x128xf32>
    tpu.vector_store %arg13[%c24, %c0_49], %67 {strides = array<i32>} : memref<96x128xf32, #tpu.memory_space<vmem>>, vector<8x128xf32>,
    %c4 = arith.constant 4 : index
    %c0_50 = arith.constant 0 : index
    %c0_51 = arith.constant 0 : index
    %69 = vector.load %arg1[%c4, %c0_50, %c0_51] : memref<24x8x140xf32, #tpu.memory_space<vmem>>, vector<1x8x140xf32>
    %70 = vector.shape_cast %69 : vector<1x8x140xf32> to vector<8x140xf32>
    %c0_52 = arith.constant 0 : index
    %c0_53 = arith.constant 0 : index
    %71 = vector.load %arg2[%c0_52, %c0_53] : memref<140x256xf32, #tpu.memory_space<vmem>>, vector<140x256xf32>
    %cst_54 = arith.constant dense<0.000000e+00> : vector<8x256xf32>
    %72 = tpu.matmul %70, %71, %cst_54 {dimension_numbers = #tpu.dot_dimension_numbers<[1], [0], [0], [1], [0, 0, 1, 1], [], []>} : vector<8x140xf32>, vector<140x256xf32>, vector<8x256xf32> -> vector<8x256xf32>
    %c16_55 = arith.constant 16 : index
    %c0_56 = arith.constant 0 : index
    %c0_57 = arith.constant 0 : index
    %73 = vector.load %arg1[%c16_55, %c0_56, %c0_57] : memref<24x8x140xf32, #tpu.memory_space<vmem>>, vector<1x8x140xf32>
    %74 = vector.shape_cast %73 : vector<1x8x140xf32> to vector<8x140xf32>
    %c0_58 = arith.constant 0 : index
    %c0_59 = arith.constant 0 : index
    %75 = vector.load %arg2[%c0_58, %c0_59] : memref<140x256xf32, #tpu.memory_space<vmem>>, vector<140x256xf32>
    %cst_60 = arith.constant dense<0.000000e+00> : vector<8x256xf32>
    %76 = tpu.matmul %74, %75, %cst_60 {dimension_numbers = #tpu.dot_dimension_numbers<[1], [0], [0], [1], [0, 0, 1, 1], [], []>} : vector<8x140xf32>, vector<140x256xf32>, vector<8x256xf32> -> vector<8x256xf32>
    %77 = arith.maximumf %72, %76 : vector<8x256xf32>
    %78 = vector.extract_strided_slice %77 {offsets = [0, 0], sizes = [8, 128], strides = [1, 1]} : vector<8x256xf32> to vector<8x128xf32>
    %79 = vector.extract_strided_slice %77 {offsets = [0, 128], sizes = [8, 128], strides = [1, 1]} : vector<8x256xf32> to vector<8x128xf32>
    %80 = arith.maximumf %78, %79 : vector<8x128xf32>
    %81 = vector.broadcast %0 : vector<1x128xf32> to vector<8x128xf32>
    %82 = arith.addf %80, %81 : vector<8x128xf32>
    %cst_61 = arith.constant 0.000000e+00 : f32
    %83 = vector.broadcast %cst_61 : f32 to vector<8x128xf32>
    %84 = arith.maximumf %82, %83 : vector<8x128xf32>
    %c32 = arith.constant 32 : index
    %c0_62 = arith.constant 0 : index
    %85 = vector.load %arg13[%c32, %c0_62] : memref<96x128xf32, #tpu.memory_space<vmem>>, vector<8x128xf32>
    tpu.vector_store %arg13[%c32, %c0_62], %84 {strides = array<i32>} : memref<96x128xf32, #tpu.memory_space<vmem>>, vector<8x128xf32>,
    %c5 = arith.constant 5 : index
    %c0_63 = arith.constant 0 : index
    %c0_64 = arith.constant 0 : index
    %86 = vector.load %arg1[%c5, %c0_63, %c0_64] : memref<24x8x140xf32, #tpu.memory_space<vmem>>, vector<1x8x140xf32>
    %87 = vector.shape_cast %86 : vector<1x8x140xf32> to vector<8x140xf32>
    %c0_65 = arith.constant 0 : index
    %c0_66 = arith.constant 0 : index
    %88 = vector.load %arg2[%c0_65, %c0_66] : memref<140x256xf32, #tpu.memory_space<vmem>>, vector<140x256xf32>
    %cst_67 = arith.constant dense<0.000000e+00> : vector<8x256xf32>
    %89 = tpu.matmul %87, %88, %cst_67 {dimension_numbers = #tpu.dot_dimension_numbers<[1], [0], [0], [1], [0, 0, 1, 1], [], []>} : vector<8x140xf32>, vector<140x256xf32>, vector<8x256xf32> -> vector<8x256xf32>
    %c17 = arith.constant 17 : index
    %c0_68 = arith.constant 0 : index
    %c0_69 = arith.constant 0 : index
    %90 = vector.load %arg1[%c17, %c0_68, %c0_69] : memref<24x8x140xf32, #tpu.memory_space<vmem>>, vector<1x8x140xf32>
    %91 = vector.shape_cast %90 : vector<1x8x140xf32> to vector<8x140xf32>
    %c0_70 = arith.constant 0 : index
    %c0_71 = arith.constant 0 : index
    %92 = vector.load %arg2[%c0_70, %c0_71] : memref<140x256xf32, #tpu.memory_space<vmem>>, vector<140x256xf32>
    %cst_72 = arith.constant dense<0.000000e+00> : vector<8x256xf32>
    %93 = tpu.matmul %91, %92, %cst_72 {dimension_numbers = #tpu.dot_dimension_numbers<[1], [0], [0], [1], [0, 0, 1, 1], [], []>} : vector<8x140xf32>, vector<140x256xf32>, vector<8x256xf32> -> vector<8x256xf32>
    %94 = arith.maximumf %89, %93 : vector<8x256xf32>
    %95 = vector.extract_strided_slice %94 {offsets = [0, 0], sizes = [8, 128], strides = [1, 1]} : vector<8x256xf32> to vector<8x128xf32>
    %96 = vector.extract_strided_slice %94 {offsets = [0, 128], sizes = [8, 128], strides = [1, 1]} : vector<8x256xf32> to vector<8x128xf32>
    %97 = arith.maximumf %95, %96 : vector<8x128xf32>
    %98 = vector.broadcast %0 : vector<1x128xf32> to vector<8x128xf32>
    %99 = arith.addf %97, %98 : vector<8x128xf32>
    %cst_73 = arith.constant 0.000000e+00 : f32
    %100 = vector.broadcast %cst_73 : f32 to vector<8x128xf32>
    %101 = arith.maximumf %99, %100 : vector<8x128xf32>
    %c40 = arith.constant 40 : index
    %c0_74 = arith.constant 0 : index
    %102 = vector.load %arg13[%c40, %c0_74] : memref<96x128xf32, #tpu.memory_space<vmem>>, vector<8x128xf32>
    tpu.vector_store %arg13[%c40, %c0_74], %101 {strides = array<i32>} : memref<96x128xf32, #tpu.memory_space<vmem>>, vector<8x128xf32>,
    %c6 = arith.constant 6 : index
    %c0_75 = arith.constant 0 : index
    %c0_76 = arith.constant 0 : index
    %103 = vector.load %arg1[%c6, %c0_75, %c0_76] : memref<24x8x140xf32, #tpu.memory_space<vmem>>, vector<1x8x140xf32>
    %104 = vector.shape_cast %103 : vector<1x8x140xf32> to vector<8x140xf32>
    %c0_77 = arith.constant 0 : index
    %c0_78 = arith.constant 0 : index
    %105 = vector.load %arg2[%c0_77, %c0_78] : memref<140x256xf32, #tpu.memory_space<vmem>>, vector<140x256xf32>
    %cst_79 = arith.constant dense<0.000000e+00> : vector<8x256xf32>
    %106 = tpu.matmul %104, %105, %cst_79 {dimension_numbers = #tpu.dot_dimension_numbers<[1], [0], [0], [1], [0, 0, 1, 1], [], []>} : vector<8x140xf32>, vector<140x256xf32>, vector<8x256xf32> -> vector<8x256xf32>
    %c18 = arith.constant 18 : index
    %c0_80 = arith.constant 0 : index
    %c0_81 = arith.constant 0 : index
    %107 = vector.load %arg1[%c18, %c0_80, %c0_81] : memref<24x8x140xf32, #tpu.memory_space<vmem>>, vector<1x8x140xf32>
    %108 = vector.shape_cast %107 : vector<1x8x140xf32> to vector<8x140xf32>
    %c0_82 = arith.constant 0 : index
    %c0_83 = arith.constant 0 : index
    %109 = vector.load %arg2[%c0_82, %c0_83] : memref<140x256xf32, #tpu.memory_space<vmem>>, vector<140x256xf32>
    %cst_84 = arith.constant dense<0.000000e+00> : vector<8x256xf32>
    %110 = tpu.matmul %108, %109, %cst_84 {dimension_numbers = #tpu.dot_dimension_numbers<[1], [0], [0], [1], [0, 0, 1, 1], [], []>} : vector<8x140xf32>, vector<140x256xf32>, vector<8x256xf32> -> vector<8x256xf32>
    %111 = arith.maximumf %106, %110 : vector<8x256xf32>
    %112 = vector.extract_strided_slice %111 {offsets = [0, 0], sizes = [8, 128], strides = [1, 1]} : vector<8x256xf32> to vector<8x128xf32>
    %113 = vector.extract_strided_slice %111 {offsets = [0, 128], sizes = [8, 128], strides = [1, 1]} : vector<8x256xf32> to vector<8x128xf32>
    %114 = arith.maximumf %112, %113 : vector<8x128xf32>
    %115 = vector.broadcast %0 : vector<1x128xf32> to vector<8x128xf32>
    %116 = arith.addf %114, %115 : vector<8x128xf32>
    %cst_85 = arith.constant 0.000000e+00 : f32
    %117 = vector.broadcast %cst_85 : f32 to vector<8x128xf32>
    %118 = arith.maximumf %116, %117 : vector<8x128xf32>
    %c48 = arith.constant 48 : index
    %c0_86 = arith.constant 0 : index
    %119 = vector.load %arg13[%c48, %c0_86] : memref<96x128xf32, #tpu.memory_space<vmem>>, vector<8x128xf32>
    tpu.vector_store %arg13[%c48, %c0_86], %118 {strides = array<i32>} : memref<96x128xf32, #tpu.memory_space<vmem>>, vector<8x128xf32>,
    %c7 = arith.constant 7 : index
    %c0_87 = arith.constant 0 : index
    %c0_88 = arith.constant 0 : index
    %120 = vector.load %arg1[%c7, %c0_87, %c0_88] : memref<24x8x140xf32, #tpu.memory_space<vmem>>, vector<1x8x140xf32>
    %121 = vector.shape_cast %120 : vector<1x8x140xf32> to vector<8x140xf32>
    %c0_89 = arith.constant 0 : index
    %c0_90 = arith.constant 0 : index
    %122 = vector.load %arg2[%c0_89, %c0_90] : memref<140x256xf32, #tpu.memory_space<vmem>>, vector<140x256xf32>
    %cst_91 = arith.constant dense<0.000000e+00> : vector<8x256xf32>
    %123 = tpu.matmul %121, %122, %cst_91 {dimension_numbers = #tpu.dot_dimension_numbers<[1], [0], [0], [1], [0, 0, 1, 1], [], []>} : vector<8x140xf32>, vector<140x256xf32>, vector<8x256xf32> -> vector<8x256xf32>
    %c19 = arith.constant 19 : index
    %c0_92 = arith.constant 0 : index
    %c0_93 = arith.constant 0 : index
    %124 = vector.load %arg1[%c19, %c0_92, %c0_93] : memref<24x8x140xf32, #tpu.memory_space<vmem>>, vector<1x8x140xf32>
    %125 = vector.shape_cast %124 : vector<1x8x140xf32> to vector<8x140xf32>
    %c0_94 = arith.constant 0 : index
    %c0_95 = arith.constant 0 : index
    %126 = vector.load %arg2[%c0_94, %c0_95] : memref<140x256xf32, #tpu.memory_space<vmem>>, vector<140x256xf32>
    %cst_96 = arith.constant dense<0.000000e+00> : vector<8x256xf32>
    %127 = tpu.matmul %125, %126, %cst_96 {dimension_numbers = #tpu.dot_dimension_numbers<[1], [0], [0], [1], [0, 0, 1, 1], [], []>} : vector<8x140xf32>, vector<140x256xf32>, vector<8x256xf32> -> vector<8x256xf32>
    %128 = arith.maximumf %123, %127 : vector<8x256xf32>
    %129 = vector.extract_strided_slice %128 {offsets = [0, 0], sizes = [8, 128], strides = [1, 1]} : vector<8x256xf32> to vector<8x128xf32>
    %130 = vector.extract_strided_slice %128 {offsets = [0, 128], sizes = [8, 128], strides = [1, 1]} : vector<8x256xf32> to vector<8x128xf32>
    %131 = arith.maximumf %129, %130 : vector<8x128xf32>
    %132 = vector.broadcast %0 : vector<1x128xf32> to vector<8x128xf32>
    %133 = arith.addf %131, %132 : vector<8x128xf32>
    %cst_97 = arith.constant 0.000000e+00 : f32
    %134 = vector.broadcast %cst_97 : f32 to vector<8x128xf32>
    %135 = arith.maximumf %133, %134 : vector<8x128xf32>
    %c56 = arith.constant 56 : index
    %c0_98 = arith.constant 0 : index
    %136 = vector.load %arg13[%c56, %c0_98] : memref<96x128xf32, #tpu.memory_space<vmem>>, vector<8x128xf32>
    tpu.vector_store %arg13[%c56, %c0_98], %135 {strides = array<i32>} : memref<96x128xf32, #tpu.memory_space<vmem>>, vector<8x128xf32>,
    %c8_99 = arith.constant 8 : index
    %c0_100 = arith.constant 0 : index
    %c0_101 = arith.constant 0 : index
    %137 = vector.load %arg1[%c8_99, %c0_100, %c0_101] : memref<24x8x140xf32, #tpu.memory_space<vmem>>, vector<1x8x140xf32>
    %138 = vector.shape_cast %137 : vector<1x8x140xf32> to vector<8x140xf32>
    %c0_102 = arith.constant 0 : index
    %c0_103 = arith.constant 0 : index
    %139 = vector.load %arg2[%c0_102, %c0_103] : memref<140x256xf32, #tpu.memory_space<vmem>>, vector<140x256xf32>
    %cst_104 = arith.constant dense<0.000000e+00> : vector<8x256xf32>
    %140 = tpu.matmul %138, %139, %cst_104 {dimension_numbers = #tpu.dot_dimension_numbers<[1], [0], [0], [1], [0, 0, 1, 1], [], []>} : vector<8x140xf32>, vector<140x256xf32>, vector<8x256xf32> -> vector<8x256xf32>
    %c20 = arith.constant 20 : index
    %c0_105 = arith.constant 0 : index
    %c0_106 = arith.constant 0 : index
    %141 = vector.load %arg1[%c20, %c0_105, %c0_106] : memref<24x8x140xf32, #tpu.memory_space<vmem>>, vector<1x8x140xf32>
    %142 = vector.shape_cast %141 : vector<1x8x140xf32> to vector<8x140xf32>
    %c0_107 = arith.constant 0 : index
    %c0_108 = arith.constant 0 : index
    %143 = vector.load %arg2[%c0_107, %c0_108] : memref<140x256xf32, #tpu.memory_space<vmem>>, vector<140x256xf32>
    %cst_109 = arith.constant dense<0.000000e+00> : vector<8x256xf32>
    %144 = tpu.matmul %142, %143, %cst_109 {dimension_numbers = #tpu.dot_dimension_numbers<[1], [0], [0], [1], [0, 0, 1, 1], [], []>} : vector<8x140xf32>, vector<140x256xf32>, vector<8x256xf32> -> vector<8x256xf32>
    %145 = arith.maximumf %140, %144 : vector<8x256xf32>
    %146 = vector.extract_strided_slice %145 {offsets = [0, 0], sizes = [8, 128], strides = [1, 1]} : vector<8x256xf32> to vector<8x128xf32>
    %147 = vector.extract_strided_slice %145 {offsets = [0, 128], sizes = [8, 128], strides = [1, 1]} : vector<8x256xf32> to vector<8x128xf32>
    %148 = arith.maximumf %146, %147 : vector<8x128xf32>
    %149 = vector.broadcast %0 : vector<1x128xf32> to vector<8x128xf32>
    %150 = arith.addf %148, %149 : vector<8x128xf32>
    %cst_110 = arith.constant 0.000000e+00 : f32
    %151 = vector.broadcast %cst_110 : f32 to vector<8x128xf32>
    %152 = arith.maximumf %150, %151 : vector<8x128xf32>
    %c64 = arith.constant 64 : index
    %c0_111 = arith.constant 0 : index
    %153 = vector.load %arg13[%c64, %c0_111] : memref<96x128xf32, #tpu.memory_space<vmem>>, vector<8x128xf32>
    tpu.vector_store %arg13[%c64, %c0_111], %152 {strides = array<i32>} : memref<96x128xf32, #tpu.memory_space<vmem>>, vector<8x128xf32>,
    %c9 = arith.constant 9 : index
    %c0_112 = arith.constant 0 : index
    %c0_113 = arith.constant 0 : index
    %154 = vector.load %arg1[%c9, %c0_112, %c0_113] : memref<24x8x140xf32, #tpu.memory_space<vmem>>, vector<1x8x140xf32>
    %155 = vector.shape_cast %154 : vector<1x8x140xf32> to vector<8x140xf32>
    %c0_114 = arith.constant 0 : index
    %c0_115 = arith.constant 0 : index
    %156 = vector.load %arg2[%c0_114, %c0_115] : memref<140x256xf32, #tpu.memory_space<vmem>>, vector<140x256xf32>
    %cst_116 = arith.constant dense<0.000000e+00> : vector<8x256xf32>
    %157 = tpu.matmul %155, %156, %cst_116 {dimension_numbers = #tpu.dot_dimension_numbers<[1], [0], [0], [1], [0, 0, 1, 1], [], []>} : vector<8x140xf32>, vector<140x256xf32>, vector<8x256xf32> -> vector<8x256xf32>
    %c21 = arith.constant 21 : index
    %c0_117 = arith.constant 0 : index
    %c0_118 = arith.constant 0 : index
    %158 = vector.load %arg1[%c21, %c0_117, %c0_118] : memref<24x8x140xf32, #tpu.memory_space<vmem>>, vector<1x8x140xf32>
    %159 = vector.shape_cast %158 : vector<1x8x140xf32> to vector<8x140xf32>
    %c0_119 = arith.constant 0 : index
    %c0_120 = arith.constant 0 : index
    %160 = vector.load %arg2[%c0_119, %c0_120] : memref<140x256xf32, #tpu.memory_space<vmem>>, vector<140x256xf32>
    %cst_121 = arith.constant dense<0.000000e+00> : vector<8x256xf32>
    %161 = tpu.matmul %159, %160, %cst_121 {dimension_numbers = #tpu.dot_dimension_numbers<[1], [0], [0], [1], [0, 0, 1, 1], [], []>} : vector<8x140xf32>, vector<140x256xf32>, vector<8x256xf32> -> vector<8x256xf32>
    %162 = arith.maximumf %157, %161 : vector<8x256xf32>
    %163 = vector.extract_strided_slice %162 {offsets = [0, 0], sizes = [8, 128], strides = [1, 1]} : vector<8x256xf32> to vector<8x128xf32>
    %164 = vector.extract_strided_slice %162 {offsets = [0, 128], sizes = [8, 128], strides = [1, 1]} : vector<8x256xf32> to vector<8x128xf32>
    %165 = arith.maximumf %163, %164 : vector<8x128xf32>
    %166 = vector.broadcast %0 : vector<1x128xf32> to vector<8x128xf32>
    %167 = arith.addf %165, %166 : vector<8x128xf32>
    %cst_122 = arith.constant 0.000000e+00 : f32
    %168 = vector.broadcast %cst_122 : f32 to vector<8x128xf32>
    %169 = arith.maximumf %167, %168 : vector<8x128xf32>
    %c72 = arith.constant 72 : index
    %c0_123 = arith.constant 0 : index
    %170 = vector.load %arg13[%c72, %c0_123] : memref<96x128xf32, #tpu.memory_space<vmem>>, vector<8x128xf32>
    tpu.vector_store %arg13[%c72, %c0_123], %169 {strides = array<i32>} : memref<96x128xf32, #tpu.memory_space<vmem>>, vector<8x128xf32>,
    %c10 = arith.constant 10 : index
    %c0_124 = arith.constant 0 : index
    %c0_125 = arith.constant 0 : index
    %171 = vector.load %arg1[%c10, %c0_124, %c0_125] : memref<24x8x140xf32, #tpu.memory_space<vmem>>, vector<1x8x140xf32>
    %172 = vector.shape_cast %171 : vector<1x8x140xf32> to vector<8x140xf32>
    %c0_126 = arith.constant 0 : index
    %c0_127 = arith.constant 0 : index
    %173 = vector.load %arg2[%c0_126, %c0_127] : memref<140x256xf32, #tpu.memory_space<vmem>>, vector<140x256xf32>
    %cst_128 = arith.constant dense<0.000000e+00> : vector<8x256xf32>
    %174 = tpu.matmul %172, %173, %cst_128 {dimension_numbers = #tpu.dot_dimension_numbers<[1], [0], [0], [1], [0, 0, 1, 1], [], []>} : vector<8x140xf32>, vector<140x256xf32>, vector<8x256xf32> -> vector<8x256xf32>
    %c22 = arith.constant 22 : index
    %c0_129 = arith.constant 0 : index
    %c0_130 = arith.constant 0 : index
    %175 = vector.load %arg1[%c22, %c0_129, %c0_130] : memref<24x8x140xf32, #tpu.memory_space<vmem>>, vector<1x8x140xf32>
    %176 = vector.shape_cast %175 : vector<1x8x140xf32> to vector<8x140xf32>
    %c0_131 = arith.constant 0 : index
    %c0_132 = arith.constant 0 : index
    %177 = vector.load %arg2[%c0_131, %c0_132] : memref<140x256xf32, #tpu.memory_space<vmem>>, vector<140x256xf32>
    %cst_133 = arith.constant dense<0.000000e+00> : vector<8x256xf32>
    %178 = tpu.matmul %176, %177, %cst_133 {dimension_numbers = #tpu.dot_dimension_numbers<[1], [0], [0], [1], [0, 0, 1, 1], [], []>} : vector<8x140xf32>, vector<140x256xf32>, vector<8x256xf32> -> vector<8x256xf32>
    %179 = arith.maximumf %174, %178 : vector<8x256xf32>
    %180 = vector.extract_strided_slice %179 {offsets = [0, 0], sizes = [8, 128], strides = [1, 1]} : vector<8x256xf32> to vector<8x128xf32>
    %181 = vector.extract_strided_slice %179 {offsets = [0, 128], sizes = [8, 128], strides = [1, 1]} : vector<8x256xf32> to vector<8x128xf32>
    %182 = arith.maximumf %180, %181 : vector<8x128xf32>
    %183 = vector.broadcast %0 : vector<1x128xf32> to vector<8x128xf32>
    %184 = arith.addf %182, %183 : vector<8x128xf32>
    %cst_134 = arith.constant 0.000000e+00 : f32
    %185 = vector.broadcast %cst_134 : f32 to vector<8x128xf32>
    %186 = arith.maximumf %184, %185 : vector<8x128xf32>
    %c80 = arith.constant 80 : index
    %c0_135 = arith.constant 0 : index
    %187 = vector.load %arg13[%c80, %c0_135] : memref<96x128xf32, #tpu.memory_space<vmem>>, vector<8x128xf32>
    tpu.vector_store %arg13[%c80, %c0_135], %186 {strides = array<i32>} : memref<96x128xf32, #tpu.memory_space<vmem>>, vector<8x128xf32>,
    %c11 = arith.constant 11 : index
    %c0_136 = arith.constant 0 : index
    %c0_137 = arith.constant 0 : index
    %188 = vector.load %arg1[%c11, %c0_136, %c0_137] : memref<24x8x140xf32, #tpu.memory_space<vmem>>, vector<1x8x140xf32>
    %189 = vector.shape_cast %188 : vector<1x8x140xf32> to vector<8x140xf32>
    %c0_138 = arith.constant 0 : index
    %c0_139 = arith.constant 0 : index
    %190 = vector.load %arg2[%c0_138, %c0_139] : memref<140x256xf32, #tpu.memory_space<vmem>>, vector<140x256xf32>
    %cst_140 = arith.constant dense<0.000000e+00> : vector<8x256xf32>
    %191 = tpu.matmul %189, %190, %cst_140 {dimension_numbers = #tpu.dot_dimension_numbers<[1], [0], [0], [1], [0, 0, 1, 1], [], []>} : vector<8x140xf32>, vector<140x256xf32>, vector<8x256xf32> -> vector<8x256xf32>
    %c23 = arith.constant 23 : index
    %c0_141 = arith.constant 0 : index
    %c0_142 = arith.constant 0 : index
    %192 = vector.load %arg1[%c23, %c0_141, %c0_142] : memref<24x8x140xf32, #tpu.memory_space<vmem>>, vector<1x8x140xf32>
    %193 = vector.shape_cast %192 : vector<1x8x140xf32> to vector<8x140xf32>
    %c0_143 = arith.constant 0 : index
    %c0_144 = arith.constant 0 : index
    %194 = vector.load %arg2[%c0_143, %c0_144] : memref<140x256xf32, #tpu.memory_space<vmem>>, vector<140x256xf32>
    %cst_145 = arith.constant dense<0.000000e+00> : vector<8x256xf32>
    %195 = tpu.matmul %193, %194, %cst_145 {dimension_numbers = #tpu.dot_dimension_numbers<[1], [0], [0], [1], [0, 0, 1, 1], [], []>} : vector<8x140xf32>, vector<140x256xf32>, vector<8x256xf32> -> vector<8x256xf32>
    %196 = arith.maximumf %191, %195 : vector<8x256xf32>
    %197 = vector.extract_strided_slice %196 {offsets = [0, 0], sizes = [8, 128], strides = [1, 1]} : vector<8x256xf32> to vector<8x128xf32>
    %198 = vector.extract_strided_slice %196 {offsets = [0, 128], sizes = [8, 128], strides = [1, 1]} : vector<8x256xf32> to vector<8x128xf32>
    %199 = arith.maximumf %197, %198 : vector<8x128xf32>
    %200 = vector.broadcast %0 : vector<1x128xf32> to vector<8x128xf32>
    %201 = arith.addf %199, %200 : vector<8x128xf32>
    %cst_146 = arith.constant 0.000000e+00 : f32
    %202 = vector.broadcast %cst_146 : f32 to vector<8x128xf32>
    %203 = arith.maximumf %201, %202 : vector<8x128xf32>
    %c88 = arith.constant 88 : index
    %c0_147 = arith.constant 0 : index
    %204 = vector.load %arg13[%c88, %c0_147] : memref<96x128xf32, #tpu.memory_space<vmem>>, vector<8x128xf32>
    tpu.vector_store %arg13[%c88, %c0_147], %203 {strides = array<i32>} : memref<96x128xf32, #tpu.memory_space<vmem>>, vector<8x128xf32>,
    %c0_148 = arith.constant 0 : index
    %c0_149 = arith.constant 0 : index
    %205 = vector.load %arg5[%c0_148, %c0_149] : memref<1x128xf32, #tpu.memory_space<vmem>>, vector<1x128xf32>
    %c0_150 = arith.constant 0 : index
    %c0_151 = arith.constant 0 : index
    %206 = vector.load %arg13[%c0_150, %c0_151] : memref<96x128xf32, #tpu.memory_space<vmem>>, vector<32x128xf32>
    %c0_152 = arith.constant 0 : index
    %c0_153 = arith.constant 0 : index
    %c0_154 = arith.constant 0 : index
    %207 = vector.load %arg4[%c0_152, %c0_153, %c0_154] : memref<5x128x256xf32, #tpu.memory_space<vmem>>, vector<1x128x256xf32>
    %208 = vector.shape_cast %207 : vector<1x128x256xf32> to vector<128x256xf32>
    %cst_155 = arith.constant dense<0.000000e+00> : vector<32x256xf32>
    %209 = tpu.matmul %206, %208, %cst_155 {dimension_numbers = #tpu.dot_dimension_numbers<[1], [0], [0], [1], [0, 0, 1, 1], [], []>} : vector<32x128xf32>, vector<128x256xf32>, vector<32x256xf32> -> vector<32x256xf32>
    %c48_156 = arith.constant 48 : index
    %c0_157 = arith.constant 0 : index
    %210 = vector.load %arg13[%c48_156, %c0_157] : memref<96x128xf32, #tpu.memory_space<vmem>>, vector<32x128xf32>
    %c1_158 = arith.constant 1 : index
    %c0_159 = arith.constant 0 : index
    %c0_160 = arith.constant 0 : index
    %211 = vector.load %arg4[%c1_158, %c0_159, %c0_160] : memref<5x128x256xf32, #tpu.memory_space<vmem>>, vector<1x128x256xf32>
    %212 = vector.shape_cast %211 : vector<1x128x256xf32> to vector<128x256xf32>
    %cst_161 = arith.constant dense<0.000000e+00> : vector<32x256xf32>
    %213 = tpu.matmul %210, %212, %cst_161 {dimension_numbers = #tpu.dot_dimension_numbers<[1], [0], [0], [1], [0, 0, 1, 1], [], []>} : vector<32x128xf32>, vector<128x256xf32>, vector<32x256xf32> -> vector<32x256xf32>
    %214 = arith.addf %209, %213 : vector<32x256xf32>
    %c8_162 = arith.constant 8 : index
    %c0_163 = arith.constant 0 : index
    %215 = vector.load %arg13[%c8_162, %c0_163] : memref<96x128xf32, #tpu.memory_space<vmem>>, vector<32x128xf32>
    %c2_164 = arith.constant 2 : index
    %c0_165 = arith.constant 0 : index
    %c0_166 = arith.constant 0 : index
    %216 = vector.load %arg4[%c2_164, %c0_165, %c0_166] : memref<5x128x256xf32, #tpu.memory_space<vmem>>, vector<1x128x256xf32>
    %217 = vector.shape_cast %216 : vector<1x128x256xf32> to vector<128x256xf32>
    %cst_167 = arith.constant dense<0.000000e+00> : vector<32x256xf32>
    %218 = tpu.matmul %215, %217, %cst_167 {dimension_numbers = #tpu.dot_dimension_numbers<[1], [0], [0], [1], [0, 0, 1, 1], [], []>} : vector<32x128xf32>, vector<128x256xf32>, vector<32x256xf32> -> vector<32x256xf32>
    %219 = arith.addf %214, %218 : vector<32x256xf32>
    %c56_168 = arith.constant 56 : index
    %c0_169 = arith.constant 0 : index
    %220 = vector.load %arg13[%c56_168, %c0_169] : memref<96x128xf32, #tpu.memory_space<vmem>>, vector<32x128xf32>
    %c3_170 = arith.constant 3 : index
    %c0_171 = arith.constant 0 : index
    %c0_172 = arith.constant 0 : index
    %221 = vector.load %arg4[%c3_170, %c0_171, %c0_172] : memref<5x128x256xf32, #tpu.memory_space<vmem>>, vector<1x128x256xf32>
    %222 = vector.shape_cast %221 : vector<1x128x256xf32> to vector<128x256xf32>
    %cst_173 = arith.constant dense<0.000000e+00> : vector<32x256xf32>
    %223 = tpu.matmul %220, %222, %cst_173 {dimension_numbers = #tpu.dot_dimension_numbers<[1], [0], [0], [1], [0, 0, 1, 1], [], []>} : vector<32x128xf32>, vector<128x256xf32>, vector<32x256xf32> -> vector<32x256xf32>
    %224 = arith.addf %219, %223 : vector<32x256xf32>
    %c16_174 = arith.constant 16 : index
    %c0_175 = arith.constant 0 : index
    %225 = vector.load %arg13[%c16_174, %c0_175] : memref<96x128xf32, #tpu.memory_space<vmem>>, vector<32x128xf32>
    %c4_176 = arith.constant 4 : index
    %c0_177 = arith.constant 0 : index
    %c0_178 = arith.constant 0 : index
    %226 = vector.load %arg4[%c4_176, %c0_177, %c0_178] : memref<5x128x256xf32, #tpu.memory_space<vmem>>, vector<1x128x256xf32>
    %227 = vector.shape_cast %226 : vector<1x128x256xf32> to vector<128x256xf32>
    %cst_179 = arith.constant dense<0.000000e+00> : vector<32x256xf32>
    %228 = tpu.matmul %225, %227, %cst_179 {dimension_numbers = #tpu.dot_dimension_numbers<[1], [0], [0], [1], [0, 0, 1, 1], [], []>} : vector<32x128xf32>, vector<128x256xf32>, vector<32x256xf32> -> vector<32x256xf32>
    %229 = arith.addf %224, %228 : vector<32x256xf32>
    %230 = vector.extract_strided_slice %229 {offsets = [0, 0], sizes = [32, 128], strides = [1, 1]} : vector<32x256xf32> to vector<32x128xf32>
    %231 = vector.extract_strided_slice %229 {offsets = [0, 128], sizes = [32, 128], strides = [1, 1]} : vector<32x256xf32> to vector<32x128xf32>
    %232 = arith.maximumf %230, %231 : vector<32x128xf32>
    %c48_180 = arith.constant 48 : index
    %c0_181 = arith.constant 0 : index
    %233 = vector.load %arg13[%c48_180, %c0_181] : memref<96x128xf32, #tpu.memory_space<vmem>>, vector<32x128xf32>
    %c0_182 = arith.constant 0 : index
    %c0_183 = arith.constant 0 : index
    %c0_184 = arith.constant 0 : index
    %234 = vector.load %arg4[%c0_182, %c0_183, %c0_184] : memref<5x128x256xf32, #tpu.memory_space<vmem>>, vector<1x128x256xf32>
    %235 = vector.shape_cast %234 : vector<1x128x256xf32> to vector<128x256xf32>
    %cst_185 = arith.constant dense<0.000000e+00> : vector<32x256xf32>
    %236 = tpu.matmul %233, %235, %cst_185 {dimension_numbers = #tpu.dot_dimension_numbers<[1], [0], [0], [1], [0, 0, 1, 1], [], []>} : vector<32x128xf32>, vector<128x256xf32>, vector<32x256xf32> -> vector<32x256xf32>
    %c8_186 = arith.constant 8 : index
    %c0_187 = arith.constant 0 : index
    %237 = vector.load %arg13[%c8_186, %c0_187] : memref<96x128xf32, #tpu.memory_space<vmem>>, vector<32x128xf32>
    %c1_188 = arith.constant 1 : index
    %c0_189 = arith.constant 0 : index
    %c0_190 = arith.constant 0 : index
    %238 = vector.load %arg4[%c1_188, %c0_189, %c0_190] : memref<5x128x256xf32, #tpu.memory_space<vmem>>, vector<1x128x256xf32>
    %239 = vector.shape_cast %238 : vector<1x128x256xf32> to vector<128x256xf32>
    %cst_191 = arith.constant dense<0.000000e+00> : vector<32x256xf32>
    %240 = tpu.matmul %237, %239, %cst_191 {dimension_numbers = #tpu.dot_dimension_numbers<[1], [0], [0], [1], [0, 0, 1, 1], [], []>} : vector<32x128xf32>, vector<128x256xf32>, vector<32x256xf32> -> vector<32x256xf32>
    %241 = arith.addf %236, %240 : vector<32x256xf32>
    %c56_192 = arith.constant 56 : index
    %c0_193 = arith.constant 0 : index
    %242 = vector.load %arg13[%c56_192, %c0_193] : memref<96x128xf32, #tpu.memory_space<vmem>>, vector<32x128xf32>
    %c2_194 = arith.constant 2 : index
    %c0_195 = arith.constant 0 : index
    %c0_196 = arith.constant 0 : index
    %243 = vector.load %arg4[%c2_194, %c0_195, %c0_196] : memref<5x128x256xf32, #tpu.memory_space<vmem>>, vector<1x128x256xf32>
    %244 = vector.shape_cast %243 : vector<1x128x256xf32> to vector<128x256xf32>
    %cst_197 = arith.constant dense<0.000000e+00> : vector<32x256xf32>
    %245 = tpu.matmul %242, %244, %cst_197 {dimension_numbers = #tpu.dot_dimension_numbers<[1], [0], [0], [1], [0, 0, 1, 1], [], []>} : vector<32x128xf32>, vector<128x256xf32>, vector<32x256xf32> -> vector<32x256xf32>
    %246 = arith.addf %241, %245 : vector<32x256xf32>
    %c16_198 = arith.constant 16 : index
    %c0_199 = arith.constant 0 : index
    %247 = vector.load %arg13[%c16_198, %c0_199] : memref<96x128xf32, #tpu.memory_space<vmem>>, vector<32x128xf32>
    %c3_200 = arith.constant 3 : index
    %c0_201 = arith.constant 0 : index
    %c0_202 = arith.constant 0 : index
    %248 = vector.load %arg4[%c3_200, %c0_201, %c0_202] : memref<5x128x256xf32, #tpu.memory_space<vmem>>, vector<1x128x256xf32>
    %249 = vector.shape_cast %248 : vector<1x128x256xf32> to vector<128x256xf32>
    %cst_203 = arith.constant dense<0.000000e+00> : vector<32x256xf32>
    %250 = tpu.matmul %247, %249, %cst_203 {dimension_numbers = #tpu.dot_dimension_numbers<[1], [0], [0], [1], [0, 0, 1, 1], [], []>} : vector<32x128xf32>, vector<128x256xf32>, vector<32x256xf32> -> vector<32x256xf32>
    %251 = arith.addf %246, %250 : vector<32x256xf32>
    %c64_204 = arith.constant 64 : index
    %c0_205 = arith.constant 0 : index
    %252 = vector.load %arg13[%c64_204, %c0_205] : memref<96x128xf32, #tpu.memory_space<vmem>>, vector<32x128xf32>
    %c4_206 = arith.constant 4 : index
    %c0_207 = arith.constant 0 : index
    %c0_208 = arith.constant 0 : index
    %253 = vector.load %arg4[%c4_206, %c0_207, %c0_208] : memref<5x128x256xf32, #tpu.memory_space<vmem>>, vector<1x128x256xf32>
    %254 = vector.shape_cast %253 : vector<1x128x256xf32> to vector<128x256xf32>
    %cst_209 = arith.constant dense<0.000000e+00> : vector<32x256xf32>
    %255 = tpu.matmul %252, %254, %cst_209 {dimension_numbers = #tpu.dot_dimension_numbers<[1], [0], [0], [1], [0, 0, 1, 1], [], []>} : vector<32x128xf32>, vector<128x256xf32>, vector<32x256xf32> -> vector<32x256xf32>
    %256 = arith.addf %251, %255 : vector<32x256xf32>
    %257 = vector.extract_strided_slice %256 {offsets = [0, 0], sizes = [32, 128], strides = [1, 1]} : vector<32x256xf32> to vector<32x128xf32>
    %258 = vector.extract_strided_slice %256 {offsets = [0, 128], sizes = [32, 128], strides = [1, 1]} : vector<32x256xf32> to vector<32x128xf32>
    %259 = arith.maximumf %257, %258 : vector<32x128xf32>
    %260 = arith.maximumf %232, %259 : vector<32x128xf32>
    %261 = vector.broadcast %205 : vector<1x128xf32> to vector<32x128xf32>
    %262 = arith.addf %260, %261 : vector<32x128xf32>
    %cst_210 = arith.constant 0.000000e+00 : f32
    %263 = vector.broadcast %cst_210 : f32 to vector<32x128xf32>
    %264 = arith.maximumf %262, %263 : vector<32x128xf32>
    %c0_211 = arith.constant 0 : index
    %c0_212 = arith.constant 0 : index
    %265 = vector.load %arg14[%c0_211, %c0_212] : memref<32x128xf32, #tpu.memory_space<vmem>>, vector<32x128xf32>
    tpu.vector_store %arg14[%c0_211, %c0_212], %264 {strides = array<i32>} : memref<32x128xf32, #tpu.memory_space<vmem>>, vector<32x128xf32>,
    %c0_213 = arith.constant 0 : index
    %c0_214 = arith.constant 0 : index
    %266 = vector.load %arg14[%c0_213, %c0_214] : memref<32x128xf32, #tpu.memory_space<vmem>>, vector<8x128xf32>
    %c0_215 = arith.constant 0 : index
    %c0_216 = arith.constant 0 : index
    %c0_217 = arith.constant 0 : index
    %267 = vector.load %arg6[%c0_215, %c0_216, %c0_217] : memref<4x128x128xf32, #tpu.memory_space<vmem>>, vector<1x128x128xf32>
    %268 = vector.shape_cast %267 : vector<1x128x128xf32> to vector<128x128xf32>
    %cst_218 = arith.constant dense<0.000000e+00> : vector<8x128xf32>
    %269 = tpu.matmul %266, %268, %cst_218 {dimension_numbers = #tpu.dot_dimension_numbers<[1], [0], [0], [1], [0, 0, 1, 1], [], []>} : vector<8x128xf32>, vector<128x128xf32>, vector<8x128xf32> -> vector<8x128xf32>
    %c8_219 = arith.constant 8 : index
    %c0_220 = arith.constant 0 : index
    %270 = vector.load %arg14[%c8_219, %c0_220] : memref<32x128xf32, #tpu.memory_space<vmem>>, vector<8x128xf32>
    %c1_221 = arith.constant 1 : index
    %c0_222 = arith.constant 0 : index
    %c0_223 = arith.constant 0 : index
    %271 = vector.load %arg6[%c1_221, %c0_222, %c0_223] : memref<4x128x128xf32, #tpu.memory_space<vmem>>, vector<1x128x128xf32>
    %272 = vector.shape_cast %271 : vector<1x128x128xf32> to vector<128x128xf32>
    %cst_224 = arith.constant dense<0.000000e+00> : vector<8x128xf32>
    %273 = tpu.matmul %270, %272, %cst_224 {dimension_numbers = #tpu.dot_dimension_numbers<[1], [0], [0], [1], [0, 0, 1, 1], [], []>} : vector<8x128xf32>, vector<128x128xf32>, vector<8x128xf32> -> vector<8x128xf32>
    %274 = arith.addf %269, %273 : vector<8x128xf32>
    %c16_225 = arith.constant 16 : index
    %c0_226 = arith.constant 0 : index
    %275 = vector.load %arg14[%c16_225, %c0_226] : memref<32x128xf32, #tpu.memory_space<vmem>>, vector<8x128xf32>
    %c2_227 = arith.constant 2 : index
    %c0_228 = arith.constant 0 : index
    %c0_229 = arith.constant 0 : index
    %276 = vector.load %arg6[%c2_227, %c0_228, %c0_229] : memref<4x128x128xf32, #tpu.memory_space<vmem>>, vector<1x128x128xf32>
    %277 = vector.shape_cast %276 : vector<1x128x128xf32> to vector<128x128xf32>
    %cst_230 = arith.constant dense<0.000000e+00> : vector<8x128xf32>
    %278 = tpu.matmul %275, %277, %cst_230 {dimension_numbers = #tpu.dot_dimension_numbers<[1], [0], [0], [1], [0, 0, 1, 1], [], []>} : vector<8x128xf32>, vector<128x128xf32>, vector<8x128xf32> -> vector<8x128xf32>
    %279 = arith.addf %274, %278 : vector<8x128xf32>
    %c24_231 = arith.constant 24 : index
    %c0_232 = arith.constant 0 : index
    %280 = vector.load %arg14[%c24_231, %c0_232] : memref<32x128xf32, #tpu.memory_space<vmem>>, vector<8x128xf32>
    %c3_233 = arith.constant 3 : index
    %c0_234 = arith.constant 0 : index
    %c0_235 = arith.constant 0 : index
    %281 = vector.load %arg6[%c3_233, %c0_234, %c0_235] : memref<4x128x128xf32, #tpu.memory_space<vmem>>, vector<1x128x128xf32>
    %282 = vector.shape_cast %281 : vector<1x128x128xf32> to vector<128x128xf32>
    %cst_236 = arith.constant dense<0.000000e+00> : vector<8x128xf32>
    %283 = tpu.matmul %280, %282, %cst_236 {dimension_numbers = #tpu.dot_dimension_numbers<[1], [0], [0], [1], [0, 0, 1, 1], [], []>} : vector<8x128xf32>, vector<128x128xf32>, vector<8x128xf32> -> vector<8x128xf32>
    %284 = arith.addf %279, %283 : vector<8x128xf32>
    %c0_237 = arith.constant 0 : index
    %c0_238 = arith.constant 0 : index
    %285 = vector.load %arg7[%c0_237, %c0_238] : memref<1x128xf32, #tpu.memory_space<vmem>>, vector<1x128xf32>
    %286 = vector.broadcast %285 : vector<1x128xf32> to vector<8x128xf32>
    %287 = arith.addf %284, %286 : vector<8x128xf32>
    %cst_239 = arith.constant 0.000000e+00 : f32
    %288 = vector.broadcast %cst_239 : f32 to vector<8x128xf32>
    %289 = arith.maximumf %287, %288 : vector<8x128xf32>
    %c0_240 = arith.constant 0 : index
    %c0_241 = arith.constant 0 : index
    %290 = vector.load %arg8[%c0_240, %c0_241] : memref<128x128xf32, #tpu.memory_space<vmem>>, vector<128x128xf32>
    %cst_242 = arith.constant dense<0.000000e+00> : vector<8x128xf32>
    %291 = tpu.matmul %289, %290, %cst_242 {dimension_numbers = #tpu.dot_dimension_numbers<[1], [0], [0], [1], [0, 0, 1, 1], [], []>} : vector<8x128xf32>, vector<128x128xf32>, vector<8x128xf32> -> vector<8x128xf32>
    %c0_243 = arith.constant 0 : index
    %c0_244 = arith.constant 0 : index
    %292 = vector.load %arg9[%c0_243, %c0_244] : memref<1x128xf32, #tpu.memory_space<vmem>>, vector<1x128xf32>
    %293 = vector.broadcast %292 : vector<1x128xf32> to vector<8x128xf32>
    %294 = arith.addf %291, %293 : vector<8x128xf32>
    %cst_245 = arith.constant 0.000000e+00 : f32
    %295 = vector.broadcast %cst_245 : f32 to vector<8x128xf32>
    %296 = arith.maximumf %294, %295 : vector<8x128xf32>
    %c0_246 = arith.constant 0 : index
    %c0_247 = arith.constant 0 : index
    %297 = vector.load %arg10[%c0_246, %c0_247] : memref<128x128xf32, #tpu.memory_space<vmem>>, vector<128x128xf32>
    %cst_248 = arith.constant dense<0.000000e+00> : vector<8x128xf32>
    %298 = tpu.matmul %296, %297, %cst_248 {dimension_numbers = #tpu.dot_dimension_numbers<[1], [0], [0], [1], [0, 0, 1, 1], [], []>} : vector<8x128xf32>, vector<128x128xf32>, vector<8x128xf32> -> vector<8x128xf32>
    %c0_249 = arith.constant 0 : index
    %c0_250 = arith.constant 0 : index
    %299 = vector.load %arg11[%c0_249, %c0_250] : memref<1x128xf32, #tpu.memory_space<vmem>>, vector<1x128xf32>
    %300 = vector.broadcast %299 : vector<1x128xf32> to vector<8x128xf32>
    %301 = arith.addf %298, %300 : vector<8x128xf32>
    %c0_251 = arith.constant 0 : index
    %c0_252 = arith.constant 0 : index
    %302 = vector.load %arg12[%c0_251, %c0_252] : memref<8x128xf32, #tpu.memory_space<vmem>>, vector<8x128xf32>
    tpu.vector_store %arg12[%c0_251, %c0_252], %301 {strides = array<i32>} : memref<8x128xf32, #tpu.memory_space<vmem>>, vector<8x128xf32>,
    return
  }
  func.func @transform_0(%arg0: i32) -> (i32, i32, i32) {
    %c0_i32 = arith.constant 0 : i32
    %c0_i32_0 = arith.constant 0 : i32
    %c0_i32_1 = arith.constant 0 : i32
    return %c0_i32, %arg0, %c0_i32_0 : i32, i32, i32
  }
  func.func @transform_1(%arg0: i32) -> (i32, i32) {
    %c0_i32 = arith.constant 0 : i32
    %c0_i32_0 = arith.constant 0 : i32
    %c0_i32_1 = arith.constant 0 : i32
    return %c0_i32, %c0_i32_0 : i32, i32
  }
  func.func @transform_2(%arg0: i32) -> (i32, i32) {
    %c0_i32 = arith.constant 0 : i32
    %c0_i32_0 = arith.constant 0 : i32
    %c0_i32_1 = arith.constant 0 : i32
    return %c0_i32, %c0_i32_0 : i32, i32
  }
  func.func @transform_3(%arg0: i32) -> (i32, i32, i32) {
    %c0_i32 = arith.constant 0 : i32
    %c0_i32_0 = arith.constant 0 : i32
    %c0_i32_1 = arith.constant 0 : i32
    %c0_i32_2 = arith.constant 0 : i32
    return %c0_i32, %c0_i32_0, %c0_i32_1 : i32, i32, i32
  }
  func.func @transform_4(%arg0: i32) -> (i32, i32) {
    %c0_i32 = arith.constant 0 : i32
    %c0_i32_0 = arith.constant 0 : i32
    %c0_i32_1 = arith.constant 0 : i32
    return %c0_i32, %c0_i32_0 : i32, i32
  }
  func.func @transform_5(%arg0: i32) -> (i32, i32, i32) {
    %c0_i32 = arith.constant 0 : i32
    %c0_i32_0 = arith.constant 0 : i32
    %c0_i32_1 = arith.constant 0 : i32
    %c0_i32_2 = arith.constant 0 : i32
    return %c0_i32, %c0_i32_0, %c0_i32_1 : i32, i32, i32
  }
  func.func @transform_6(%arg0: i32) -> (i32, i32) {
    %c0_i32 = arith.constant 0 : i32
    %c0_i32_0 = arith.constant 0 : i32
    %c0_i32_1 = arith.constant 0 : i32
    return %c0_i32, %c0_i32_0 : i32, i32
  }
  func.func @transform_7(%arg0: i32) -> (i32, i32) {
    %c0_i32 = arith.constant 0 : i32
    %c0_i32_0 = arith.constant 0 : i32
    %c0_i32_1 = arith.constant 0 : i32
    return %c0_i32, %c0_i32_0 : i32, i32
  }
  func.func @transform_8(%arg0: i32) -> (i32, i32) {
    %c0_i32 = arith.constant 0 : i32
    %c0_i32_0 = arith.constant 0 : i32
    %c0_i32_1 = arith.constant 0 : i32
    return %c0_i32, %c0_i32_0 : i32, i32
  }
  func.func @transform_9(%arg0: i32) -> (i32, i32) {
    %c0_i32 = arith.constant 0 : i32
    %c0_i32_0 = arith.constant 0 : i32
    %c0_i32_1 = arith.constant 0 : i32
    return %c0_i32, %c0_i32_0 : i32, i32
  }
  func.func @transform_10(%arg0: i32) -> (i32, i32) {
    %c0_i32 = arith.constant 0 : i32
    %c0_i32_0 = arith.constant 0 : i32
    %c0_i32_1 = arith.constant 0 : i32
    return %c0_i32, %c0_i32_0 : i32, i32
  }
  func.func @transform_11(%arg0: i32) -> (i32, i32) {
    %c0_i32 = arith.constant 0 : i32
    %c0_i32_0 = arith.constant 0 : i32
    return %arg0, %c0_i32 : i32, i32
  }
}

</mosaic_0001>

<llo_original>
// kernel: network_forward.1
$region0: #{network_forward.1}
  #allocation0 [shape = 'u32[]', space=smem, size = 0x4, offset = 0x4, fixed_abs, tag = 'smem constant byte address 0x4 - core index']
  #allocation1 [shape = 'u32[144,128]{1,0:T(1,128)}', space=vmem, size = 0x12000, scoped, tag = 'internal scratch']
  #allocation2 [shape = 'f32[96,128]{1,0:T(8,128)}', space=vmem, size = 0xc000, scoped, tag = 'scratch operand']
  #allocation3 [shape = 'f32[32,128]{1,0:T(8,128)}', space=vmem, size = 0x4000, scoped, tag = 'scratch operand']
  %s0 = inlined_call_operand.vmem [shape: f32[24,8,140], index: 0, kind: input, shape index: {}]
  %s1 = inlined_call_operand.vmem [shape: f32[140,256], index: 1, kind: input, shape index: {}]
  %s2 = inlined_call_operand.vmem [shape: f32[1,128], index: 2, kind: input, shape index: {}]
  %s3 = inlined_call_operand.vmem [shape: f32[5,128,256], index: 3, kind: input, shape index: {}]
  %s4 = inlined_call_operand.vmem [shape: f32[1,128], index: 4, kind: input, shape index: {}]
  %s5 = inlined_call_operand.vmem [shape: f32[4,128,128], index: 5, kind: input, shape index: {}]
  %s6 = inlined_call_operand.vmem [shape: f32[1,128], index: 6, kind: input, shape index: {}]
  %s7 = inlined_call_operand.vmem [shape: f32[128,128], index: 7, kind: input, shape index: {}]
  %s8 = inlined_call_operand.vmem [shape: f32[1,128], index: 8, kind: input, shape index: {}]
  %s9 = inlined_call_operand.vmem [shape: f32[128,128], index: 9, kind: input, shape index: {}]
  %s10 = inlined_call_operand.vmem [shape: f32[1,128], index: 10, kind: input, shape index: {}]
  %s11 = inlined_call_operand.vmem [shape: f32[8,128], index: 11, kind: output, shape index: {}]
  %s12 = sld [smem:[#allocation0]]
  $region54: #{network_forward.1} parent=0
    _
  %s14 = ssub.s32 1, %s12
  %s15 = scalar_select 0, %s14, %s12
  // Predicated region
  $region2: #{network_forward.1} parent=0 // pred_check
    _
  $region3: #{network_forward.1} parent=0 // pred_check_branch
    %17 = sbr.rel (0) target = $region5
  $region4: #{network_forward.1} parent=0 // pred_region
    _
  $region5: #{network_forward.1} parent=0 // pred_fallthru
    _
  // Predicated region
  $region6: #{network_forward.1} parent=0 // pred_check
    _
  $region7: #{network_forward.1} parent=0 // pred_check_branch
    %19 = sbr.rel (0) target = $region9
  $region8: #{network_forward.1} parent=0 // pred_region
    _
  $region9: #{network_forward.1} parent=0 // pred_fallthru
    _
  // Predicated region
  $region10: #{network_forward.1} parent=0 // pred_check
    _
  $region11: #{network_forward.1} parent=0 // pred_check_branch
    %21 = sbr.rel (0) target = $region13
  $region12: #{network_forward.1} parent=0 // pred_region
    _
  $region13: #{network_forward.1} parent=0 // pred_fallthru
    _
  // Predicated region
  $region14: #{network_forward.1} parent=0 // pred_check
    _
  $region15: #{network_forward.1} parent=0 // pred_check_branch
    %23 = sbr.rel (0) target = $region17
  $region16: #{network_forward.1} parent=0 // pred_region
    _
  $region17: #{network_forward.1} parent=0 // pred_fallthru
    _
  // Predicated region
  $region18: #{network_forward.1} parent=0 // pred_check
    _
  $region19: #{network_forward.1} parent=0 // pred_check_branch
    %25 = sbr.rel (0) target = $region21
  $region20: #{network_forward.1} parent=0 // pred_region
    _
  $region21: #{network_forward.1} parent=0 // pred_fallthru
    _
  // Predicated region
  $region22: #{network_forward.1} parent=0 // pred_check
    _
  $region23: #{network_forward.1} parent=0 // pred_check_branch
    %27 = sbr.rel (0) target = $region25
  $region24: #{network_forward.1} parent=0 // pred_region
    _
  $region25: #{network_forward.1} parent=0 // pred_fallthru
    _
  // Predicated region
  $region26: #{network_forward.1} parent=0 // pred_check
    _
  $region27: #{network_forward.1} parent=0 // pred_check_branch
    %29 = sbr.rel (0) target = $region29
  $region28: #{network_forward.1} parent=0 // pred_region
    _
  $region29: #{network_forward.1} parent=0 // pred_fallthru
    _
  // Predicated region
  $region30: #{network_forward.1} parent=0 // pred_check
    _
  $region31: #{network_forward.1} parent=0 // pred_check_branch
    %31 = sbr.rel (0) target = $region33
  $region32: #{network_forward.1} parent=0 // pred_region
    _
  $region33: #{network_forward.1} parent=0 // pred_fallthru
    _
  // Predicated region
  $region34: #{network_forward.1} parent=0 // pred_check
    _
  $region35: #{network_forward.1} parent=0 // pred_check_branch
    %33 = sbr.rel (0) target = $region37
  $region36: #{network_forward.1} parent=0 // pred_region
    _
  $region37: #{network_forward.1} parent=0 // pred_fallthru
    _
  // Predicated region
  $region38: #{network_forward.1} parent=0 // pred_check
    _
  $region39: #{network_forward.1} parent=0 // pred_check_branch
    %35 = sbr.rel (0) target = $region41
  $region40: #{network_forward.1} parent=0 // pred_region
    _
  $region41: #{network_forward.1} parent=0 // pred_fallthru
    _
  // Predicated region
  $region42: #{network_forward.1} parent=0 // pred_check
    _
  $region43: #{network_forward.1} parent=0 // pred_check_branch
    %37 = sbr.rel (0) target = $region45
  $region44: #{network_forward.1} parent=0 // pred_region
    _
  $region45: #{network_forward.1} parent=0 // pred_fallthru
    _
  %v38 = vld [vmem:[%s2] sm:$0x1]
  %v39 = vld [vmem:[%s0] sm:$0xff]
  %v40 = vld [vmem:[%s0 + $0x8] sm:$0xff]
  %v41 = vld [vmem:[%s1] sm:$0xff]
  %v42 = vld [vmem:[%s1 + $0x8] sm:$0xff]
  %v43 = vld [vmem:[%s1 + $0x10] sm:$0xff]
  %v44 = vld [vmem:[%s1 + $0x18] sm:$0xff]
  %v45 = vld [vmem:[%s1 + $0x20] sm:$0xff]
  %v46 = vld [vmem:[%s1 + $0x28] sm:$0xff]
  %v47 = vld [vmem:[%s1 + $0x30] sm:$0xff]
  %v48 = vld [vmem:[%s1 + $0x38] sm:$0xff]
  %v49 = vld [vmem:[%s1 + $0x40] sm:$0xff]
  %v50 = vld [vmem:[%s1 + $0x48] sm:$0xff]
  %v51 = vld [vmem:[%s1 + $0x50] sm:$0xff]
  %v52 = vld [vmem:[%s1 + $0x58] sm:$0xff]
  %v53 = vld [vmem:[%s1 + $0x60] sm:$0xff]
  %v54 = vld [vmem:[%s1 + $0x68] sm:$0xff]
  %v55 = vld [vmem:[%s1 + $0x70] sm:$0xff]
  %v56 = vld [vmem:[%s1 + $0x78] sm:$0xff]
  %v57 = vld [vmem:[%s1 + $0x80] sm:$0xff]
  %v58 = vld [vmem:[%s1 + $0x88] sm:$0xff]
  %v59 = vld [vmem:[%s1 + $0x90] sm:$0xff]
  %v60 = vld [vmem:[%s1 + $0x98] sm:$0xff]
  %v61 = vld [vmem:[%s1 + $0xa0] sm:$0xff]
  %v62 = vld [vmem:[%s1 + $0xa8] sm:$0xff]
  %v63 = vld [vmem:[%s1 + $0xb0] sm:$0xff]
  %v64 = vld [vmem:[%s1 + $0xb8] sm:$0xff]
  %v65 = vld [vmem:[%s1 + $0xc0] sm:$0xff]
  %v66 = vld [vmem:[%s1 + $0xc8] sm:$0xff]
  %v67 = vld [vmem:[%s1 + $0xd0] sm:$0xff]
  %v68 = vld [vmem:[%s1 + $0xd8] sm:$0xff]
  %v69 = vld [vmem:[%s1 + $0xe0] sm:$0xff]
  %v70 = vld [vmem:[%s1 + $0xe8] sm:$0xff]
  %v71 = vld [vmem:[%s1 + $0xf0] sm:$0xff]
  %v72 = vld [vmem:[%s1 + $0xf8] sm:$0xff]
  %v73 = vld [vmem:[%s1 + $0x100] sm:$0xff]
  %v74 = vld [vmem:[%s1 + $0x108] sm:$0xff]
  %v75 = vld [vmem:[%s1 + $0x110] sm:$0xf]
  %v76 = vld [vmem:[%s1 + $0x118] sm:$0xf]
  %vm77 = vcmask 97280
  %v79 = vsel %vm77, %v40, 0
  %vm81 = vcmask 1043456
  %v83 = vsel %vm81, %v75, 0
  %v86 = vsel %vm81, %v76, 0
  %88 = vmatprep.subr.mxu0 %v42
  %89 = vmatpush1.msra.mxu0 %v41
  %90 = vmatprep.subr.mxu0 %v44
  %91 = vmatpush1.msra.mxu0 %v43
  %92 = vmatprep.subr.mxu0 %v46
  %93 = vmatpush1.msra.mxu0 %v45
  %94 = vmatprep.subr.mxu0 %v48
  %95 = vmatpush1.msra.mxu0 %v47
  %96 = vmatprep.subr.mxu0 %v50
  %97 = vmatpush1.msra.mxu0 %v49
  %98 = vmatprep.subr.mxu0 %v52
  %99 = vmatpush1.msra.mxu0 %v51
  %100 = vmatprep.subr.mxu0 %v54
  %101 = vmatpush1.msra.mxu0 %v53
  %102 = vmatprep.subr.mxu0 %v56
  %103 = vmatpush1.msra.mxu0 %v55
  %104 = vmatprep.subr.mxu0 %v58
  %105 = vmatpush1.msra.mxu0 %v57
  %106 = vmatprep.subr.mxu0 %v60
  %107 = vmatpush1.msra.mxu0 %v59
  %108 = vmatprep.subr.mxu0 %v62
  %109 = vmatpush1.msra.mxu0 %v61
  %110 = vmatprep.subr.mxu0 %v64
  %111 = vmatpush1.msra.mxu0 %v63
  %112 = vmatprep.subr.mxu0 %v66
  %113 = vmatpush1.msra.mxu0 %v65
  %114 = vmatprep.subr.mxu0 %v68
  %115 = vmatpush1.msra.mxu0 %v67
  %116 = vmatprep.subr.mxu0 %v70
  %117 = vmatpush1.msra.mxu0 %v69
  %118 = vmatprep.subr.mxu0 %v72
  %119 = vmatpush1.msra.mxu0 %v71
  %120 = vmatprep.subr.mxu0 %v74
  %121 = vmatpush1.msra.mxu0 %v73
  %122 = vmatprep.subr.mxu0 %v86
  %123 = vmatpush1.msra.mxu0 %v83
  %124 = vmatprep.subr.mxu0 0.0
  %125 = vmatpush1.msra.mxu0 0.0
  %126 = vmatprep.subr.mxu0 0.0
  %127 = vmatpush1.msra.mxu0 0.0
  %128 = vmatprep.subr.mxu0 0.0
  %129 = vmatpush1.msra.mxu0 0.0
  %130 = vmatprep.subr.mxu0 0.0
  %131 = vmatpush1.msra.mxu0 0.0
  %132 = vmatprep.subr.mxu0 0.0
  %133 = vmatpush1.msra.mxu0 0.0
  %134 = vmatprep.subr.mxu0 0.0
  %135 = vmatpush1.msra.mxu0 0.0
  %136 = vmatprep.subr.mxu0 0.0
  %137 = vmatpush1.msra.mxu0 0.0
  %138 = vmatprep.subr.mxu0 0.0
  %139 = vmatpush1.msra.mxu0 0.0
  %140 = vmatprep.subr.mxu0 0.0
  %141 = vmatpush1.msra.mxu0 0.0
  %142 = vmatprep.subr.mxu0 0.0
  %143 = vmatpush1.msra.mxu0 0.0
  %144 = vmatprep.subr.mxu0 0.0
  %145 = vmatpush1.msra.mxu0 0.0
  %146 = vmatprep.subr.mxu0 0.0
  %147 = vmatpush1.msra.mxu0 0.0
  %148 = vmatprep.subr.mxu0 0.0
  %149 = vmatpush1.msra.mxu0 0.0
  %150 = vmatprep.subr.mxu0 0.0
  %151 = vmatpush1.msra.mxu0 0.0
  %152 = vmatprep.mubr.f32.mxu0 %v79
  %153 = vmatmul.mubr.f32.gmra.mrb[0].mxu0 %v39
  %v154 = vpop.f32.mrb[0].mxu0
  %v155 = vadd.f32 0.0, %v154
  %v156 = vpop.f32.mrb[0].mxu0
  %v157 = vadd.f32 0.0, %v156
  %158 = vdwg.mxu0
  %s159 = scalar_lea.vmem %s0, 192
  %v160 = vld [vmem:[%s159] sm:$0xff]
  %v161 = vld [vmem:[%s159 + $0x8] sm:$0xff]
  %v163 = vsel %vm77, %v161, 0
  %165 = vmatprep.subr.mxu0 %v42
  %166 = vmatpush1.msra.mxu0 %v41
  %167 = vmatprep.subr.mxu0 %v44
  %168 = vmatpush1.msra.mxu0 %v43
  %169 = vmatprep.subr.mxu0 %v46
  %170 = vmatpush1.msra.mxu0 %v45
  %171 = vmatprep.subr.mxu0 %v48
  %172 = vmatpush1.msra.mxu0 %v47
  %173 = vmatprep.subr.mxu0 %v50
  %174 = vmatpush1.msra.mxu0 %v49
  %175 = vmatprep.subr.mxu0 %v52
  %176 = vmatpush1.msra.mxu0 %v51
  %177 = vmatprep.subr.mxu0 %v54
  %178 = vmatpush1.msra.mxu0 %v53
  %179 = vmatprep.subr.mxu0 %v56
  %180 = vmatpush1.msra.mxu0 %v55
  %181 = vmatprep.subr.mxu0 %v58
  %182 = vmatpush1.msra.mxu0 %v57
  %183 = vmatprep.subr.mxu0 %v60
  %184 = vmatpush1.msra.mxu0 %v59
  %185 = vmatprep.subr.mxu0 %v62
  %186 = vmatpush1.msra.mxu0 %v61
  %187 = vmatprep.subr.mxu0 %v64
  %188 = vmatpush1.msra.mxu0 %v63
  %189 = vmatprep.subr.mxu0 %v66
  %190 = vmatpush1.msra.mxu0 %v65
  %191 = vmatprep.subr.mxu0 %v68
  %192 = vmatpush1.msra.mxu0 %v67
  %193 = vmatprep.subr.mxu0 %v70
  %194 = vmatpush1.msra.mxu0 %v69
  %195 = vmatprep.subr.mxu0 %v72
  %196 = vmatpush1.msra.mxu0 %v71
  %197 = vmatprep.subr.mxu0 %v74
  %198 = vmatpush1.msra.mxu0 %v73
  %199 = vmatprep.subr.mxu0 %v86
  %200 = vmatpush1.msra.mxu0 %v83
  %201 = vmatprep.subr.mxu0 0.0
  %202 = vmatpush1.msra.mxu0 0.0
  %203 = vmatprep.subr.mxu0 0.0
  %204 = vmatpush1.msra.mxu0 0.0
  %205 = vmatprep.subr.mxu0 0.0
  %206 = vmatpush1.msra.mxu0 0.0
  %207 = vmatprep.subr.mxu0 0.0
  %208 = vmatpush1.msra.mxu0 0.0
  %209 = vmatprep.subr.mxu0 0.0
  %210 = vmatpush1.msra.mxu0 0.0
  %211 = vmatprep.subr.mxu0 0.0
  %212 = vmatpush1.msra.mxu0 0.0
  %213 = vmatprep.subr.mxu0 0.0
  %214 = vmatpush1.msra.mxu0 0.0
  %215 = vmatprep.subr.mxu0 0.0
  %216 = vmatpush1.msra.mxu0 0.0
  %217 = vmatprep.subr.mxu0 0.0
  %218 = vmatpush1.msra.mxu0 0.0
  %219 = vmatprep.subr.mxu0 0.0
  %220 = vmatpush1.msra.mxu0 0.0
  %221 = vmatprep.subr.mxu0 0.0
  %222 = vmatpush1.msra.mxu0 0.0
  %223 = vmatprep.subr.mxu0 0.0
  %224 = vmatpush1.msra.mxu0 0.0
  %225 = vmatprep.subr.mxu0 0.0
  %226 = vmatpush1.msra.mxu0 0.0
  %227 = vmatprep.subr.mxu0 0.0
  %228 = vmatpush1.msra.mxu0 0.0
  %229 = vmatprep.mubr.f32.mxu0 %v163
  %230 = vmatmul.mubr.f32.gmra.mrb[0].mxu0 %v160
  %v231 = vpop.f32.mrb[0].mxu0
  %v232 = vadd.f32 0.0, %v231
  %v233 = vpop.f32.mrb[0].mxu0
  %v234 = vadd.f32 0.0, %v233
  %235 = vdwg.mxu0
  %v236 = vmax.f32 %v155, %v232
  %v237 = vmax.f32 %v157, %v234
  %v238 = vmax.f32 %v236, %v237
  %v240 = vlaneseq
  %v241 = vshrl.u32 %v240, 7
  %v242 = vsub.s32 0, %v241
  %v243 = vrot.slane %v38, %v242
  %v245 = vadd.f32 %v238, %v243
  %v246 = vmax.f32 %v245, 0.0
  %247 = vst [vmem:[#allocation2] sm:$0xff] %v246
  %s248 = scalar_lea.vmem %s0, 16
  %v249 = vld [vmem:[%s248] sm:$0xff]
  %v250 = vld [vmem:[%s248 + $0x8] sm:$0xff]
  %v251 = vld [vmem:[%s1] sm:$0xff]
  %v252 = vld [vmem:[%s1 + $0x8] sm:$0xff]
  %v253 = vld [vmem:[%s1 + $0x10] sm:$0xff]
  %v254 = vld [vmem:[%s1 + $0x18] sm:$0xff]
  %v255 = vld [vmem:[%s1 + $0x20] sm:$0xff]
  %v256 = vld [vmem:[%s1 + $0x28] sm:$0xff]
  %v257 = vld [vmem:[%s1 + $0x30] sm:$0xff]
  %v258 = vld [vmem:[%s1 + $0x38] sm:$0xff]
  %v259 = vld [vmem:[%s1 + $0x40] sm:$0xff]
  %v260 = vld [vmem:[%s1 + $0x48] sm:$0xff]
  %v261 = vld [vmem:[%s1 + $0x50] sm:$0xff]
  %v262 = vld [vmem:[%s1 + $0x58] sm:$0xff]
  %v263 = vld [vmem:[%s1 + $0x60] sm:$0xff]
  %v264 = vld [vmem:[%s1 + $0x68] sm:$0xff]
  %v265 = vld [vmem:[%s1 + $0x70] sm:$0xff]
  %v266 = vld [vmem:[%s1 + $0x78] sm:$0xff]
  %v267 = vld [vmem:[%s1 + $0x80] sm:$0xff]
  %v268 = vld [vmem:[%s1 + $0x88] sm:$0xff]
  %v269 = vld [vmem:[%s1 + $0x90] sm:$0xff]
  %v270 = vld [vmem:[%s1 + $0x98] sm:$0xff]
  %v271 = vld [vmem:[%s1 + $0xa0] sm:$0xff]
  %v272 = vld [vmem:[%s1 + $0xa8] sm:$0xff]
  %v273 = vld [vmem:[%s1 + $0xb0] sm:$0xff]
  %v274 = vld [vmem:[%s1 + $0xb8] sm:$0xff]
  %v275 = vld [vmem:[%s1 + $0xc0] sm:$0xff]
  %v276 = vld [vmem:[%s1 + $0xc8] sm:$0xff]
  %v277 = vld [vmem:[%s1 + $0xd0] sm:$0xff]
  %v278 = vld [vmem:[%s1 + $0xd8] sm:$0xff]
  %v279 = vld [vmem:[%s1 + $0xe0] sm:$0xff]
  %v280 = vld [vmem:[%s1 + $0xe8] sm:$0xff]
  %v281 = vld [vmem:[%s1 + $0xf0] sm:$0xff]
  %v282 = vld [vmem:[%s1 + $0xf8] sm:$0xff]
  %v283 = vld [vmem:[%s1 + $0x100] sm:$0xff]
  %v284 = vld [vmem:[%s1 + $0x108] sm:$0xff]
  %v285 = vld [vmem:[%s1 + $0x110] sm:$0xf]
  %v286 = vld [vmem:[%s1 + $0x118] sm:$0xf]
  %v288 = vsel %vm77, %v250, 0
  %v291 = vsel %vm81, %v285, 0
  %v294 = vsel %vm81, %v286, 0
  %296 = vmatprep.subr.mxu0 %v252
  %297 = vmatpush1.msra.mxu0 %v251
  %298 = vmatprep.subr.mxu0 %v254
  %299 = vmatpush1.msra.mxu0 %v253
  %300 = vmatprep.subr.mxu0 %v256
  %301 = vmatpush1.msra.mxu0 %v255
  %302 = vmatprep.subr.mxu0 %v258
  %303 = vmatpush1.msra.mxu0 %v257
  %304 = vmatprep.subr.mxu0 %v260
  %305 = vmatpush1.msra.mxu0 %v259
  %306 = vmatprep.subr.mxu0 %v262
  %307 = vmatpush1.msra.mxu0 %v261
  %308 = vmatprep.subr.mxu0 %v264
  %309 = vmatpush1.msra.mxu0 %v263
  %310 = vmatprep.subr.mxu0 %v266
  %311 = vmatpush1.msra.mxu0 %v265
  %312 = vmatprep.subr.mxu0 %v268
  %313 = vmatpush1.msra.mxu0 %v267
  %314 = vmatprep.subr.mxu0 %v270
  %315 = vmatpush1.msra.mxu0 %v269
  %316 = vmatprep.subr.mxu0 %v272
  %317 = vmatpush1.msra.mxu0 %v271
  %318 = vmatprep.subr.mxu0 %v274
  %319 = vmatpush1.msra.mxu0 %v273
  %320 = vmatprep.subr.mxu0 %v276
  %321 = vmatpush1.msra.mxu0 %v275
  %322 = vmatprep.subr.mxu0 %v278
  %323 = vmatpush1.msra.mxu0 %v277
  %324 = vmatprep.subr.mxu0 %v280
  %325 = vmatpush1.msra.mxu0 %v279
  %326 = vmatprep.subr.mxu0 %v282
  %327 = vmatpush1.msra.mxu0 %v281
  %328 = vmatprep.subr.mxu0 %v284
  %329 = vmatpush1.msra.mxu0 %v283
  %330 = vmatprep.subr.mxu0 %v294
  %331 = vmatpush1.msra.mxu0 %v291
  %332 = vmatprep.subr.mxu0 0.0
  %333 = vmatpush1.msra.mxu0 0.0
  %334 = vmatprep.subr.mxu0 0.0
  %335 = vmatpush1.msra.mxu0 0.0
  %336 = vmatprep.subr.mxu0 0.0
  %337 = vmatpush1.msra.mxu0 0.0
  %338 = vmatprep.subr.mxu0 0.0
  %339 = vmatpush1.msra.mxu0 0.0
  %340 = vmatprep.subr.mxu0 0.0
  %341 = vmatpush1.msra.mxu0 0.0
  %342 = vmatprep.subr.mxu0 0.0
  %343 = vmatpush1.msra.mxu0 0.0
  %344 = vmatprep.subr.mxu0 0.0
  %345 = vmatpush1.msra.mxu0 0.0
  %346 = vmatprep.subr.mxu0 0.0
  %347 = vmatpush1.msra.mxu0 0.0
  %348 = vmatprep.subr.mxu0 0.0
  %349 = vmatpush1.msra.mxu0 0.0
  %350 = vmatprep.subr.mxu0 0.0
  %351 = vmatpush1.msra.mxu0 0.0
  %352 = vmatprep.subr.mxu0 0.0
  %353 = vmatpush1.msra.mxu0 0.0
  %354 = vmatprep.subr.mxu0 0.0
  %355 = vmatpush1.msra.mxu0 0.0
  %356 = vmatprep.subr.mxu0 0.0
  %357 = vmatpush1.msra.mxu0 0.0
  %358 = vmatprep.subr.mxu0 0.0
  %359 = vmatpush1.msra.mxu0 0.0
  %360 = vmatprep.mubr.f32.mxu0 %v288
  %361 = vmatmul.mubr.f32.gmra.mrb[0].mxu0 %v249
  %v362 = vpop.f32.mrb[0].mxu0
  %v363 = vadd.f32 0.0, %v362
  %v364 = vpop.f32.mrb[0].mxu0
  %v365 = vadd.f32 0.0, %v364
  %366 = vdwg.mxu0
  %s367 = scalar_lea.vmem %s0, 208
  %v368 = vld [vmem:[%s367] sm:$0xff]
  %v369 = vld [vmem:[%s367 + $0x8] sm:$0xff]
  %v371 = vsel %vm77, %v369, 0
  %373 = vmatprep.subr.mxu0 %v252
  %374 = vmatpush1.msra.mxu0 %v251
  %375 = vmatprep.subr.mxu0 %v254
  %376 = vmatpush1.msra.mxu0 %v253
  %377 = vmatprep.subr.mxu0 %v256
  %378 = vmatpush1.msra.mxu0 %v255
  %379 = vmatprep.subr.mxu0 %v258
  %380 = vmatpush1.msra.mxu0 %v257
  %381 = vmatprep.subr.mxu0 %v260
  %382 = vmatpush1.msra.mxu0 %v259
  %383 = vmatprep.subr.mxu0 %v262
  %384 = vmatpush1.msra.mxu0 %v261
  %385 = vmatprep.subr.mxu0 %v264
  %386 = vmatpush1.msra.mxu0 %v263
  %387 = vmatprep.subr.mxu0 %v266
  %388 = vmatpush1.msra.mxu0 %v265
  %389 = vmatprep.subr.mxu0 %v268
  %390 = vmatpush1.msra.mxu0 %v267
  %391 = vmatprep.subr.mxu0 %v270
  %392 = vmatpush1.msra.mxu0 %v269
  %393 = vmatprep.subr.mxu0 %v272
  %394 = vmatpush1.msra.mxu0 %v271
  %395 = vmatprep.subr.mxu0 %v274
  %396 = vmatpush1.msra.mxu0 %v273
  %397 = vmatprep.subr.mxu0 %v276
  %398 = vmatpush1.msra.mxu0 %v275
  %399 = vmatprep.subr.mxu0 %v278
  %400 = vmatpush1.msra.mxu0 %v277
  %401 = vmatprep.subr.mxu0 %v280
  %402 = vmatpush1.msra.mxu0 %v279
  %403 = vmatprep.subr.mxu0 %v282
  %404 = vmatpush1.msra.mxu0 %v281
  %405 = vmatprep.subr.mxu0 %v284
  %406 = vmatpush1.msra.mxu0 %v283
  %407 = vmatprep.subr.mxu0 %v294
  %408 = vmatpush1.msra.mxu0 %v291
  %409 = vmatprep.subr.mxu0 0.0
  %410 = vmatpush1.msra.mxu0 0.0
  %411 = vmatprep.subr.mxu0 0.0
  %412 = vmatpush1.msra.mxu0 0.0
  %413 = vmatprep.subr.mxu0 0.0
  %414 = vmatpush1.msra.mxu0 0.0
  %415 = vmatprep.subr.mxu0 0.0
  %416 = vmatpush1.msra.mxu0 0.0
  %417 = vmatprep.subr.mxu0 0.0
  %418 = vmatpush1.msra.mxu0 0.0
  %419 = vmatprep.subr.mxu0 0.0
  %420 = vmatpush1.msra.mxu0 0.0
  %421 = vmatprep.subr.mxu0 0.0
  %422 = vmatpush1.msra.mxu0 0.0
  %423 = vmatprep.subr.mxu0 0.0
  %424 = vmatpush1.msra.mxu0 0.0
  %425 = vmatprep.subr.mxu0 0.0
  %426 = vmatpush1.msra.mxu0 0.0
  %427 = vmatprep.subr.mxu0 0.0
  %428 = vmatpush1.msra.mxu0 0.0
  %429 = vmatprep.subr.mxu0 0.0
  %430 = vmatpush1.msra.mxu0 0.0
  %431 = vmatprep.subr.mxu0 0.0
  %432 = vmatpush1.msra.mxu0 0.0
  %433 = vmatprep.subr.mxu0 0.0
  %434 = vmatpush1.msra.mxu0 0.0
  %435 = vmatprep.subr.mxu0 0.0
  %436 = vmatpush1.msra.mxu0 0.0
  %437 = vmatprep.mubr.f32.mxu0 %v371
  %438 = vmatmul.mubr.f32.gmra.mrb[0].mxu0 %v368
  %v439 = vpop.f32.mrb[0].mxu0
  %v440 = vadd.f32 0.0, %v439
  %v441 = vpop.f32.mrb[0].mxu0
  %v442 = vadd.f32 0.0, %v441
  %443 = vdwg.mxu0
  %v444 = vmax.f32 %v363, %v440
  %v445 = vmax.f32 %v365, %v442
  %v446 = vmax.f32 %v444, %v445
  %v447 = vadd.f32 %v446, %v243
  %v448 = vmax.f32 %v447, 0.0
  %449 = vst [vmem:[#allocation2 + $0x8] sm:$0xff] %v448
  %s450 = scalar_lea.vmem %s0, 32
  %v451 = vld [vmem:[%s450] sm:$0xff]
  %v452 = vld [vmem:[%s450 + $0x8] sm:$0xff]
  %v453 = vld [vmem:[%s1] sm:$0xff]
  %v454 = vld [vmem:[%s1 + $0x8] sm:$0xff]
  %v455 = vld [vmem:[%s1 + $0x10] sm:$0xff]
  %v456 = vld [vmem:[%s1 + $0x18] sm:$0xff]
  %v457 = vld [vmem:[%s1 + $0x20] sm:$0xff]
  %v458 = vld [vmem:[%s1 + $0x28] sm:$0xff]
  %v459 = vld [vmem:[%s1 + $0x30] sm:$0xff]
  %v460 = vld [vmem:[%s1 + $0x38] sm:$0xff]
  %v461 = vld [vmem:[%s1 + $0x40] sm:$0xff]
  %v462 = vld [vmem:[%s1 + $0x48] sm:$0xff]
  %v463 = vld [vmem:[%s1 + $0x50] sm:$0xff]
  %v464 = vld [vmem:[%s1 + $0x58] sm:$0xff]
  %v465 = vld [vmem:[%s1 + $0x60] sm:$0xff]
  %v466 = vld [vmem:[%s1 + $0x68] sm:$0xff]
  %v467 = vld [vmem:[%s1 + $0x70] sm:$0xff]
  %v468 = vld [vmem:[%s1 + $0x78] sm:$0xff]
  %v469 = vld [vmem:[%s1 + $0x80] sm:$0xff]
  %v470 = vld [vmem:[%s1 + $0x88] sm:$0xff]
  %v471 = vld [vmem:[%s1 + $0x90] sm:$0xff]
  %v472 = vld [vmem:[%s1 + $0x98] sm:$0xff]
  %v473 = vld [vmem:[%s1 + $0xa0] sm:$0xff]
  %v474 = vld [vmem:[%s1 + $0xa8] sm:$0xff]
  %v475 = vld [vmem:[%s1 + $0xb0] sm:$0xff]
  %v476 = vld [vmem:[%s1 + $0xb8] sm:$0xff]
  %v477 = vld [vmem:[%s1 + $0xc0] sm:$0xff]
  %v478 = vld [vmem:[%s1 + $0xc8] sm:$0xff]
  %v479 = vld [vmem:[%s1 + $0xd0] sm:$0xff]
  %v480 = vld [vmem:[%s1 + $0xd8] sm:$0xff]
  %v481 = vld [vmem:[%s1 + $0xe0] sm:$0xff]
  %v482 = vld [vmem:[%s1 + $0xe8] sm:$0xff]
  %v483 = vld [vmem:[%s1 + $0xf0] sm:$0xff]
  %v484 = vld [vmem:[%s1 + $0xf8] sm:$0xff]
  %v485 = vld [vmem:[%s1 + $0x100] sm:$0xff]
  %v486 = vld [vmem:[%s1 + $0x108] sm:$0xff]
  %v487 = vld [vmem:[%s1 + $0x110] sm:$0xf]
  %v488 = vld [vmem:[%s1 + $0x118] sm:$0xf]
  %v490 = vsel %vm77, %v452, 0
  %v493 = vsel %vm81, %v487, 0
  %v496 = vsel %vm81, %v488, 0
  %498 = vmatprep.subr.mxu0 %v454
  %499 = vmatpush1.msra.mxu0 %v453
  %500 = vmatprep.subr.mxu0 %v456
  %501 = vmatpush1.msra.mxu0 %v455
  %502 = vmatprep.subr.mxu0 %v458
  %503 = vmatpush1.msra.mxu0 %v457
  %504 = vmatprep.subr.mxu0 %v460
  %505 = vmatpush1.msra.mxu0 %v459
  %506 = vmatprep.subr.mxu0 %v462
  %507 = vmatpush1.msra.mxu0 %v461
  %508 = vmatprep.subr.mxu0 %v464
  %509 = vmatpush1.msra.mxu0 %v463
  %510 = vmatprep.subr.mxu0 %v466
  %511 = vmatpush1.msra.mxu0 %v465
  %512 = vmatprep.subr.mxu0 %v468
  %513 = vmatpush1.msra.mxu0 %v467
  %514 = vmatprep.subr.mxu0 %v470
  %515 = vmatpush1.msra.mxu0 %v469
  %516 = vmatprep.subr.mxu0 %v472
  %517 = vmatpush1.msra.mxu0 %v471
  %518 = vmatprep.subr.mxu0 %v474
  %519 = vmatpush1.msra.mxu0 %v473
  %520 = vmatprep.subr.mxu0 %v476
  %521 = vmatpush1.msra.mxu0 %v475
  %522 = vmatprep.subr.mxu0 %v478
  %523 = vmatpush1.msra.mxu0 %v477
  %524 = vmatprep.subr.mxu0 %v480
  %525 = vmatpush1.msra.mxu0 %v479
  %526 = vmatprep.subr.mxu0 %v482
  %527 = vmatpush1.msra.mxu0 %v481
  %528 = vmatprep.subr.mxu0 %v484
  %529 = vmatpush1.msra.mxu0 %v483
  %530 = vmatprep.subr.mxu0 %v486
  %531 = vmatpush1.msra.mxu0 %v485
  %532 = vmatprep.subr.mxu0 %v496
  %533 = vmatpush1.msra.mxu0 %v493
  %534 = vmatprep.subr.mxu0 0.0
  %535 = vmatpush1.msra.mxu0 0.0
  %536 = vmatprep.subr.mxu0 0.0
  %537 = vmatpush1.msra.mxu0 0.0
  %538 = vmatprep.subr.mxu0 0.0
  %539 = vmatpush1.msra.mxu0 0.0
  %540 = vmatprep.subr.mxu0 0.0
  %541 = vmatpush1.msra.mxu0 0.0
  %542 = vmatprep.subr.mxu0 0.0
  %543 = vmatpush1.msra.mxu0 0.0
  %544 = vmatprep.subr.mxu0 0.0
  %545 = vmatpush1.msra.mxu0 0.0
  %546 = vmatprep.subr.mxu0 0.0
  %547 = vmatpush1.msra.mxu0 0.0
  %548 = vmatprep.subr.mxu0 0.0
  %549 = vmatpush1.msra.mxu0 0.0
  %550 = vmatprep.subr.mxu0 0.0
  %551 = vmatpush1.msra.mxu0 0.0
  %552 = vmatprep.subr.mxu0 0.0
  %553 = vmatpush1.msra.mxu0 0.0
  %554 = vmatprep.subr.mxu0 0.0
  %555 = vmatpush1.msra.mxu0 0.0
  %556 = vmatprep.subr.mxu0 0.0
  %557 = vmatpush1.msra.mxu0 0.0
  %558 = vmatprep.subr.mxu0 0.0
  %559 = vmatpush1.msra.mxu0 0.0
  %560 = vmatprep.subr.mxu0 0.0
  %561 = vmatpush1.msra.mxu0 0.0
  %562 = vmatprep.mubr.f32.mxu0 %v490
  %563 = vmatmul.mubr.f32.gmra.mrb[0].mxu0 %v451
  %v564 = vpop.f32.mrb[0].mxu0
  %v565 = vadd.f32 0.0, %v564
  %v566 = vpop.f32.mrb[0].mxu0
  %v567 = vadd.f32 0.0, %v566
  %568 = vdwg.mxu0
  %s569 = scalar_lea.vmem %s0, 224
  %v570 = vld [vmem:[%s569] sm:$0xff]
  %v571 = vld [vmem:[%s569 + $0x8] sm:$0xff]
  %v573 = vsel %vm77, %v571, 0
  %575 = vmatprep.subr.mxu0 %v454
  %576 = vmatpush1.msra.mxu0 %v453
  %577 = vmatprep.subr.mxu0 %v456
  %578 = vmatpush1.msra.mxu0 %v455
  %579 = vmatprep.subr.mxu0 %v458
  %580 = vmatpush1.msra.mxu0 %v457
  %581 = vmatprep.subr.mxu0 %v460
  %582 = vmatpush1.msra.mxu0 %v459
  %583 = vmatprep.subr.mxu0 %v462
  %584 = vmatpush1.msra.mxu0 %v461
  %585 = vmatprep.subr.mxu0 %v464
  %586 = vmatpush1.msra.mxu0 %v463
  %587 = vmatprep.subr.mxu0 %v466
  %588 = vmatpush1.msra.mxu0 %v465
  %589 = vmatprep.subr.mxu0 %v468
  %590 = vmatpush1.msra.mxu0 %v467
  %591 = vmatprep.subr.mxu0 %v470
  %592 = vmatpush1.msra.mxu0 %v469
  %593 = vmatprep.subr.mxu0 %v472
  %594 = vmatpush1.msra.mxu0 %v471
  %595 = vmatprep.subr.mxu0 %v474
  %596 = vmatpush1.msra.mxu0 %v473
  %597 = vmatprep.subr.mxu0 %v476
  %598 = vmatpush1.msra.mxu0 %v475
  %599 = vmatprep.subr.mxu0 %v478
  %600 = vmatpush1.msra.mxu0 %v477
  %601 = vmatprep.subr.mxu0 %v480
  %602 = vmatpush1.msra.mxu0 %v479
  %603 = vmatprep.subr.mxu0 %v482
  %604 = vmatpush1.msra.mxu0 %v481
  %605 = vmatprep.subr.mxu0 %v484
  %606 = vmatpush1.msra.mxu0 %v483
  %607 = vmatprep.subr.mxu0 %v486
  %608 = vmatpush1.msra.mxu0 %v485
  %609 = vmatprep.subr.mxu0 %v496
  %610 = vmatpush1.msra.mxu0 %v493
  %611 = vmatprep.subr.mxu0 0.0
  %612 = vmatpush1.msra.mxu0 0.0
  %613 = vmatprep.subr.mxu0 0.0
  %614 = vmatpush1.msra.mxu0 0.0
  %615 = vmatprep.subr.mxu0 0.0
  %616 = vmatpush1.msra.mxu0 0.0
  %617 = vmatprep.subr.mxu0 0.0
  %618 = vmatpush1.msra.mxu0 0.0
  %619 = vmatprep.subr.mxu0 0.0
  %620 = vmatpush1.msra.mxu0 0.0
  %621 = vmatprep.subr.mxu0 0.0
  %622 = vmatpush1.msra.mxu0 0.0
  %623 = vmatprep.subr.mxu0 0.0
  %624 = vmatpush1.msra.mxu0 0.0
  %625 = vmatprep.subr.mxu0 0.0
  %626 = vmatpush1.msra.mxu0 0.0
  %627 = vmatprep.subr.mxu0 0.0
  %628 = vmatpush1.msra.mxu0 0.0
  %629 = vmatprep.subr.mxu0 0.0
  %630 = vmatpush1.msra.mxu0 0.0
  %631 = vmatprep.subr.mxu0 0.0
  %632 = vmatpush1.msra.mxu0 0.0
  %633 = vmatprep.subr.mxu0 0.0
  %634 = vmatpush1.msra.mxu0 0.0
  %635 = vmatprep.subr.mxu0 0.0
  %636 = vmatpush1.msra.mxu0 0.0
  %637 = vmatprep.subr.mxu0 0.0
  %638 = vmatpush1.msra.mxu0 0.0
  %639 = vmatprep.mubr.f32.mxu0 %v573
  %640 = vmatmul.mubr.f32.gmra.mrb[0].mxu0 %v570
  %v641 = vpop.f32.mrb[0].mxu0
  %v642 = vadd.f32 0.0, %v641
  %v643 = vpop.f32.mrb[0].mxu0
  %v644 = vadd.f32 0.0, %v643
  %645 = vdwg.mxu0
  %v646 = vmax.f32 %v565, %v642
  %v647 = vmax.f32 %v567, %v644
  %v648 = vmax.f32 %v646, %v647
  %v649 = vadd.f32 %v648, %v243
  %v650 = vmax.f32 %v649, 0.0
  %651 = vst [vmem:[#allocation2 + $0x10] sm:$0xff] %v650
  %s652 = scalar_lea.vmem %s0, 48
  %v653 = vld [vmem:[%s652] sm:$0xff]
  %v654 = vld [vmem:[%s652 + $0x8] sm:$0xff]
  %v655 = vld [vmem:[%s1] sm:$0xff]
  %v656 = vld [vmem:[%s1 + $0x8] sm:$0xff]
  %v657 = vld [vmem:[%s1 + $0x10] sm:$0xff]
  %v658 = vld [vmem:[%s1 + $0x18] sm:$0xff]
  %v659 = vld [vmem:[%s1 + $0x20] sm:$0xff]
  %v660 = vld [vmem:[%s1 + $0x28] sm:$0xff]
  %v661 = vld [vmem:[%s1 + $0x30] sm:$0xff]
  %v662 = vld [vmem:[%s1 + $0x38] sm:$0xff]
  %v663 = vld [vmem:[%s1 + $0x40] sm:$0xff]
  %v664 = vld [vmem:[%s1 + $0x48] sm:$0xff]
  %v665 = vld [vmem:[%s1 + $0x50] sm:$0xff]
  %v666 = vld [vmem:[%s1 + $0x58] sm:$0xff]
  %v667 = vld [vmem:[%s1 + $0x60] sm:$0xff]
  %v668 = vld [vmem:[%s1 + $0x68] sm:$0xff]
  %v669 = vld [vmem:[%s1 + $0x70] sm:$0xff]
  %v670 = vld [vmem:[%s1 + $0x78] sm:$0xff]
  %v671 = vld [vmem:[%s1 + $0x80] sm:$0xff]
  %v672 = vld [vmem:[%s1 + $0x88] sm:$0xff]
  %v673 = vld [vmem:[%s1 + $0x90] sm:$0xff]
  %v674 = vld [vmem:[%s1 + $0x98] sm:$0xff]
  %v675 = vld [vmem:[%s1 + $0xa0] sm:$0xff]
  %v676 = vld [vmem:[%s1 + $0xa8] sm:$0xff]
  %v677 = vld [vmem:[%s1 + $0xb0] sm:$0xff]
  %v678 = vld [vmem:[%s1 + $0xb8] sm:$0xff]
  %v679 = vld [vmem:[%s1 + $0xc0] sm:$0xff]
  %v680 = vld [vmem:[%s1 + $0xc8] sm:$0xff]
  %v681 = vld [vmem:[%s1 + $0xd0] sm:$0xff]
  %v682 = vld [vmem:[%s1 + $0xd8] sm:$0xff]
  %v683 = vld [vmem:[%s1 + $0xe0] sm:$0xff]
  %v684 = vld [vmem:[%s1 + $0xe8] sm:$0xff]
  %v685 = vld [vmem:[%s1 + $0xf0] sm:$0xff]
  %v686 = vld [vmem:[%s1 + $0xf8] sm:$0xff]
  %v687 = vld [vmem:[%s1 + $0x100] sm:$0xff]
  %v688 = vld [vmem:[%s1 + $0x108] sm:$0xff]
  %v689 = vld [vmem:[%s1 + $0x110] sm:$0xf]
  %v690 = vld [vmem:[%s1 + $0x118] sm:$0xf]
  %v692 = vsel %vm77, %v654, 0
  %v695 = vsel %vm81, %v689, 0
  %v698 = vsel %vm81, %v690, 0
  %700 = vmatprep.subr.mxu0 %v656
  %701 = vmatpush1.msra.mxu0 %v655
  %702 = vmatprep.subr.mxu0 %v658
  %703 = vmatpush1.msra.mxu0 %v657
  %704 = vmatprep.subr.mxu0 %v660
  %705 = vmatpush1.msra.mxu0 %v659
  %706 = vmatprep.subr.mxu0 %v662
  %707 = vmatpush1.msra.mxu0 %v661
  %708 = vmatprep.subr.mxu0 %v664
  %709 = vmatpush1.msra.mxu0 %v663
  %710 = vmatprep.subr.mxu0 %v666
  %711 = vmatpush1.msra.mxu0 %v665
  %712 = vmatprep.subr.mxu0 %v668
  %713 = vmatpush1.msra.mxu0 %v667
  %714 = vmatprep.subr.mxu0 %v670
  %715 = vmatpush1.msra.mxu0 %v669
  %716 = vmatprep.subr.mxu0 %v672
  %717 = vmatpush1.msra.mxu0 %v671
  %718 = vmatprep.subr.mxu0 %v674
  %719 = vmatpush1.msra.mxu0 %v673
  %720 = vmatprep.subr.mxu0 %v676
  %721 = vmatpush1.msra.mxu0 %v675
  %722 = vmatprep.subr.mxu0 %v678
  %723 = vmatpush1.msra.mxu0 %v677
  %724 = vmatprep.subr.mxu0 %v680
  %725 = vmatpush1.msra.mxu0 %v679
  %726 = vmatprep.subr.mxu0 %v682
  %727 = vmatpush1.msra.mxu0 %v681
  %728 = vmatprep.subr.mxu0 %v684
  %729 = vmatpush1.msra.mxu0 %v683
  %730 = vmatprep.subr.mxu0 %v686
  %731 = vmatpush1.msra.mxu0 %v685
  %732 = vmatprep.subr.mxu0 %v688
  %733 = vmatpush1.msra.mxu0 %v687
  %734 = vmatprep.subr.mxu0 %v698
  %735 = vmatpush1.msra.mxu0 %v695
  %736 = vmatprep.subr.mxu0 0.0
  %737 = vmatpush1.msra.mxu0 0.0
  %738 = vmatprep.subr.mxu0 0.0
  %739 = vmatpush1.msra.mxu0 0.0
  %740 = vmatprep.subr.mxu0 0.0
  %741 = vmatpush1.msra.mxu0 0.0
  %742 = vmatprep.subr.mxu0 0.0
  %743 = vmatpush1.msra.mxu0 0.0
  %744 = vmatprep.subr.mxu0 0.0
  %745 = vmatpush1.msra.mxu0 0.0
  %746 = vmatprep.subr.mxu0 0.0
  %747 = vmatpush1.msra.mxu0 0.0
  %748 = vmatprep.subr.mxu0 0.0
  %749 = vmatpush1.msra.mxu0 0.0
  %750 = vmatprep.subr.mxu0 0.0
  %751 = vmatpush1.msra.mxu0 0.0
  %752 = vmatprep.subr.mxu0 0.0
  %753 = vmatpush1.msra.mxu0 0.0
  %754 = vmatprep.subr.mxu0 0.0
  %755 = vmatpush1.msra.mxu0 0.0
  %756 = vmatprep.subr.mxu0 0.0
  %757 = vmatpush1.msra.mxu0 0.0
  %758 = vmatprep.subr.mxu0 0.0
  %759 = vmatpush1.msra.mxu0 0.0
  %760 = vmatprep.subr.mxu0 0.0
  %761 = vmatpush1.msra.mxu0 0.0
  %762 = vmatprep.subr.mxu0 0.0
  %763 = vmatpush1.msra.mxu0 0.0
  %764 = vmatprep.mubr.f32.mxu0 %v692
  %765 = vmatmul.mubr.f32.gmra.mrb[0].mxu0 %v653
  %v766 = vpop.f32.mrb[0].mxu0
  %v767 = vadd.f32 0.0, %v766
  %v768 = vpop.f32.mrb[0].mxu0
  %v769 = vadd.f32 0.0, %v768
  %770 = vdwg.mxu0
  %s771 = scalar_lea.vmem %s0, 240
  %v772 = vld [vmem:[%s771] sm:$0xff]
  %v773 = vld [vmem:[%s771 + $0x8] sm:$0xff]
  %v775 = vsel %vm77, %v773, 0
  %777 = vmatprep.subr.mxu0 %v656
  %778 = vmatpush1.msra.mxu0 %v655
  %779 = vmatprep.subr.mxu0 %v658
  %780 = vmatpush1.msra.mxu0 %v657
  %781 = vmatprep.subr.mxu0 %v660
  %782 = vmatpush1.msra.mxu0 %v659
  %783 = vmatprep.subr.mxu0 %v662
  %784 = vmatpush1.msra.mxu0 %v661
  %785 = vmatprep.subr.mxu0 %v664
  %786 = vmatpush1.msra.mxu0 %v663
  %787 = vmatprep.subr.mxu0 %v666
  %788 = vmatpush1.msra.mxu0 %v665
  %789 = vmatprep.subr.mxu0 %v668
  %790 = vmatpush1.msra.mxu0 %v667
  %791 = vmatprep.subr.mxu0 %v670
  %792 = vmatpush1.msra.mxu0 %v669
  %793 = vmatprep.subr.mxu0 %v672
  %794 = vmatpush1.msra.mxu0 %v671
  %795 = vmatprep.subr.mxu0 %v674
  %796 = vmatpush1.msra.mxu0 %v673
  %797 = vmatprep.subr.mxu0 %v676
  %798 = vmatpush1.msra.mxu0 %v675
  %799 = vmatprep.subr.mxu0 %v678
  %800 = vmatpush1.msra.mxu0 %v677
  %801 = vmatprep.subr.mxu0 %v680
  %802 = vmatpush1.msra.mxu0 %v679
  %803 = vmatprep.subr.mxu0 %v682
  %804 = vmatpush1.msra.mxu0 %v681
  %805 = vmatprep.subr.mxu0 %v684
  %806 = vmatpush1.msra.mxu0 %v683
  %807 = vmatprep.subr.mxu0 %v686
  %808 = vmatpush1.msra.mxu0 %v685
  %809 = vmatprep.subr.mxu0 %v688
  %810 = vmatpush1.msra.mxu0 %v687
  %811 = vmatprep.subr.mxu0 %v698
  %812 = vmatpush1.msra.mxu0 %v695
  %813 = vmatprep.subr.mxu0 0.0
  %814 = vmatpush1.msra.mxu0 0.0
  %815 = vmatprep.subr.mxu0 0.0
  %816 = vmatpush1.msra.mxu0 0.0
  %817 = vmatprep.subr.mxu0 0.0
  %818 = vmatpush1.msra.mxu0 0.0
  %819 = vmatprep.subr.mxu0 0.0
  %820 = vmatpush1.msra.mxu0 0.0
  %821 = vmatprep.subr.mxu0 0.0
  %822 = vmatpush1.msra.mxu0 0.0
  %823 = vmatprep.subr.mxu0 0.0
  %824 = vmatpush1.msra.mxu0 0.0
  %825 = vmatprep.subr.mxu0 0.0
  %826 = vmatpush1.msra.mxu0 0.0
  %827 = vmatprep.subr.mxu0 0.0
  %828 = vmatpush1.msra.mxu0 0.0
  %829 = vmatprep.subr.mxu0 0.0
  %830 = vmatpush1.msra.mxu0 0.0
  %831 = vmatprep.subr.mxu0 0.0
  %832 = vmatpush1.msra.mxu0 0.0
  %833 = vmatprep.subr.mxu0 0.0
  %834 = vmatpush1.msra.mxu0 0.0
  %835 = vmatprep.subr.mxu0 0.0
  %836 = vmatpush1.msra.mxu0 0.0
  %837 = vmatprep.subr.mxu0 0.0
  %838 = vmatpush1.msra.mxu0 0.0
  %839 = vmatprep.subr.mxu0 0.0
  %840 = vmatpush1.msra.mxu0 0.0
  %841 = vmatprep.mubr.f32.mxu0 %v775
  %842 = vmatmul.mubr.f32.gmra.mrb[0].mxu0 %v772
  %v843 = vpop.f32.mrb[0].mxu0
  %v844 = vadd.f32 0.0, %v843
  %v845 = vpop.f32.mrb[0].mxu0
  %v846 = vadd.f32 0.0, %v845
  %847 = vdwg.mxu0
  %v848 = vmax.f32 %v767, %v844
  %v849 = vmax.f32 %v769, %v846
  %v850 = vmax.f32 %v848, %v849
  %v851 = vadd.f32 %v850, %v243
  %v852 = vmax.f32 %v851, 0.0
  %853 = vst [vmem:[#allocation2 + $0x18] sm:$0xff] %v852
  %s854 = scalar_lea.vmem %s0, 64
  %v855 = vld [vmem:[%s854] sm:$0xff]
  %v856 = vld [vmem:[%s854 + $0x8] sm:$0xff]
  %v857 = vld [vmem:[%s1] sm:$0xff]
  %v858 = vld [vmem:[%s1 + $0x8] sm:$0xff]
  %v859 = vld [vmem:[%s1 + $0x10] sm:$0xff]
  %v860 = vld [vmem:[%s1 + $0x18] sm:$0xff]
  %v861 = vld [vmem:[%s1 + $0x20] sm:$0xff]
  %v862 = vld [vmem:[%s1 + $0x28] sm:$0xff]
  %v863 = vld [vmem:[%s1 + $0x30] sm:$0xff]
  %v864 = vld [vmem:[%s1 + $0x38] sm:$0xff]
  %v865 = vld [vmem:[%s1 + $0x40] sm:$0xff]
  %v866 = vld [vmem:[%s1 + $0x48] sm:$0xff]
  %v867 = vld [vmem:[%s1 + $0x50] sm:$0xff]
  %v868 = vld [vmem:[%s1 + $0x58] sm:$0xff]
  %v869 = vld [vmem:[%s1 + $0x60] sm:$0xff]
  %v870 = vld [vmem:[%s1 + $0x68] sm:$0xff]
  %v871 = vld [vmem:[%s1 + $0x70] sm:$0xff]
  %v872 = vld [vmem:[%s1 + $0x78] sm:$0xff]
  %v873 = vld [vmem:[%s1 + $0x80] sm:$0xff]
  %v874 = vld [vmem:[%s1 + $0x88] sm:$0xff]
  %v875 = vld [vmem:[%s1 + $0x90] sm:$0xff]
  %v876 = vld [vmem:[%s1 + $0x98] sm:$0xff]
  %v877 = vld [vmem:[%s1 + $0xa0] sm:$0xff]
  %v878 = vld [vmem:[%s1 + $0xa8] sm:$0xff]
  %v879 = vld [vmem:[%s1 + $0xb0] sm:$0xff]
  %v880 = vld [vmem:[%s1 + $0xb8] sm:$0xff]
  %v881 = vld [vmem:[%s1 + $0xc0] sm:$0xff]
  %v882 = vld [vmem:[%s1 + $0xc8] sm:$0xff]
  %v883 = vld [vmem:[%s1 + $0xd0] sm:$0xff]
  %v884 = vld [vmem:[%s1 + $0xd8] sm:$0xff]
  %v885 = vld [vmem:[%s1 + $0xe0] sm:$0xff]
  %v886 = vld [vmem:[%s1 + $0xe8] sm:$0xff]
  %v887 = vld [vmem:[%s1 + $0xf0] sm:$0xff]
  %v888 = vld [vmem:[%s1 + $0xf8] sm:$0xff]
  %v889 = vld [vmem:[%s1 + $0x100] sm:$0xff]
  %v890 = vld [vmem:[%s1 + $0x108] sm:$0xff]
  %v891 = vld [vmem:[%s1 + $0x110] sm:$0xf]
  %v892 = vld [vmem:[%s1 + $0x118] sm:$0xf]
  %v894 = vsel %vm77, %v856, 0
  %v897 = vsel %vm81, %v891, 0
  %v900 = vsel %vm81, %v892, 0
  %902 = vmatprep.subr.mxu0 %v858
  %903 = vmatpush1.msra.mxu0 %v857
  %904 = vmatprep.subr.mxu0 %v860
  %905 = vmatpush1.msra.mxu0 %v859
  %906 = vmatprep.subr.mxu0 %v862
  %907 = vmatpush1.msra.mxu0 %v861
  %908 = vmatprep.subr.mxu0 %v864
  %909 = vmatpush1.msra.mxu0 %v863
  %910 = vmatprep.subr.mxu0 %v866
  %911 = vmatpush1.msra.mxu0 %v865
  %912 = vmatprep.subr.mxu0 %v868
  %913 = vmatpush1.msra.mxu0 %v867
  %914 = vmatprep.subr.mxu0 %v870
  %915 = vmatpush1.msra.mxu0 %v869
  %916 = vmatprep.subr.mxu0 %v872
  %917 = vmatpush1.msra.mxu0 %v871
  %918 = vmatprep.subr.mxu0 %v874
  %919 = vmatpush1.msra.mxu0 %v873
  %920 = vmatprep.subr.mxu0 %v876
  %921 = vmatpush1.msra.mxu0 %v875
  %922 = vmatprep.subr.mxu0 %v878
  %923 = vmatpush1.msra.mxu0 %v877
  %924 = vmatprep.subr.mxu0 %v880
  %925 = vmatpush1.msra.mxu0 %v879
  %926 = vmatprep.subr.mxu0 %v882
  %927 = vmatpush1.msra.mxu0 %v881
  %928 = vmatprep.subr.mxu0 %v884
  %929 = vmatpush1.msra.mxu0 %v883
  %930 = vmatprep.subr.mxu0 %v886
  %931 = vmatpush1.msra.mxu0 %v885
  %932 = vmatprep.subr.mxu0 %v888
  %933 = vmatpush1.msra.mxu0 %v887
  %934 = vmatprep.subr.mxu0 %v890
  %935 = vmatpush1.msra.mxu0 %v889
  %936 = vmatprep.subr.mxu0 %v900
  %937 = vmatpush1.msra.mxu0 %v897
  %938 = vmatprep.subr.mxu0 0.0
  %939 = vmatpush1.msra.mxu0 0.0
  %940 = vmatprep.subr.mxu0 0.0
  %941 = vmatpush1.msra.mxu0 0.0
  %942 = vmatprep.subr.mxu0 0.0
  %943 = vmatpush1.msra.mxu0 0.0
  %944 = vmatprep.subr.mxu0 0.0
  %945 = vmatpush1.msra.mxu0 0.0
  %946 = vmatprep.subr.mxu0 0.0
  %947 = vmatpush1.msra.mxu0 0.0
  %948 = vmatprep.subr.mxu0 0.0
  %949 = vmatpush1.msra.mxu0 0.0
  %950 = vmatprep.subr.mxu0 0.0
  %951 = vmatpush1.msra.mxu0 0.0
  %952 = vmatprep.subr.mxu0 0.0
  %953 = vmatpush1.msra.mxu0 0.0
  %954 = vmatprep.subr.mxu0 0.0
  %955 = vmatpush1.msra.mxu0 0.0
  %956 = vmatprep.subr.mxu0 0.0
  %957 = vmatpush1.msra.mxu0 0.0
  %958 = vmatprep.subr.mxu0 0.0
  %959 = vmatpush1.msra.mxu0 0.0
  %960 = vmatprep.subr.mxu0 0.0
  %961 = vmatpush1.msra.mxu0 0.0
  %962 = vmatprep.subr.mxu0 0.0
  %963 = vmatpush1.msra.mxu0 0.0
  %964 = vmatprep.subr.mxu0 0.0
  %965 = vmatpush1.msra.mxu0 0.0
  %966 = vmatprep.mubr.f32.mxu0 %v894
  %967 = vmatmul.mubr.f32.gmra.mrb[0].mxu0 %v855
  %v968 = vpop.f32.mrb[0].mxu0
  %v969 = vadd.f32 0.0, %v968
  %v970 = vpop.f32.mrb[0].mxu0
  %v971 = vadd.f32 0.0, %v970
  %972 = vdwg.mxu0
  %s973 = scalar_lea.vmem %s0, 256
  %v974 = vld [vmem:[%s973] sm:$0xff]
  %v975 = vld [vmem:[%s973 + $0x8] sm:$0xff]
  %v977 = vsel %vm77, %v975, 0
  %979 = vmatprep.subr.mxu0 %v858
  %980 = vmatpush1.msra.mxu0 %v857
  %981 = vmatprep.subr.mxu0 %v860
  %982 = vmatpush1.msra.mxu0 %v859
  %983 = vmatprep.subr.mxu0 %v862
  %984 = vmatpush1.msra.mxu0 %v861
  %985 = vmatprep.subr.mxu0 %v864
  %986 = vmatpush1.msra.mxu0 %v863
  %987 = vmatprep.subr.mxu0 %v866
  %988 = vmatpush1.msra.mxu0 %v865
  %989 = vmatprep.subr.mxu0 %v868
  %990 = vmatpush1.msra.mxu0 %v867
  %991 = vmatprep.subr.mxu0 %v870
  %992 = vmatpush1.msra.mxu0 %v869
  %993 = vmatprep.subr.mxu0 %v872
  %994 = vmatpush1.msra.mxu0 %v871
  %995 = vmatprep.subr.mxu0 %v874
  %996 = vmatpush1.msra.mxu0 %v873
  %997 = vmatprep.subr.mxu0 %v876
  %998 = vmatpush1.msra.mxu0 %v875
  %999 = vmatprep.subr.mxu0 %v878
  %1000 = vmatpush1.msra.mxu0 %v877
  %1001 = vmatprep.subr.mxu0 %v880
  %1002 = vmatpush1.msra.mxu0 %v879
  %1003 = vmatprep.subr.mxu0 %v882
  %1004 = vmatpush1.msra.mxu0 %v881
  %1005 = vmatprep.subr.mxu0 %v884
  %1006 = vmatpush1.msra.mxu0 %v883
  %1007 = vmatprep.subr.mxu0 %v886
  %1008 = vmatpush1.msra.mxu0 %v885
  %1009 = vmatprep.subr.mxu0 %v888
  %1010 = vmatpush1.msra.mxu0 %v887
  %1011 = vmatprep.subr.mxu0 %v890
  %1012 = vmatpush1.msra.mxu0 %v889
  %1013 = vmatprep.subr.mxu0 %v900
  %1014 = vmatpush1.msra.mxu0 %v897
  %1015 = vmatprep.subr.mxu0 0.0
  %1016 = vmatpush1.msra.mxu0 0.0
  %1017 = vmatprep.subr.mxu0 0.0
  %1018 = vmatpush1.msra.mxu0 0.0
  %1019 = vmatprep.subr.mxu0 0.0
  %1020 = vmatpush1.msra.mxu0 0.0
  %1021 = vmatprep.subr.mxu0 0.0
  %1022 = vmatpush1.msra.mxu0 0.0
  %1023 = vmatprep.subr.mxu0 0.0
  %1024 = vmatpush1.msra.mxu0 0.0
  %1025 = vmatprep.subr.mxu0 0.0
  %1026 = vmatpush1.msra.mxu0 0.0
  %1027 = vmatprep.subr.mxu0 0.0
  %1028 = vmatpush1.msra.mxu0 0.0
  %1029 = vmatprep.subr.mxu0 0.0
  %1030 = vmatpush1.msra.mxu0 0.0
  %1031 = vmatprep.subr.mxu0 0.0
  %1032 = vmatpush1.msra.mxu0 0.0
  %1033 = vmatprep.subr.mxu0 0.0
  %1034 = vmatpush1.msra.mxu0 0.0
  %1035 = vmatprep.subr.mxu0 0.0
  %1036 = vmatpush1.msra.mxu0 0.0
  %1037 = vmatprep.subr.mxu0 0.0
  %1038 = vmatpush1.msra.mxu0 0.0
  %1039 = vmatprep.subr.mxu0 0.0
  %1040 = vmatpush1.msra.mxu0 0.0
  %1041 = vmatprep.subr.mxu0 0.0
  %1042 = vmatpush1.msra.mxu0 0.0
  %1043 = vmatprep.mubr.f32.mxu0 %v977
  %1044 = vmatmul.mubr.f32.gmra.mrb[0].mxu0 %v974
  %v1045 = vpop.f32.mrb[0].mxu0
  %v1046 = vadd.f32 0.0, %v1045
  %v1047 = vpop.f32.mrb[0].mxu0
  %v1048 = vadd.f32 0.0, %v1047
  %1049 = vdwg.mxu0
  %v1050 = vmax.f32 %v969, %v1046
  %v1051 = vmax.f32 %v971, %v1048
  %v1052 = vmax.f32 %v1050, %v1051
  %v1053 = vadd.f32 %v1052, %v243
  %v1054 = vmax.f32 %v1053, 0.0
  %1055 = vst [vmem:[#allocation2 + $0x20] sm:$0xff] %v1054
  %s1056 = scalar_lea.vmem %s0, 80
  %v1057 = vld [vmem:[%s1056] sm:$0xff]
  %v1058 = vld [vmem:[%s1056 + $0x8] sm:$0xff]
  %v1059 = vld [vmem:[%s1] sm:$0xff]
  %v1060 = vld [vmem:[%s1 + $0x8] sm:$0xff]
  %v1061 = vld [vmem:[%s1 + $0x10] sm:$0xff]
  %v1062 = vld [vmem:[%s1 + $0x18] sm:$0xff]
  %v1063 = vld [vmem:[%s1 + $0x20] sm:$0xff]
  %v1064 = vld [vmem:[%s1 + $0x28] sm:$0xff]
  %v1065 = vld [vmem:[%s1 + $0x30] sm:$0xff]
  %v1066 = vld [vmem:[%s1 + $0x38] sm:$0xff]
  %v1067 = vld [vmem:[%s1 + $0x40] sm:$0xff]
  %v1068 = vld [vmem:[%s1 + $0x48] sm:$0xff]
  %v1069 = vld [vmem:[%s1 + $0x50] sm:$0xff]
  %v1070 = vld [vmem:[%s1 + $0x58] sm:$0xff]
  %v1071 = vld [vmem:[%s1 + $0x60] sm:$0xff]
  %v1072 = vld [vmem:[%s1 + $0x68] sm:$0xff]
  %v1073 = vld [vmem:[%s1 + $0x70] sm:$0xff]
  %v1074 = vld [vmem:[%s1 + $0x78] sm:$0xff]
  %v1075 = vld [vmem:[%s1 + $0x80] sm:$0xff]
  %v1076 = vld [vmem:[%s1 + $0x88] sm:$0xff]
  %v1077 = vld [vmem:[%s1 + $0x90] sm:$0xff]
  %v1078 = vld [vmem:[%s1 + $0x98] sm:$0xff]
  %v1079 = vld [vmem:[%s1 + $0xa0] sm:$0xff]
  %v1080 = vld [vmem:[%s1 + $0xa8] sm:$0xff]
  %v1081 = vld [vmem:[%s1 + $0xb0] sm:$0xff]
  %v1082 = vld [vmem:[%s1 + $0xb8] sm:$0xff]
  %v1083 = vld [vmem:[%s1 + $0xc0] sm:$0xff]
  %v1084 = vld [vmem:[%s1 + $0xc8] sm:$0xff]
  %v1085 = vld [vmem:[%s1 + $0xd0] sm:$0xff]
  %v1086 = vld [vmem:[%s1 + $0xd8] sm:$0xff]
  %v1087 = vld [vmem:[%s1 + $0xe0] sm:$0xff]
  %v1088 = vld [vmem:[%s1 + $0xe8] sm:$0xff]
  %v1089 = vld [vmem:[%s1 + $0xf0] sm:$0xff]
  %v1090 = vld [vmem:[%s1 + $0xf8] sm:$0xff]
  %v1091 = vld [vmem:[%s1 + $0x100] sm:$0xff]
  %v1092 = vld [vmem:[%s1 + $0x108] sm:$0xff]
  %v1093 = vld [vmem:[%s1 + $0x110] sm:$0xf]
  %v1094 = vld [vmem:[%s1 + $0x118] sm:$0xf]
  %v1096 = vsel %vm77, %v1058, 0
  %v1099 = vsel %vm81, %v1093, 0
  %v1102 = vsel %vm81, %v1094, 0
  %1104 = vmatprep.subr.mxu0 %v1060
  %1105 = vmatpush1.msra.mxu0 %v1059
  %1106 = vmatprep.subr.mxu0 %v1062
  %1107 = vmatpush1.msra.mxu0 %v1061
  %1108 = vmatprep.subr.mxu0 %v1064
  %1109 = vmatpush1.msra.mxu0 %v1063
  %1110 = vmatprep.subr.mxu0 %v1066
  %1111 = vmatpush1.msra.mxu0 %v1065
  %1112 = vmatprep.subr.mxu0 %v1068
  %1113 = vmatpush1.msra.mxu0 %v1067
  %1114 = vmatprep.subr.mxu0 %v1070
  %1115 = vmatpush1.msra.mxu0 %v1069
  %1116 = vmatprep.subr.mxu0 %v1072
  %1117 = vmatpush1.msra.mxu0 %v1071
  %1118 = vmatprep.subr.mxu0 %v1074
  %1119 = vmatpush1.msra.mxu0 %v1073
  %1120 = vmatprep.subr.mxu0 %v1076
  %1121 = vmatpush1.msra.mxu0 %v1075
  %1122 = vmatprep.subr.mxu0 %v1078
  %1123 = vmatpush1.msra.mxu0 %v1077
  %1124 = vmatprep.subr.mxu0 %v1080
  %1125 = vmatpush1.msra.mxu0 %v1079
  %1126 = vmatprep.subr.mxu0 %v1082
  %1127 = vmatpush1.msra.mxu0 %v1081
  %1128 = vmatprep.subr.mxu0 %v1084
  %1129 = vmatpush1.msra.mxu0 %v1083
  %1130 = vmatprep.subr.mxu0 %v1086
  %1131 = vmatpush1.msra.mxu0 %v1085
  %1132 = vmatprep.subr.mxu0 %v1088
  %1133 = vmatpush1.msra.mxu0 %v1087
  %1134 = vmatprep.subr.mxu0 %v1090
  %1135 = vmatpush1.msra.mxu0 %v1089
  %1136 = vmatprep.subr.mxu0 %v1092
  %1137 = vmatpush1.msra.mxu0 %v1091
  %1138 = vmatprep.subr.mxu0 %v1102
  %1139 = vmatpush1.msra.mxu0 %v1099
  %1140 = vmatprep.subr.mxu0 0.0
  %1141 = vmatpush1.msra.mxu0 0.0
  %1142 = vmatprep.subr.mxu0 0.0
  %1143 = vmatpush1.msra.mxu0 0.0
  %1144 = vmatprep.subr.mxu0 0.0
  %1145 = vmatpush1.msra.mxu0 0.0
  %1146 = vmatprep.subr.mxu0 0.0
  %1147 = vmatpush1.msra.mxu0 0.0
  %1148 = vmatprep.subr.mxu0 0.0
  %1149 = vmatpush1.msra.mxu0 0.0
  %1150 = vmatprep.subr.mxu0 0.0
  %1151 = vmatpush1.msra.mxu0 0.0
  %1152 = vmatprep.subr.mxu0 0.0
  %1153 = vmatpush1.msra.mxu0 0.0
  %1154 = vmatprep.subr.mxu0 0.0
  %1155 = vmatpush1.msra.mxu0 0.0
  %1156 = vmatprep.subr.mxu0 0.0
  %1157 = vmatpush1.msra.mxu0 0.0
  %1158 = vmatprep.subr.mxu0 0.0
  %1159 = vmatpush1.msra.mxu0 0.0
  %1160 = vmatprep.subr.mxu0 0.0
  %1161 = vmatpush1.msra.mxu0 0.0
  %1162 = vmatprep.subr.mxu0 0.0
  %1163 = vmatpush1.msra.mxu0 0.0
  %1164 = vmatprep.subr.mxu0 0.0
  %1165 = vmatpush1.msra.mxu0 0.0
  %1166 = vmatprep.subr.mxu0 0.0
  %1167 = vmatpush1.msra.mxu0 0.0
  %1168 = vmatprep.mubr.f32.mxu0 %v1096
  %1169 = vmatmul.mubr.f32.gmra.mrb[0].mxu0 %v1057
  %v1170 = vpop.f32.mrb[0].mxu0
  %v1171 = vadd.f32 0.0, %v1170
  %v1172 = vpop.f32.mrb[0].mxu0
  %v1173 = vadd.f32 0.0, %v1172
  %1174 = vdwg.mxu0
  %s1175 = scalar_lea.vmem %s0, 272
  %v1176 = vld [vmem:[%s1175] sm:$0xff]
  %v1177 = vld [vmem:[%s1175 + $0x8] sm:$0xff]
  %v1179 = vsel %vm77, %v1177, 0
  %1181 = vmatprep.subr.mxu0 %v1060
  %1182 = vmatpush1.msra.mxu0 %v1059
  %1183 = vmatprep.subr.mxu0 %v1062
  %1184 = vmatpush1.msra.mxu0 %v1061
  %1185 = vmatprep.subr.mxu0 %v1064
  %1186 = vmatpush1.msra.mxu0 %v1063
  %1187 = vmatprep.subr.mxu0 %v1066
  %1188 = vmatpush1.msra.mxu0 %v1065
  %1189 = vmatprep.subr.mxu0 %v1068
  %1190 = vmatpush1.msra.mxu0 %v1067
  %1191 = vmatprep.subr.mxu0 %v1070
  %1192 = vmatpush1.msra.mxu0 %v1069
  %1193 = vmatprep.subr.mxu0 %v1072
  %1194 = vmatpush1.msra.mxu0 %v1071
  %1195 = vmatprep.subr.mxu0 %v1074
  %1196 = vmatpush1.msra.mxu0 %v1073
  %1197 = vmatprep.subr.mxu0 %v1076
  %1198 = vmatpush1.msra.mxu0 %v1075
  %1199 = vmatprep.subr.mxu0 %v1078
  %1200 = vmatpush1.msra.mxu0 %v1077
  %1201 = vmatprep.subr.mxu0 %v1080
  %1202 = vmatpush1.msra.mxu0 %v1079
  %1203 = vmatprep.subr.mxu0 %v1082
  %1204 = vmatpush1.msra.mxu0 %v1081
  %1205 = vmatprep.subr.mxu0 %v1084
  %1206 = vmatpush1.msra.mxu0 %v1083
  %1207 = vmatprep.subr.mxu0 %v1086
  %1208 = vmatpush1.msra.mxu0 %v1085
  %1209 = vmatprep.subr.mxu0 %v1088
  %1210 = vmatpush1.msra.mxu0 %v1087
  %1211 = vmatprep.subr.mxu0 %v1090
  %1212 = vmatpush1.msra.mxu0 %v1089
  %1213 = vmatprep.subr.mxu0 %v1092
  %1214 = vmatpush1.msra.mxu0 %v1091
  %1215 = vmatprep.subr.mxu0 %v1102
  %1216 = vmatpush1.msra.mxu0 %v1099
  %1217 = vmatprep.subr.mxu0 0.0
  %1218 = vmatpush1.msra.mxu0 0.0
  %1219 = vmatprep.subr.mxu0 0.0
  %1220 = vmatpush1.msra.mxu0 0.0
  %1221 = vmatprep.subr.mxu0 0.0
  %1222 = vmatpush1.msra.mxu0 0.0
  %1223 = vmatprep.subr.mxu0 0.0
  %1224 = vmatpush1.msra.mxu0 0.0
  %1225 = vmatprep.subr.mxu0 0.0
  %1226 = vmatpush1.msra.mxu0 0.0
  %1227 = vmatprep.subr.mxu0 0.0
  %1228 = vmatpush1.msra.mxu0 0.0
  %1229 = vmatprep.subr.mxu0 0.0
  %1230 = vmatpush1.msra.mxu0 0.0
  %1231 = vmatprep.subr.mxu0 0.0
  %1232 = vmatpush1.msra.mxu0 0.0
  %1233 = vmatprep.subr.mxu0 0.0
  %1234 = vmatpush1.msra.mxu0 0.0
  %1235 = vmatprep.subr.mxu0 0.0
  %1236 = vmatpush1.msra.mxu0 0.0
  %1237 = vmatprep.subr.mxu0 0.0
  %1238 = vmatpush1.msra.mxu0 0.0
  %1239 = vmatprep.subr.mxu0 0.0
  %1240 = vmatpush1.msra.mxu0 0.0
  %1241 = vmatprep.subr.mxu0 0.0
  %1242 = vmatpush1.msra.mxu0 0.0
  %1243 = vmatprep.subr.mxu0 0.0
  %1244 = vmatpush1.msra.mxu0 0.0
  %1245 = vmatprep.mubr.f32.mxu0 %v1179
  %1246 = vmatmul.mubr.f32.gmra.mrb[0].mxu0 %v1176
  %v1247 = vpop.f32.mrb[0].mxu0
  %v1248 = vadd.f32 0.0, %v1247
  %v1249 = vpop.f32.mrb[0].mxu0
  %v1250 = vadd.f32 0.0, %v1249
  %1251 = vdwg.mxu0
  %v1252 = vmax.f32 %v1171, %v1248
  %v1253 = vmax.f32 %v1173, %v1250
  %v1254 = vmax.f32 %v1252, %v1253
  %v1255 = vadd.f32 %v1254, %v243
  %v1256 = vmax.f32 %v1255, 0.0
  %1257 = vst [vmem:[#allocation2 + $0x28] sm:$0xff] %v1256
  %s1258 = scalar_lea.vmem %s0, 96
  %v1259 = vld [vmem:[%s1258] sm:$0xff]
  %v1260 = vld [vmem:[%s1258 + $0x8] sm:$0xff]
  %v1261 = vld [vmem:[%s1] sm:$0xff]
  %v1262 = vld [vmem:[%s1 + $0x8] sm:$0xff]
  %v1263 = vld [vmem:[%s1 + $0x10] sm:$0xff]
  %v1264 = vld [vmem:[%s1 + $0x18] sm:$0xff]
  %v1265 = vld [vmem:[%s1 + $0x20] sm:$0xff]
  %v1266 = vld [vmem:[%s1 + $0x28] sm:$0xff]
  %v1267 = vld [vmem:[%s1 + $0x30] sm:$0xff]
  %v1268 = vld [vmem:[%s1 + $0x38] sm:$0xff]
  %v1269 = vld [vmem:[%s1 + $0x40] sm:$0xff]
  %v1270 = vld [vmem:[%s1 + $0x48] sm:$0xff]
  %v1271 = vld [vmem:[%s1 + $0x50] sm:$0xff]
  %v1272 = vld [vmem:[%s1 + $0x58] sm:$0xff]
  %v1273 = vld [vmem:[%s1 + $0x60] sm:$0xff]
  %v1274 = vld [vmem:[%s1 + $0x68] sm:$0xff]
  %v1275 = vld [vmem:[%s1 + $0x70] sm:$0xff]
  %v1276 = vld [vmem:[%s1 + $0x78] sm:$0xff]
  %v1277 = vld [vmem:[%s1 + $0x80] sm:$0xff]
  %v1278 = vld [vmem:[%s1 + $0x88] sm:$0xff]
  %v1279 = vld [vmem:[%s1 + $0x90] sm:$0xff]
  %v1280 = vld [vmem:[%s1 + $0x98] sm:$0xff]
  %v1281 = vld [vmem:[%s1 + $0xa0] sm:$0xff]
  %v1282 = vld [vmem:[%s1 + $0xa8] sm:$0xff]
  %v1283 = vld [vmem:[%s1 + $0xb0] sm:$0xff]
  %v1284 = vld [vmem:[%s1 + $0xb8] sm:$0xff]
  %v1285 = vld [vmem:[%s1 + $0xc0] sm:$0xff]
  %v1286 = vld [vmem:[%s1 + $0xc8] sm:$0xff]
  %v1287 = vld [vmem:[%s1 + $0xd0] sm:$0xff]
  %v1288 = vld [vmem:[%s1 + $0xd8] sm:$0xff]
  %v1289 = vld [vmem:[%s1 + $0xe0] sm:$0xff]
  %v1290 = vld [vmem:[%s1 + $0xe8] sm:$0xff]
  %v1291 = vld [vmem:[%s1 + $0xf0] sm:$0xff]
  %v1292 = vld [vmem:[%s1 + $0xf8] sm:$0xff]
  %v1293 = vld [vmem:[%s1 + $0x100] sm:$0xff]
  %v1294 = vld [vmem:[%s1 + $0x108] sm:$0xff]
  %v1295 = vld [vmem:[%s1 + $0x110] sm:$0xf]
  %v1296 = vld [vmem:[%s1 + $0x118] sm:$0xf]
  %v1298 = vsel %vm77, %v1260, 0
  %v1301 = vsel %vm81, %v1295, 0
  %v1304 = vsel %vm81, %v1296, 0
  %1306 = vmatprep.subr.mxu0 %v1262
  %1307 = vmatpush1.msra.mxu0 %v1261
  %1308 = vmatprep.subr.mxu0 %v1264
  %1309 = vmatpush1.msra.mxu0 %v1263
  %1310 = vmatprep.subr.mxu0 %v1266
  %1311 = vmatpush1.msra.mxu0 %v1265
  %1312 = vmatprep.subr.mxu0 %v1268
  %1313 = vmatpush1.msra.mxu0 %v1267
  %1314 = vmatprep.subr.mxu0 %v1270
  %1315 = vmatpush1.msra.mxu0 %v1269
  %1316 = vmatprep.subr.mxu0 %v1272
  %1317 = vmatpush1.msra.mxu0 %v1271
  %1318 = vmatprep.subr.mxu0 %v1274
  %1319 = vmatpush1.msra.mxu0 %v1273
  %1320 = vmatprep.subr.mxu0 %v1276
  %1321 = vmatpush1.msra.mxu0 %v1275
  %1322 = vmatprep.subr.mxu0 %v1278
  %1323 = vmatpush1.msra.mxu0 %v1277
  %1324 = vmatprep.subr.mxu0 %v1280
  %1325 = vmatpush1.msra.mxu0 %v1279
  %1326 = vmatprep.subr.mxu0 %v1282
  %1327 = vmatpush1.msra.mxu0 %v1281
  %1328 = vmatprep.subr.mxu0 %v1284
  %1329 = vmatpush1.msra.mxu0 %v1283
  %1330 = vmatprep.subr.mxu0 %v1286
  %1331 = vmatpush1.msra.mxu0 %v1285
  %1332 = vmatprep.subr.mxu0 %v1288
  %1333 = vmatpush1.msra.mxu0 %v1287
  %1334 = vmatprep.subr.mxu0 %v1290
  %1335 = vmatpush1.msra.mxu0 %v1289
  %1336 = vmatprep.subr.mxu0 %v1292
  %1337 = vmatpush1.msra.mxu0 %v1291
  %1338 = vmatprep.subr.mxu0 %v1294
  %1339 = vmatpush1.msra.mxu0 %v1293
  %1340 = vmatprep.subr.mxu0 %v1304
  %1341 = vmatpush1.msra.mxu0 %v1301
  %1342 = vmatprep.subr.mxu0 0.0
  %1343 = vmatpush1.msra.mxu0 0.0
  %1344 = vmatprep.subr.mxu0 0.0
  %1345 = vmatpush1.msra.mxu0 0.0
  %1346 = vmatprep.subr.mxu0 0.0
  %1347 = vmatpush1.msra.mxu0 0.0
  %1348 = vmatprep.subr.mxu0 0.0
  %1349 = vmatpush1.msra.mxu0 0.0
  %1350 = vmatprep.subr.mxu0 0.0
  %1351 = vmatpush1.msra.mxu0 0.0
  %1352 = vmatprep.subr.mxu0 0.0
  %1353 = vmatpush1.msra.mxu0 0.0
  %1354 = vmatprep.subr.mxu0 0.0
  %1355 = vmatpush1.msra.mxu0 0.0
  %1356 = vmatprep.subr.mxu0 0.0
  %1357 = vmatpush1.msra.mxu0 0.0
  %1358 = vmatprep.subr.mxu0 0.0
  %1359 = vmatpush1.msra.mxu0 0.0
  %1360 = vmatprep.subr.mxu0 0.0
  %1361 = vmatpush1.msra.mxu0 0.0
  %1362 = vmatprep.subr.mxu0 0.0
  %1363 = vmatpush1.msra.mxu0 0.0
  %1364 = vmatprep.subr.mxu0 0.0
  %1365 = vmatpush1.msra.mxu0 0.0
  %1366 = vmatprep.subr.mxu0 0.0
  %1367 = vmatpush1.msra.mxu0 0.0
  %1368 = vmatprep.subr.mxu0 0.0
  %1369 = vmatpush1.msra.mxu0 0.0
  %1370 = vmatprep.mubr.f32.mxu0 %v1298
  %1371 = vmatmul.mubr.f32.gmra.mrb[0].mxu0 %v1259
  %v1372 = vpop.f32.mrb[0].mxu0
  %v1373 = vadd.f32 0.0, %v1372
  %v1374 = vpop.f32.mrb[0].mxu0
  %v1375 = vadd.f32 0.0, %v1374
  %1376 = vdwg.mxu0
  %s1377 = scalar_lea.vmem %s0, 288
  %v1378 = vld [vmem:[%s1377] sm:$0xff]
  %v1379 = vld [vmem:[%s1377 + $0x8] sm:$0xff]
  %v1381 = vsel %vm77, %v1379, 0
  %1383 = vmatprep.subr.mxu0 %v1262
  %1384 = vmatpush1.msra.mxu0 %v1261
  %1385 = vmatprep.subr.mxu0 %v1264
  %1386 = vmatpush1.msra.mxu0 %v1263
  %1387 = vmatprep.subr.mxu0 %v1266
  %1388 = vmatpush1.msra.mxu0 %v1265
  %1389 = vmatprep.subr.mxu0 %v1268
  %1390 = vmatpush1.msra.mxu0 %v1267
  %1391 = vmatprep.subr.mxu0 %v1270
  %1392 = vmatpush1.msra.mxu0 %v1269
  %1393 = vmatprep.subr.mxu0 %v1272
  %1394 = vmatpush1.msra.mxu0 %v1271
  %1395 = vmatprep.subr.mxu0 %v1274
  %1396 = vmatpush1.msra.mxu0 %v1273
  %1397 = vmatprep.subr.mxu0 %v1276
  %1398 = vmatpush1.msra.mxu0 %v1275
  %1399 = vmatprep.subr.mxu0 %v1278
  %1400 = vmatpush1.msra.mxu0 %v1277
  %1401 = vmatprep.subr.mxu0 %v1280
  %1402 = vmatpush1.msra.mxu0 %v1279
  %1403 = vmatprep.subr.mxu0 %v1282
  %1404 = vmatpush1.msra.mxu0 %v1281
  %1405 = vmatprep.subr.mxu0 %v1284
  %1406 = vmatpush1.msra.mxu0 %v1283
  %1407 = vmatprep.subr.mxu0 %v1286
  %1408 = vmatpush1.msra.mxu0 %v1285
  %1409 = vmatprep.subr.mxu0 %v1288
  %1410 = vmatpush1.msra.mxu0 %v1287
  %1411 = vmatprep.subr.mxu0 %v1290
  %1412 = vmatpush1.msra.mxu0 %v1289
  %1413 = vmatprep.subr.mxu0 %v1292
  %1414 = vmatpush1.msra.mxu0 %v1291
  %1415 = vmatprep.subr.mxu0 %v1294
  %1416 = vmatpush1.msra.mxu0 %v1293
  %1417 = vmatprep.subr.mxu0 %v1304
  %1418 = vmatpush1.msra.mxu0 %v1301
  %1419 = vmatprep.subr.mxu0 0.0
  %1420 = vmatpush1.msra.mxu0 0.0
  %1421 = vmatprep.subr.mxu0 0.0
  %1422 = vmatpush1.msra.mxu0 0.0
  %1423 = vmatprep.subr.mxu0 0.0
  %1424 = vmatpush1.msra.mxu0 0.0
  %1425 = vmatprep.subr.mxu0 0.0
  %1426 = vmatpush1.msra.mxu0 0.0
  %1427 = vmatprep.subr.mxu0 0.0
  %1428 = vmatpush1.msra.mxu0 0.0
  %1429 = vmatprep.subr.mxu0 0.0
  %1430 = vmatpush1.msra.mxu0 0.0
  %1431 = vmatprep.subr.mxu0 0.0
  %1432 = vmatpush1.msra.mxu0 0.0
  %1433 = vmatprep.subr.mxu0 0.0
  %1434 = vmatpush1.msra.mxu0 0.0
  %1435 = vmatprep.subr.mxu0 0.0
  %1436 = vmatpush1.msra.mxu0 0.0
  %1437 = vmatprep.subr.mxu0 0.0
  %1438 = vmatpush1.msra.mxu0 0.0
  %1439 = vmatprep.subr.mxu0 0.0
  %1440 = vmatpush1.msra.mxu0 0.0
  %1441 = vmatprep.subr.mxu0 0.0
  %1442 = vmatpush1.msra.mxu0 0.0
  %1443 = vmatprep.subr.mxu0 0.0
  %1444 = vmatpush1.msra.mxu0 0.0
  %1445 = vmatprep.subr.mxu0 0.0
  %1446 = vmatpush1.msra.mxu0 0.0
  %1447 = vmatprep.mubr.f32.mxu0 %v1381
  %1448 = vmatmul.mubr.f32.gmra.mrb[0].mxu0 %v1378
  %v1449 = vpop.f32.mrb[0].mxu0
  %v1450 = vadd.f32 0.0, %v1449
  %v1451 = vpop.f32.mrb[0].mxu0
  %v1452 = vadd.f32 0.0, %v1451
  %1453 = vdwg.mxu0
  %v1454 = vmax.f32 %v1373, %v1450
  %v1455 = vmax.f32 %v1375, %v1452
  %v1456 = vmax.f32 %v1454, %v1455
  %v1457 = vadd.f32 %v1456, %v243
  %v1458 = vmax.f32 %v1457, 0.0
  %1459 = vst [vmem:[#allocation2 + $0x30] sm:$0xff] %v1458
  %s1460 = scalar_lea.vmem %s0, 112
  %v1461 = vld [vmem:[%s1460] sm:$0xff]
  %v1462 = vld [vmem:[%s1460 + $0x8] sm:$0xff]
  %v1463 = vld [vmem:[%s1] sm:$0xff]
  %v1464 = vld [vmem:[%s1 + $0x8] sm:$0xff]
  %v1465 = vld [vmem:[%s1 + $0x10] sm:$0xff]
  %v1466 = vld [vmem:[%s1 + $0x18] sm:$0xff]
  %v1467 = vld [vmem:[%s1 + $0x20] sm:$0xff]
  %v1468 = vld [vmem:[%s1 + $0x28] sm:$0xff]
  %v1469 = vld [vmem:[%s1 + $0x30] sm:$0xff]
  %v1470 = vld [vmem:[%s1 + $0x38] sm:$0xff]
  %v1471 = vld [vmem:[%s1 + $0x40] sm:$0xff]
  %v1472 = vld [vmem:[%s1 + $0x48] sm:$0xff]
  %v1473 = vld [vmem:[%s1 + $0x50] sm:$0xff]
  %v1474 = vld [vmem:[%s1 + $0x58] sm:$0xff]
  %v1475 = vld [vmem:[%s1 + $0x60] sm:$0xff]
  %v1476 = vld [vmem:[%s1 + $0x68] sm:$0xff]
  %v1477 = vld [vmem:[%s1 + $0x70] sm:$0xff]
  %v1478 = vld [vmem:[%s1 + $0x78] sm:$0xff]
  %v1479 = vld [vmem:[%s1 + $0x80] sm:$0xff]
  %v1480 = vld [vmem:[%s1 + $0x88] sm:$0xff]
  %v1481 = vld [vmem:[%s1 + $0x90] sm:$0xff]
  %v1482 = vld [vmem:[%s1 + $0x98] sm:$0xff]
  %v1483 = vld [vmem:[%s1 + $0xa0] sm:$0xff]
  %v1484 = vld [vmem:[%s1 + $0xa8] sm:$0xff]
  %v1485 = vld [vmem:[%s1 + $0xb0] sm:$0xff]
  %v1486 = vld [vmem:[%s1 + $0xb8] sm:$0xff]
  %v1487 = vld [vmem:[%s1 + $0xc0] sm:$0xff]
  %v1488 = vld [vmem:[%s1 + $0xc8] sm:$0xff]
  %v1489 = vld [vmem:[%s1 + $0xd0] sm:$0xff]
  %v1490 = vld [vmem:[%s1 + $0xd8] sm:$0xff]
  %v1491 = vld [vmem:[%s1 + $0xe0] sm:$0xff]
  %v1492 = vld [vmem:[%s1 + $0xe8] sm:$0xff]
  %v1493 = vld [vmem:[%s1 + $0xf0] sm:$0xff]
  %v1494 = vld [vmem:[%s1 + $0xf8] sm:$0xff]
  %v1495 = vld [vmem:[%s1 + $0x100] sm:$0xff]
  %v1496 = vld [vmem:[%s1 + $0x108] sm:$0xff]
  %v1497 = vld [vmem:[%s1 + $0x110] sm:$0xf]
  %v1498 = vld [vmem:[%s1 + $0x118] sm:$0xf]
  %v1500 = vsel %vm77, %v1462, 0
  %v1503 = vsel %vm81, %v1497, 0
  %v1506 = vsel %vm81, %v1498, 0
  %1508 = vmatprep.subr.mxu0 %v1464
  %1509 = vmatpush1.msra.mxu0 %v1463
  %1510 = vmatprep.subr.mxu0 %v1466
  %1511 = vmatpush1.msra.mxu0 %v1465
  %1512 = vmatprep.subr.mxu0 %v1468
  %1513 = vmatpush1.msra.mxu0 %v1467
  %1514 = vmatprep.subr.mxu0 %v1470
  %1515 = vmatpush1.msra.mxu0 %v1469
  %1516 = vmatprep.subr.mxu0 %v1472
  %1517 = vmatpush1.msra.mxu0 %v1471
  %1518 = vmatprep.subr.mxu0 %v1474
  %1519 = vmatpush1.msra.mxu0 %v1473
  %1520 = vmatprep.subr.mxu0 %v1476
  %1521 = vmatpush1.msra.mxu0 %v1475
  %1522 = vmatprep.subr.mxu0 %v1478
  %1523 = vmatpush1.msra.mxu0 %v1477
  %1524 = vmatprep.subr.mxu0 %v1480
  %1525 = vmatpush1.msra.mxu0 %v1479
  %1526 = vmatprep.subr.mxu0 %v1482
  %1527 = vmatpush1.msra.mxu0 %v1481
  %1528 = vmatprep.subr.mxu0 %v1484
  %1529 = vmatpush1.msra.mxu0 %v1483
  %1530 = vmatprep.subr.mxu0 %v1486
  %1531 = vmatpush1.msra.mxu0 %v1485
  %1532 = vmatprep.subr.mxu0 %v1488
  %1533 = vmatpush1.msra.mxu0 %v1487
  %1534 = vmatprep.subr.mxu0 %v1490
  %1535 = vmatpush1.msra.mxu0 %v1489
  %1536 = vmatprep.subr.mxu0 %v1492
  %1537 = vmatpush1.msra.mxu0 %v1491
  %1538 = vmatprep.subr.mxu0 %v1494
  %1539 = vmatpush1.msra.mxu0 %v1493
  %1540 = vmatprep.subr.mxu0 %v1496
  %1541 = vmatpush1.msra.mxu0 %v1495
  %1542 = vmatprep.subr.mxu0 %v1506
  %1543 = vmatpush1.msra.mxu0 %v1503
  %1544 = vmatprep.subr.mxu0 0.0
  %1545 = vmatpush1.msra.mxu0 0.0
  %1546 = vmatprep.subr.mxu0 0.0
  %1547 = vmatpush1.msra.mxu0 0.0
  %1548 = vmatprep.subr.mxu0 0.0
  %1549 = vmatpush1.msra.mxu0 0.0
  %1550 = vmatprep.subr.mxu0 0.0
  %1551 = vmatpush1.msra.mxu0 0.0
  %1552 = vmatprep.subr.mxu0 0.0
  %1553 = vmatpush1.msra.mxu0 0.0
  %1554 = vmatprep.subr.mxu0 0.0
  %1555 = vmatpush1.msra.mxu0 0.0
  %1556 = vmatprep.subr.mxu0 0.0
  %1557 = vmatpush1.msra.mxu0 0.0
  %1558 = vmatprep.subr.mxu0 0.0
  %1559 = vmatpush1.msra.mxu0 0.0
  %1560 = vmatprep.subr.mxu0 0.0
  %1561 = vmatpush1.msra.mxu0 0.0
  %1562 = vmatprep.subr.mxu0 0.0
  %1563 = vmatpush1.msra.mxu0 0.0
  %1564 = vmatprep.subr.mxu0 0.0
  %1565 = vmatpush1.msra.mxu0 0.0
  %1566 = vmatprep.subr.mxu0 0.0
  %1567 = vmatpush1.msra.mxu0 0.0
  %1568 = vmatprep.subr.mxu0 0.0
  %1569 = vmatpush1.msra.mxu0 0.0
  %1570 = vmatprep.subr.mxu0 0.0
  %1571 = vmatpush1.msra.mxu0 0.0
  %1572 = vmatprep.mubr.f32.mxu0 %v1500
  %1573 = vmatmul.mubr.f32.gmra.mrb[0].mxu0 %v1461
  %v1574 = vpop.f32.mrb[0].mxu0
  %v1575 = vadd.f32 0.0, %v1574
  %v1576 = vpop.f32.mrb[0].mxu0
  %v1577 = vadd.f32 0.0, %v1576
  %1578 = vdwg.mxu0
  %s1579 = scalar_lea.vmem %s0, 304
  %v1580 = vld [vmem:[%s1579] sm:$0xff]
  %v1581 = vld [vmem:[%s1579 + $0x8] sm:$0xff]
  %v1583 = vsel %vm77, %v1581, 0
  %1585 = vmatprep.subr.mxu0 %v1464
  %1586 = vmatpush1.msra.mxu0 %v1463
  %1587 = vmatprep.subr.mxu0 %v1466
  %1588 = vmatpush1.msra.mxu0 %v1465
  %1589 = vmatprep.subr.mxu0 %v1468
  %1590 = vmatpush1.msra.mxu0 %v1467
  %1591 = vmatprep.subr.mxu0 %v1470
  %1592 = vmatpush1.msra.mxu0 %v1469
  %1593 = vmatprep.subr.mxu0 %v1472
  %1594 = vmatpush1.msra.mxu0 %v1471
  %1595 = vmatprep.subr.mxu0 %v1474
  %1596 = vmatpush1.msra.mxu0 %v1473
  %1597 = vmatprep.subr.mxu0 %v1476
  %1598 = vmatpush1.msra.mxu0 %v1475
  %1599 = vmatprep.subr.mxu0 %v1478
  %1600 = vmatpush1.msra.mxu0 %v1477
  %1601 = vmatprep.subr.mxu0 %v1480
  %1602 = vmatpush1.msra.mxu0 %v1479
  %1603 = vmatprep.subr.mxu0 %v1482
  %1604 = vmatpush1.msra.mxu0 %v1481
  %1605 = vmatprep.subr.mxu0 %v1484
  %1606 = vmatpush1.msra.mxu0 %v1483
  %1607 = vmatprep.subr.mxu0 %v1486
  %1608 = vmatpush1.msra.mxu0 %v1485
  %1609 = vmatprep.subr.mxu0 %v1488
  %1610 = vmatpush1.msra.mxu0 %v1487
  %1611 = vmatprep.subr.mxu0 %v1490
  %1612 = vmatpush1.msra.mxu0 %v1489
  %1613 = vmatprep.subr.mxu0 %v1492
  %1614 = vmatpush1.msra.mxu0 %v1491
  %1615 = vmatprep.subr.mxu0 %v1494
  %1616 = vmatpush1.msra.mxu0 %v1493
  %1617 = vmatprep.subr.mxu0 %v1496
  %1618 = vmatpush1.msra.mxu0 %v1495
  %1619 = vmatprep.subr.mxu0 %v1506
  %1620 = vmatpush1.msra.mxu0 %v1503
  %1621 = vmatprep.subr.mxu0 0.0
  %1622 = vmatpush1.msra.mxu0 0.0
  %1623 = vmatprep.subr.mxu0 0.0
  %1624 = vmatpush1.msra.mxu0 0.0
  %1625 = vmatprep.subr.mxu0 0.0
  %1626 = vmatpush1.msra.mxu0 0.0
  %1627 = vmatprep.subr.mxu0 0.0
  %1628 = vmatpush1.msra.mxu0 0.0
  %1629 = vmatprep.subr.mxu0 0.0
  %1630 = vmatpush1.msra.mxu0 0.0
  %1631 = vmatprep.subr.mxu0 0.0
  %1632 = vmatpush1.msra.mxu0 0.0
  %1633 = vmatprep.subr.mxu0 0.0
  %1634 = vmatpush1.msra.mxu0 0.0
  %1635 = vmatprep.subr.mxu0 0.0
  %1636 = vmatpush1.msra.mxu0 0.0
  %1637 = vmatprep.subr.mxu0 0.0
  %1638 = vmatpush1.msra.mxu0 0.0
  %1639 = vmatprep.subr.mxu0 0.0
  %1640 = vmatpush1.msra.mxu0 0.0
  %1641 = vmatprep.subr.mxu0 0.0
  %1642 = vmatpush1.msra.mxu0 0.0
  %1643 = vmatprep.subr.mxu0 0.0
  %1644 = vmatpush1.msra.mxu0 0.0
  %1645 = vmatprep.subr.mxu0 0.0
  %1646 = vmatpush1.msra.mxu0 0.0
  %1647 = vmatprep.subr.mxu0 0.0
  %1648 = vmatpush1.msra.mxu0 0.0
  %1649 = vmatprep.mubr.f32.mxu0 %v1583
  %1650 = vmatmul.mubr.f32.gmra.mrb[0].mxu0 %v1580
  %v1651 = vpop.f32.mrb[0].mxu0
  %v1652 = vadd.f32 0.0, %v1651
  %v1653 = vpop.f32.mrb[0].mxu0
  %v1654 = vadd.f32 0.0, %v1653
  %1655 = vdwg.mxu0
  %v1656 = vmax.f32 %v1575, %v1652
  %v1657 = vmax.f32 %v1577, %v1654
  %v1658 = vmax.f32 %v1656, %v1657
  %v1659 = vadd.f32 %v1658, %v243
  %v1660 = vmax.f32 %v1659, 0.0
  %1661 = vst [vmem:[#allocation2 + $0x38] sm:$0xff] %v1660
  %s1662 = scalar_lea.vmem %s0, 128
  %v1663 = vld [vmem:[%s1662] sm:$0xff]
  %v1664 = vld [vmem:[%s1662 + $0x8] sm:$0xff]
  %v1665 = vld [vmem:[%s1] sm:$0xff]
  %v1666 = vld [vmem:[%s1 + $0x8] sm:$0xff]
  %v1667 = vld [vmem:[%s1 + $0x10] sm:$0xff]
  %v1668 = vld [vmem:[%s1 + $0x18] sm:$0xff]
  %v1669 = vld [vmem:[%s1 + $0x20] sm:$0xff]
  %v1670 = vld [vmem:[%s1 + $0x28] sm:$0xff]
  %v1671 = vld [vmem:[%s1 + $0x30] sm:$0xff]
  %v1672 = vld [vmem:[%s1 + $0x38] sm:$0xff]
  %v1673 = vld [vmem:[%s1 + $0x40] sm:$0xff]
  %v1674 = vld [vmem:[%s1 + $0x48] sm:$0xff]
  %v1675 = vld [vmem:[%s1 + $0x50] sm:$0xff]
  %v1676 = vld [vmem:[%s1 + $0x58] sm:$0xff]
  %v1677 = vld [vmem:[%s1 + $0x60] sm:$0xff]
  %v1678 = vld [vmem:[%s1 + $0x68] sm:$0xff]
  %v1679 = vld [vmem:[%s1 + $0x70] sm:$0xff]
  %v1680 = vld [vmem:[%s1 + $0x78] sm:$0xff]
  %v1681 = vld [vmem:[%s1 + $0x80] sm:$0xff]
  %v1682 = vld [vmem:[%s1 + $0x88] sm:$0xff]
  %v1683 = vld [vmem:[%s1 + $0x90] sm:$0xff]
  %v1684 = vld [vmem:[%s1 + $0x98] sm:$0xff]
  %v1685 = vld [vmem:[%s1 + $0xa0] sm:$0xff]
  %v1686 = vld [vmem:[%s1 + $0xa8] sm:$0xff]
  %v1687 = vld [vmem:[%s1 + $0xb0] sm:$0xff]
  %v1688 = vld [vmem:[%s1 + $0xb8] sm:$0xff]
  %v1689 = vld [vmem:[%s1 + $0xc0] sm:$0xff]
  %v1690 = vld [vmem:[%s1 + $0xc8] sm:$0xff]
  %v1691 = vld [vmem:[%s1 + $0xd0] sm:$0xff]
  %v1692 = vld [vmem:[%s1 + $0xd8] sm:$0xff]
  %v1693 = vld [vmem:[%s1 + $0xe0] sm:$0xff]
  %v1694 = vld [vmem:[%s1 + $0xe8] sm:$0xff]
  %v1695 = vld [vmem:[%s1 + $0xf0] sm:$0xff]
  %v1696 = vld [vmem:[%s1 + $0xf8] sm:$0xff]
  %v1697 = vld [vmem:[%s1 + $0x100] sm:$0xff]
  %v1698 = vld [vmem:[%s1 + $0x108] sm:$0xff]
  %v1699 = vld [vmem:[%s1 + $0x110] sm:$0xf]
  %v1700 = vld [vmem:[%s1 + $0x118] sm:$0xf]
  %v1702 = vsel %vm77, %v1664, 0
  %v1705 = vsel %vm81, %v1699, 0
  %v1708 = vsel %vm81, %v1700, 0
  %1710 = vmatprep.subr.mxu0 %v1666
  %1711 = vmatpush1.msra.mxu0 %v1665
  %1712 = vmatprep.subr.mxu0 %v1668
  %1713 = vmatpush1.msra.mxu0 %v1667
  %1714 = vmatprep.subr.mxu0 %v1670
  %1715 = vmatpush1.msra.mxu0 %v1669
  %1716 = vmatprep.subr.mxu0 %v1672
  %1717 = vmatpush1.msra.mxu0 %v1671
  %1718 = vmatprep.subr.mxu0 %v1674
  %1719 = vmatpush1.msra.mxu0 %v1673
  %1720 = vmatprep.subr.mxu0 %v1676
  %1721 = vmatpush1.msra.mxu0 %v1675
  %1722 = vmatprep.subr.mxu0 %v1678
  %1723 = vmatpush1.msra.mxu0 %v1677
  %1724 = vmatprep.subr.mxu0 %v1680
  %1725 = vmatpush1.msra.mxu0 %v1679
  %1726 = vmatprep.subr.mxu0 %v1682
  %1727 = vmatpush1.msra.mxu0 %v1681
  %1728 = vmatprep.subr.mxu0 %v1684
  %1729 = vmatpush1.msra.mxu0 %v1683
  %1730 = vmatprep.subr.mxu0 %v1686
  %1731 = vmatpush1.msra.mxu0 %v1685
  %1732 = vmatprep.subr.mxu0 %v1688
  %1733 = vmatpush1.msra.mxu0 %v1687
  %1734 = vmatprep.subr.mxu0 %v1690
  %1735 = vmatpush1.msra.mxu0 %v1689
  %1736 = vmatprep.subr.mxu0 %v1692
  %1737 = vmatpush1.msra.mxu0 %v1691
  %1738 = vmatprep.subr.mxu0 %v1694
  %1739 = vmatpush1.msra.mxu0 %v1693
  %1740 = vmatprep.subr.mxu0 %v1696
  %1741 = vmatpush1.msra.mxu0 %v1695
  %1742 = vmatprep.subr.mxu0 %v1698
  %1743 = vmatpush1.msra.mxu0 %v1697
  %1744 = vmatprep.subr.mxu0 %v1708
  %1745 = vmatpush1.msra.mxu0 %v1705
  %1746 = vmatprep.subr.mxu0 0.0
  %1747 = vmatpush1.msra.mxu0 0.0
  %1748 = vmatprep.subr.mxu0 0.0
  %1749 = vmatpush1.msra.mxu0 0.0
  %1750 = vmatprep.subr.mxu0 0.0
  %1751 = vmatpush1.msra.mxu0 0.0
  %1752 = vmatprep.subr.mxu0 0.0
  %1753 = vmatpush1.msra.mxu0 0.0
  %1754 = vmatprep.subr.mxu0 0.0
  %1755 = vmatpush1.msra.mxu0 0.0
  %1756 = vmatprep.subr.mxu0 0.0
  %1757 = vmatpush1.msra.mxu0 0.0
  %1758 = vmatprep.subr.mxu0 0.0
  %1759 = vmatpush1.msra.mxu0 0.0
  %1760 = vmatprep.subr.mxu0 0.0
  %1761 = vmatpush1.msra.mxu0 0.0
  %1762 = vmatprep.subr.mxu0 0.0
  %1763 = vmatpush1.msra.mxu0 0.0
  %1764 = vmatprep.subr.mxu0 0.0
  %1765 = vmatpush1.msra.mxu0 0.0
  %1766 = vmatprep.subr.mxu0 0.0
  %1767 = vmatpush1.msra.mxu0 0.0
  %1768 = vmatprep.subr.mxu0 0.0
  %1769 = vmatpush1.msra.mxu0 0.0
  %1770 = vmatprep.subr.mxu0 0.0
  %1771 = vmatpush1.msra.mxu0 0.0
  %1772 = vmatprep.subr.mxu0 0.0
  %1773 = vmatpush1.msra.mxu0 0.0
  %1774 = vmatprep.mubr.f32.mxu0 %v1702
  %1775 = vmatmul.mubr.f32.gmra.mrb[0].mxu0 %v1663
  %v1776 = vpop.f32.mrb[0].mxu0
  %v1777 = vadd.f32 0.0, %v1776
  %v1778 = vpop.f32.mrb[0].mxu0
  %v1779 = vadd.f32 0.0, %v1778
  %1780 = vdwg.mxu0
  %s1781 = scalar_lea.vmem %s0, 320
  %v1782 = vld [vmem:[%s1781] sm:$0xff]
  %v1783 = vld [vmem:[%s1781 + $0x8] sm:$0xff]
  %v1785 = vsel %vm77, %v1783, 0
  %1787 = vmatprep.subr.mxu0 %v1666
  %1788 = vmatpush1.msra.mxu0 %v1665
  %1789 = vmatprep.subr.mxu0 %v1668
  %1790 = vmatpush1.msra.mxu0 %v1667
  %1791 = vmatprep.subr.mxu0 %v1670
  %1792 = vmatpush1.msra.mxu0 %v1669
  %1793 = vmatprep.subr.mxu0 %v1672
  %1794 = vmatpush1.msra.mxu0 %v1671
  %1795 = vmatprep.subr.mxu0 %v1674
  %1796 = vmatpush1.msra.mxu0 %v1673
  %1797 = vmatprep.subr.mxu0 %v1676
  %1798 = vmatpush1.msra.mxu0 %v1675
  %1799 = vmatprep.subr.mxu0 %v1678
  %1800 = vmatpush1.msra.mxu0 %v1677
  %1801 = vmatprep.subr.mxu0 %v1680
  %1802 = vmatpush1.msra.mxu0 %v1679
  %1803 = vmatprep.subr.mxu0 %v1682
  %1804 = vmatpush1.msra.mxu0 %v1681
  %1805 = vmatprep.subr.mxu0 %v1684
  %1806 = vmatpush1.msra.mxu0 %v1683
  %1807 = vmatprep.subr.mxu0 %v1686
  %1808 = vmatpush1.msra.mxu0 %v1685
  %1809 = vmatprep.subr.mxu0 %v1688
  %1810 = vmatpush1.msra.mxu0 %v1687
  %1811 = vmatprep.subr.mxu0 %v1690
  %1812 = vmatpush1.msra.mxu0 %v1689
  %1813 = vmatprep.subr.mxu0 %v1692
  %1814 = vmatpush1.msra.mxu0 %v1691
  %1815 = vmatprep.subr.mxu0 %v1694
  %1816 = vmatpush1.msra.mxu0 %v1693
  %1817 = vmatprep.subr.mxu0 %v1696
  %1818 = vmatpush1.msra.mxu0 %v1695
  %1819 = vmatprep.subr.mxu0 %v1698
  %1820 = vmatpush1.msra.mxu0 %v1697
  %1821 = vmatprep.subr.mxu0 %v1708
  %1822 = vmatpush1.msra.mxu0 %v1705
  %1823 = vmatprep.subr.mxu0 0.0
  %1824 = vmatpush1.msra.mxu0 0.0
  %1825 = vmatprep.subr.mxu0 0.0
  %1826 = vmatpush1.msra.mxu0 0.0
  %1827 = vmatprep.subr.mxu0 0.0
  %1828 = vmatpush1.msra.mxu0 0.0
  %1829 = vmatprep.subr.mxu0 0.0
  %1830 = vmatpush1.msra.mxu0 0.0
  %1831 = vmatprep.subr.mxu0 0.0
  %1832 = vmatpush1.msra.mxu0 0.0
  %1833 = vmatprep.subr.mxu0 0.0
  %1834 = vmatpush1.msra.mxu0 0.0
  %1835 = vmatprep.subr.mxu0 0.0
  %1836 = vmatpush1.msra.mxu0 0.0
  %1837 = vmatprep.subr.mxu0 0.0
  %1838 = vmatpush1.msra.mxu0 0.0
  %1839 = vmatprep.subr.mxu0 0.0
  %1840 = vmatpush1.msra.mxu0 0.0
  %1841 = vmatprep.subr.mxu0 0.0
  %1842 = vmatpush1.msra.mxu0 0.0
  %1843 = vmatprep.subr.mxu0 0.0
  %1844 = vmatpush1.msra.mxu0 0.0
  %1845 = vmatprep.subr.mxu0 0.0
  %1846 = vmatpush1.msra.mxu0 0.0
  %1847 = vmatprep.subr.mxu0 0.0
  %1848 = vmatpush1.msra.mxu0 0.0
  %1849 = vmatprep.subr.mxu0 0.0
  %1850 = vmatpush1.msra.mxu0 0.0
  %1851 = vmatprep.mubr.f32.mxu0 %v1785
  %1852 = vmatmul.mubr.f32.gmra.mrb[0].mxu0 %v1782
  %v1853 = vpop.f32.mrb[0].mxu0
  %v1854 = vadd.f32 0.0, %v1853
  %v1855 = vpop.f32.mrb[0].mxu0
  %v1856 = vadd.f32 0.0, %v1855
  %1857 = vdwg.mxu0
  %v1858 = vmax.f32 %v1777, %v1854
  %v1859 = vmax.f32 %v1779, %v1856
  %v1860 = vmax.f32 %v1858, %v1859
  %v1861 = vadd.f32 %v1860, %v243
  %v1862 = vmax.f32 %v1861, 0.0
  %1863 = vst [vmem:[#allocation2 + $0x40] sm:$0xff] %v1862
  %s1864 = scalar_lea.vmem %s0, 144
  %v1865 = vld [vmem:[%s1864] sm:$0xff]
  %v1866 = vld [vmem:[%s1864 + $0x8] sm:$0xff]
  %v1867 = vld [vmem:[%s1] sm:$0xff]
  %v1868 = vld [vmem:[%s1 + $0x8] sm:$0xff]
  %v1869 = vld [vmem:[%s1 + $0x10] sm:$0xff]
  %v1870 = vld [vmem:[%s1 + $0x18] sm:$0xff]
  %v1871 = vld [vmem:[%s1 + $0x20] sm:$0xff]
  %v1872 = vld [vmem:[%s1 + $0x28] sm:$0xff]
  %v1873 = vld [vmem:[%s1 + $0x30] sm:$0xff]
  %v1874 = vld [vmem:[%s1 + $0x38] sm:$0xff]
  %v1875 = vld [vmem:[%s1 + $0x40] sm:$0xff]
  %v1876 = vld [vmem:[%s1 + $0x48] sm:$0xff]
  %v1877 = vld [vmem:[%s1 + $0x50] sm:$0xff]
  %v1878 = vld [vmem:[%s1 + $0x58] sm:$0xff]
  %v1879 = vld [vmem:[%s1 + $0x60] sm:$0xff]
  %v1880 = vld [vmem:[%s1 + $0x68] sm:$0xff]
  %v1881 = vld [vmem:[%s1 + $0x70] sm:$0xff]
  %v1882 = vld [vmem:[%s1 + $0x78] sm:$0xff]
  %v1883 = vld [vmem:[%s1 + $0x80] sm:$0xff]
  %v1884 = vld [vmem:[%s1 + $0x88] sm:$0xff]
  %v1885 = vld [vmem:[%s1 + $0x90] sm:$0xff]
  %v1886 = vld [vmem:[%s1 + $0x98] sm:$0xff]
  %v1887 = vld [vmem:[%s1 + $0xa0] sm:$0xff]
  %v1888 = vld [vmem:[%s1 + $0xa8] sm:$0xff]
  %v1889 = vld [vmem:[%s1 + $0xb0] sm:$0xff]
  %v1890 = vld [vmem:[%s1 + $0xb8] sm:$0xff]
  %v1891 = vld [vmem:[%s1 + $0xc0] sm:$0xff]
  %v1892 = vld [vmem:[%s1 + $0xc8] sm:$0xff]
  %v1893 = vld [vmem:[%s1 + $0xd0] sm:$0xff]
  %v1894 = vld [vmem:[%s1 + $0xd8] sm:$0xff]
  %v1895 = vld [vmem:[%s1 + $0xe0] sm:$0xff]
  %v1896 = vld [vmem:[%s1 + $0xe8] sm:$0xff]
  %v1897 = vld [vmem:[%s1 + $0xf0] sm:$0xff]
  %v1898 = vld [vmem:[%s1 + $0xf8] sm:$0xff]
  %v1899 = vld [vmem:[%s1 + $0x100] sm:$0xff]
  %v1900 = vld [vmem:[%s1 + $0x108] sm:$0xff]
  %v1901 = vld [vmem:[%s1 + $0x110] sm:$0xf]
  %v1902 = vld [vmem:[%s1 + $0x118] sm:$0xf]
  %v1904 = vsel %vm77, %v1866, 0
  %v1907 = vsel %vm81, %v1901, 0
  %v1910 = vsel %vm81, %v1902, 0
  %1912 = vmatprep.subr.mxu0 %v1868
  %1913 = vmatpush1.msra.mxu0 %v1867
  %1914 = vmatprep.subr.mxu0 %v1870
  %1915 = vmatpush1.msra.mxu0 %v1869
  %1916 = vmatprep.subr.mxu0 %v1872
  %1917 = vmatpush1.msra.mxu0 %v1871
  %1918 = vmatprep.subr.mxu0 %v1874
  %1919 = vmatpush1.msra.mxu0 %v1873
  %1920 = vmatprep.subr.mxu0 %v1876
  %1921 = vmatpush1.msra.mxu0 %v1875
  %1922 = vmatprep.subr.mxu0 %v1878
  %1923 = vmatpush1.msra.mxu0 %v1877
  %1924 = vmatprep.subr.mxu0 %v1880
  %1925 = vmatpush1.msra.mxu0 %v1879
  %1926 = vmatprep.subr.mxu0 %v1882
  %1927 = vmatpush1.msra.mxu0 %v1881
  %1928 = vmatprep.subr.mxu0 %v1884
  %1929 = vmatpush1.msra.mxu0 %v1883
  %1930 = vmatprep.subr.mxu0 %v1886
  %1931 = vmatpush1.msra.mxu0 %v1885
  %1932 = vmatprep.subr.mxu0 %v1888
  %1933 = vmatpush1.msra.mxu0 %v1887
  %1934 = vmatprep.subr.mxu0 %v1890
  %1935 = vmatpush1.msra.mxu0 %v1889
  %1936 = vmatprep.subr.mxu0 %v1892
  %1937 = vmatpush1.msra.mxu0 %v1891
  %1938 = vmatprep.subr.mxu0 %v1894
  %1939 = vmatpush1.msra.mxu0 %v1893
  %1940 = vmatprep.subr.mxu0 %v1896
  %1941 = vmatpush1.msra.mxu0 %v1895
  %1942 = vmatprep.subr.mxu0 %v1898
  %1943 = vmatpush1.msra.mxu0 %v1897
  %1944 = vmatprep.subr.mxu0 %v1900
  %1945 = vmatpush1.msra.mxu0 %v1899
  %1946 = vmatprep.subr.mxu0 %v1910
  %1947 = vmatpush1.msra.mxu0 %v1907
  %1948 = vmatprep.subr.mxu0 0.0
  %1949 = vmatpush1.msra.mxu0 0.0
  %1950 = vmatprep.subr.mxu0 0.0
  %1951 = vmatpush1.msra.mxu0 0.0
  %1952 = vmatprep.subr.mxu0 0.0
  %1953 = vmatpush1.msra.mxu0 0.0
  %1954 = vmatprep.subr.mxu0 0.0
  %1955 = vmatpush1.msra.mxu0 0.0
  %1956 = vmatprep.subr.mxu0 0.0
  %1957 = vmatpush1.msra.mxu0 0.0
  %1958 = vmatprep.subr.mxu0 0.0
  %1959 = vmatpush1.msra.mxu0 0.0
  %1960 = vmatprep.subr.mxu0 0.0
  %1961 = vmatpush1.msra.mxu0 0.0
  %1962 = vmatprep.subr.mxu0 0.0
  %1963 = vmatpush1.msra.mxu0 0.0
  %1964 = vmatprep.subr.mxu0 0.0
  %1965 = vmatpush1.msra.mxu0 0.0
  %1966 = vmatprep.subr.mxu0 0.0
  %1967 = vmatpush1.msra.mxu0 0.0
  %1968 = vmatprep.subr.mxu0 0.0
  %1969 = vmatpush1.msra.mxu0 0.0
  %1970 = vmatprep.subr.mxu0 0.0
  %1971 = vmatpush1.msra.mxu0 0.0
  %1972 = vmatprep.subr.mxu0 0.0
  %1973 = vmatpush1.msra.mxu0 0.0
  %1974 = vmatprep.subr.mxu0 0.0
  %1975 = vmatpush1.msra.mxu0 0.0
  %1976 = vmatprep.mubr.f32.mxu0 %v1904
  %1977 = vmatmul.mubr.f32.gmra.mrb[0].mxu0 %v1865
  %v1978 = vpop.f32.mrb[0].mxu0
  %v1979 = vadd.f32 0.0, %v1978
  %v1980 = vpop.f32.mrb[0].mxu0
  %v1981 = vadd.f32 0.0, %v1980
  %1982 = vdwg.mxu0
  %s1983 = scalar_lea.vmem %s0, 336
  %v1984 = vld [vmem:[%s1983] sm:$0xff]
  %v1985 = vld [vmem:[%s1983 + $0x8] sm:$0xff]
  %v1987 = vsel %vm77, %v1985, 0
  %1989 = vmatprep.subr.mxu0 %v1868
  %1990 = vmatpush1.msra.mxu0 %v1867
  %1991 = vmatprep.subr.mxu0 %v1870
  %1992 = vmatpush1.msra.mxu0 %v1869
  %1993 = vmatprep.subr.mxu0 %v1872
  %1994 = vmatpush1.msra.mxu0 %v1871
  %1995 = vmatprep.subr.mxu0 %v1874
  %1996 = vmatpush1.msra.mxu0 %v1873
  %1997 = vmatprep.subr.mxu0 %v1876
  %1998 = vmatpush1.msra.mxu0 %v1875
  %1999 = vmatprep.subr.mxu0 %v1878
  %2000 = vmatpush1.msra.mxu0 %v1877
  %2001 = vmatprep.subr.mxu0 %v1880
  %2002 = vmatpush1.msra.mxu0 %v1879
  %2003 = vmatprep.subr.mxu0 %v1882
  %2004 = vmatpush1.msra.mxu0 %v1881
  %2005 = vmatprep.subr.mxu0 %v1884
  %2006 = vmatpush1.msra.mxu0 %v1883
  %2007 = vmatprep.subr.mxu0 %v1886
  %2008 = vmatpush1.msra.mxu0 %v1885
  %2009 = vmatprep.subr.mxu0 %v1888
  %2010 = vmatpush1.msra.mxu0 %v1887
  %2011 = vmatprep.subr.mxu0 %v1890
  %2012 = vmatpush1.msra.mxu0 %v1889
  %2013 = vmatprep.subr.mxu0 %v1892
  %2014 = vmatpush1.msra.mxu0 %v1891
  %2015 = vmatprep.subr.mxu0 %v1894
  %2016 = vmatpush1.msra.mxu0 %v1893
  %2017 = vmatprep.subr.mxu0 %v1896
  %2018 = vmatpush1.msra.mxu0 %v1895
  %2019 = vmatprep.subr.mxu0 %v1898
  %2020 = vmatpush1.msra.mxu0 %v1897
  %2021 = vmatprep.subr.mxu0 %v1900
  %2022 = vmatpush1.msra.mxu0 %v1899
  %2023 = vmatprep.subr.mxu0 %v1910
  %2024 = vmatpush1.msra.mxu0 %v1907
  %2025 = vmatprep.subr.mxu0 0.0
  %2026 = vmatpush1.msra.mxu0 0.0
  %2027 = vmatprep.subr.mxu0 0.0
  %2028 = vmatpush1.msra.mxu0 0.0
  %2029 = vmatprep.subr.mxu0 0.0
  %2030 = vmatpush1.msra.mxu0 0.0
  %2031 = vmatprep.subr.mxu0 0.0
  %2032 = vmatpush1.msra.mxu0 0.0
  %2033 = vmatprep.subr.mxu0 0.0
  %2034 = vmatpush1.msra.mxu0 0.0
  %2035 = vmatprep.subr.mxu0 0.0
  %2036 = vmatpush1.msra.mxu0 0.0
  %2037 = vmatprep.subr.mxu0 0.0
  %2038 = vmatpush1.msra.mxu0 0.0
  %2039 = vmatprep.subr.mxu0 0.0
  %2040 = vmatpush1.msra.mxu0 0.0
  %2041 = vmatprep.subr.mxu0 0.0
  %2042 = vmatpush1.msra.mxu0 0.0
  %2043 = vmatprep.subr.mxu0 0.0
  %2044 = vmatpush1.msra.mxu0 0.0
  %2045 = vmatprep.subr.mxu0 0.0
  %2046 = vmatpush1.msra.mxu0 0.0
  %2047 = vmatprep.subr.mxu0 0.0
  %2048 = vmatpush1.msra.mxu0 0.0
  %2049 = vmatprep.subr.mxu0 0.0
  %2050 = vmatpush1.msra.mxu0 0.0
  %2051 = vmatprep.subr.mxu0 0.0
  %2052 = vmatpush1.msra.mxu0 0.0
  %2053 = vmatprep.mubr.f32.mxu0 %v1987
  %2054 = vmatmul.mubr.f32.gmra.mrb[0].mxu0 %v1984
  %v2055 = vpop.f32.mrb[0].mxu0
  %v2056 = vadd.f32 0.0, %v2055
  %v2057 = vpop.f32.mrb[0].mxu0
  %v2058 = vadd.f32 0.0, %v2057
  %2059 = vdwg.mxu0
  %v2060 = vmax.f32 %v1979, %v2056
  %v2061 = vmax.f32 %v1981, %v2058
  %v2062 = vmax.f32 %v2060, %v2061
  %v2063 = vadd.f32 %v2062, %v243
  %v2064 = vmax.f32 %v2063, 0.0
  %2065 = vst [vmem:[#allocation2 + $0x48] sm:$0xff] %v2064
  %s2066 = scalar_lea.vmem %s0, 160
  %v2067 = vld [vmem:[%s2066] sm:$0xff]
  %v2068 = vld [vmem:[%s2066 + $0x8] sm:$0xff]
  %v2069 = vld [vmem:[%s1] sm:$0xff]
  %v2070 = vld [vmem:[%s1 + $0x8] sm:$0xff]
  %v2071 = vld [vmem:[%s1 + $0x10] sm:$0xff]
  %v2072 = vld [vmem:[%s1 + $0x18] sm:$0xff]
  %v2073 = vld [vmem:[%s1 + $0x20] sm:$0xff]
  %v2074 = vld [vmem:[%s1 + $0x28] sm:$0xff]
  %v2075 = vld [vmem:[%s1 + $0x30] sm:$0xff]
  %v2076 = vld [vmem:[%s1 + $0x38] sm:$0xff]
  %v2077 = vld [vmem:[%s1 + $0x40] sm:$0xff]
  %v2078 = vld [vmem:[%s1 + $0x48] sm:$0xff]
  %v2079 = vld [vmem:[%s1 + $0x50] sm:$0xff]
  %v2080 = vld [vmem:[%s1 + $0x58] sm:$0xff]
  %v2081 = vld [vmem:[%s1 + $0x60] sm:$0xff]
  %v2082 = vld [vmem:[%s1 + $0x68] sm:$0xff]
  %v2083 = vld [vmem:[%s1 + $0x70] sm:$0xff]
  %v2084 = vld [vmem:[%s1 + $0x78] sm:$0xff]
  %v2085 = vld [vmem:[%s1 + $0x80] sm:$0xff]
  %v2086 = vld [vmem:[%s1 + $0x88] sm:$0xff]
  %v2087 = vld [vmem:[%s1 + $0x90] sm:$0xff]
  %v2088 = vld [vmem:[%s1 + $0x98] sm:$0xff]
  %v2089 = vld [vmem:[%s1 + $0xa0] sm:$0xff]
  %v2090 = vld [vmem:[%s1 + $0xa8] sm:$0xff]
  %v2091 = vld [vmem:[%s1 + $0xb0] sm:$0xff]
  %v2092 = vld [vmem:[%s1 + $0xb8] sm:$0xff]
  %v2093 = vld [vmem:[%s1 + $0xc0] sm:$0xff]
  %v2094 = vld [vmem:[%s1 + $0xc8] sm:$0xff]
  %v2095 = vld [vmem:[%s1 + $0xd0] sm:$0xff]
  %v2096 = vld [vmem:[%s1 + $0xd8] sm:$0xff]
  %v2097 = vld [vmem:[%s1 + $0xe0] sm:$0xff]
  %v2098 = vld [vmem:[%s1 + $0xe8] sm:$0xff]
  %v2099 = vld [vmem:[%s1 + $0xf0] sm:$0xff]
  %v2100 = vld [vmem:[%s1 + $0xf8] sm:$0xff]
  %v2101 = vld [vmem:[%s1 + $0x100] sm:$0xff]
  %v2102 = vld [vmem:[%s1 + $0x108] sm:$0xff]
  %v2103 = vld [vmem:[%s1 + $0x110] sm:$0xf]
  %v2104 = vld [vmem:[%s1 + $0x118] sm:$0xf]
  %v2106 = vsel %vm77, %v2068, 0
  %v2109 = vsel %vm81, %v2103, 0
  %v2112 = vsel %vm81, %v2104, 0
  %2114 = vmatprep.subr.mxu0 %v2070
  %2115 = vmatpush1.msra.mxu0 %v2069
  %2116 = vmatprep.subr.mxu0 %v2072
  %2117 = vmatpush1.msra.mxu0 %v2071
  %2118 = vmatprep.subr.mxu0 %v2074
  %2119 = vmatpush1.msra.mxu0 %v2073
  %2120 = vmatprep.subr.mxu0 %v2076
  %2121 = vmatpush1.msra.mxu0 %v2075
  %2122 = vmatprep.subr.mxu0 %v2078
  %2123 = vmatpush1.msra.mxu0 %v2077
  %2124 = vmatprep.subr.mxu0 %v2080
  %2125 = vmatpush1.msra.mxu0 %v2079
  %2126 = vmatprep.subr.mxu0 %v2082
  %2127 = vmatpush1.msra.mxu0 %v2081
  %2128 = vmatprep.subr.mxu0 %v2084
  %2129 = vmatpush1.msra.mxu0 %v2083
  %2130 = vmatprep.subr.mxu0 %v2086
  %2131 = vmatpush1.msra.mxu0 %v2085
  %2132 = vmatprep.subr.mxu0 %v2088
  %2133 = vmatpush1.msra.mxu0 %v2087
  %2134 = vmatprep.subr.mxu0 %v2090
  %2135 = vmatpush1.msra.mxu0 %v2089
  %2136 = vmatprep.subr.mxu0 %v2092
  %2137 = vmatpush1.msra.mxu0 %v2091
  %2138 = vmatprep.subr.mxu0 %v2094
  %2139 = vmatpush1.msra.mxu0 %v2093
  %2140 = vmatprep.subr.mxu0 %v2096
  %2141 = vmatpush1.msra.mxu0 %v2095
  %2142 = vmatprep.subr.mxu0 %v2098
  %2143 = vmatpush1.msra.mxu0 %v2097
  %2144 = vmatprep.subr.mxu0 %v2100
  %2145 = vmatpush1.msra.mxu0 %v2099
  %2146 = vmatprep.subr.mxu0 %v2102
  %2147 = vmatpush1.msra.mxu0 %v2101
  %2148 = vmatprep.subr.mxu0 %v2112
  %2149 = vmatpush1.msra.mxu0 %v2109
  %2150 = vmatprep.subr.mxu0 0.0
  %2151 = vmatpush1.msra.mxu0 0.0
  %2152 = vmatprep.subr.mxu0 0.0
  %2153 = vmatpush1.msra.mxu0 0.0
  %2154 = vmatprep.subr.mxu0 0.0
  %2155 = vmatpush1.msra.mxu0 0.0
  %2156 = vmatprep.subr.mxu0 0.0
  %2157 = vmatpush1.msra.mxu0 0.0
  %2158 = vmatprep.subr.mxu0 0.0
  %2159 = vmatpush1.msra.mxu0 0.0
  %2160 = vmatprep.subr.mxu0 0.0
  %2161 = vmatpush1.msra.mxu0 0.0
  %2162 = vmatprep.subr.mxu0 0.0
  %2163 = vmatpush1.msra.mxu0 0.0
  %2164 = vmatprep.subr.mxu0 0.0
  %2165 = vmatpush1.msra.mxu0 0.0
  %2166 = vmatprep.subr.mxu0 0.0
  %2167 = vmatpush1.msra.mxu0 0.0
  %2168 = vmatprep.subr.mxu0 0.0
  %2169 = vmatpush1.msra.mxu0 0.0
  %2170 = vmatprep.subr.mxu0 0.0
  %2171 = vmatpush1.msra.mxu0 0.0
  %2172 = vmatprep.subr.mxu0 0.0
  %2173 = vmatpush1.msra.mxu0 0.0
  %2174 = vmatprep.subr.mxu0 0.0
  %2175 = vmatpush1.msra.mxu0 0.0
  %2176 = vmatprep.subr.mxu0 0.0
  %2177 = vmatpush1.msra.mxu0 0.0
  %2178 = vmatprep.mubr.f32.mxu0 %v2106
  %2179 = vmatmul.mubr.f32.gmra.mrb[0].mxu0 %v2067
  %v2180 = vpop.f32.mrb[0].mxu0
  %v2181 = vadd.f32 0.0, %v2180
  %v2182 = vpop.f32.mrb[0].mxu0
  %v2183 = vadd.f32 0.0, %v2182
  %2184 = vdwg.mxu0
  %s2185 = scalar_lea.vmem %s0, 352
  %v2186 = vld [vmem:[%s2185] sm:$0xff]
  %v2187 = vld [vmem:[%s2185 + $0x8] sm:$0xff]
  %v2189 = vsel %vm77, %v2187, 0
  %2191 = vmatprep.subr.mxu0 %v2070
  %2192 = vmatpush1.msra.mxu0 %v2069
  %2193 = vmatprep.subr.mxu0 %v2072
  %2194 = vmatpush1.msra.mxu0 %v2071
  %2195 = vmatprep.subr.mxu0 %v2074
  %2196 = vmatpush1.msra.mxu0 %v2073
  %2197 = vmatprep.subr.mxu0 %v2076
  %2198 = vmatpush1.msra.mxu0 %v2075
  %2199 = vmatprep.subr.mxu0 %v2078
  %2200 = vmatpush1.msra.mxu0 %v2077
  %2201 = vmatprep.subr.mxu0 %v2080
  %2202 = vmatpush1.msra.mxu0 %v2079
  %2203 = vmatprep.subr.mxu0 %v2082
  %2204 = vmatpush1.msra.mxu0 %v2081
  %2205 = vmatprep.subr.mxu0 %v2084
  %2206 = vmatpush1.msra.mxu0 %v2083
  %2207 = vmatprep.subr.mxu0 %v2086
  %2208 = vmatpush1.msra.mxu0 %v2085
  %2209 = vmatprep.subr.mxu0 %v2088
  %2210 = vmatpush1.msra.mxu0 %v2087
  %2211 = vmatprep.subr.mxu0 %v2090
  %2212 = vmatpush1.msra.mxu0 %v2089
  %2213 = vmatprep.subr.mxu0 %v2092
  %2214 = vmatpush1.msra.mxu0 %v2091
  %2215 = vmatprep.subr.mxu0 %v2094
  %2216 = vmatpush1.msra.mxu0 %v2093
  %2217 = vmatprep.subr.mxu0 %v2096
  %2218 = vmatpush1.msra.mxu0 %v2095
  %2219 = vmatprep.subr.mxu0 %v2098
  %2220 = vmatpush1.msra.mxu0 %v2097
  %2221 = vmatprep.subr.mxu0 %v2100
  %2222 = vmatpush1.msra.mxu0 %v2099
  %2223 = vmatprep.subr.mxu0 %v2102
  %2224 = vmatpush1.msra.mxu0 %v2101
  %2225 = vmatprep.subr.mxu0 %v2112
  %2226 = vmatpush1.msra.mxu0 %v2109
  %2227 = vmatprep.subr.mxu0 0.0
  %2228 = vmatpush1.msra.mxu0 0.0
  %2229 = vmatprep.subr.mxu0 0.0
  %2230 = vmatpush1.msra.mxu0 0.0
  %2231 = vmatprep.subr.mxu0 0.0
  %2232 = vmatpush1.msra.mxu0 0.0
  %2233 = vmatprep.subr.mxu0 0.0
  %2234 = vmatpush1.msra.mxu0 0.0
  %2235 = vmatprep.subr.mxu0 0.0
  %2236 = vmatpush1.msra.mxu0 0.0
  %2237 = vmatprep.subr.mxu0 0.0
  %2238 = vmatpush1.msra.mxu0 0.0
  %2239 = vmatprep.subr.mxu0 0.0
  %2240 = vmatpush1.msra.mxu0 0.0
  %2241 = vmatprep.subr.mxu0 0.0
  %2242 = vmatpush1.msra.mxu0 0.0
  %2243 = vmatprep.subr.mxu0 0.0
  %2244 = vmatpush1.msra.mxu0 0.0
  %2245 = vmatprep.subr.mxu0 0.0
  %2246 = vmatpush1.msra.mxu0 0.0
  %2247 = vmatprep.subr.mxu0 0.0
  %2248 = vmatpush1.msra.mxu0 0.0
  %2249 = vmatprep.subr.mxu0 0.0
  %2250 = vmatpush1.msra.mxu0 0.0
  %2251 = vmatprep.subr.mxu0 0.0
  %2252 = vmatpush1.msra.mxu0 0.0
  %2253 = vmatprep.subr.mxu0 0.0
  %2254 = vmatpush1.msra.mxu0 0.0
  %2255 = vmatprep.mubr.f32.mxu0 %v2189
  %2256 = vmatmul.mubr.f32.gmra.mrb[0].mxu0 %v2186
  %v2257 = vpop.f32.mrb[0].mxu0
  %v2258 = vadd.f32 0.0, %v2257
  %v2259 = vpop.f32.mrb[0].mxu0
  %v2260 = vadd.f32 0.0, %v2259
  %2261 = vdwg.mxu0
  %v2262 = vmax.f32 %v2181, %v2258
  %v2263 = vmax.f32 %v2183, %v2260
  %v2264 = vmax.f32 %v2262, %v2263
  %v2265 = vadd.f32 %v2264, %v243
  %v2266 = vmax.f32 %v2265, 0.0
  %2267 = vst [vmem:[#allocation2 + $0x50] sm:$0xff] %v2266
  %s2268 = scalar_lea.vmem %s0, 176
  %v2269 = vld [vmem:[%s2268] sm:$0xff]
  %v2270 = vld [vmem:[%s2268 + $0x8] sm:$0xff]
  %v2271 = vld [vmem:[%s1] sm:$0xff]
  %v2272 = vld [vmem:[%s1 + $0x8] sm:$0xff]
  %v2273 = vld [vmem:[%s1 + $0x10] sm:$0xff]
  %v2274 = vld [vmem:[%s1 + $0x18] sm:$0xff]
  %v2275 = vld [vmem:[%s1 + $0x20] sm:$0xff]
  %v2276 = vld [vmem:[%s1 + $0x28] sm:$0xff]
  %v2277 = vld [vmem:[%s1 + $0x30] sm:$0xff]
  %v2278 = vld [vmem:[%s1 + $0x38] sm:$0xff]
  %v2279 = vld [vmem:[%s1 + $0x40] sm:$0xff]
  %v2280 = vld [vmem:[%s1 + $0x48] sm:$0xff]
  %v2281 = vld [vmem:[%s1 + $0x50] sm:$0xff]
  %v2282 = vld [vmem:[%s1 + $0x58] sm:$0xff]
  %v2283 = vld [vmem:[%s1 + $0x60] sm:$0xff]
  %v2284 = vld [vmem:[%s1 + $0x68] sm:$0xff]
  %v2285 = vld [vmem:[%s1 + $0x70] sm:$0xff]
  %v2286 = vld [vmem:[%s1 + $0x78] sm:$0xff]
  %v2287 = vld [vmem:[%s1 + $0x80] sm:$0xff]
  %v2288 = vld [vmem:[%s1 + $0x88] sm:$0xff]
  %v2289 = vld [vmem:[%s1 + $0x90] sm:$0xff]
  %v2290 = vld [vmem:[%s1 + $0x98] sm:$0xff]
  %v2291 = vld [vmem:[%s1 + $0xa0] sm:$0xff]
  %v2292 = vld [vmem:[%s1 + $0xa8] sm:$0xff]
  %v2293 = vld [vmem:[%s1 + $0xb0] sm:$0xff]
  %v2294 = vld [vmem:[%s1 + $0xb8] sm:$0xff]
  %v2295 = vld [vmem:[%s1 + $0xc0] sm:$0xff]
  %v2296 = vld [vmem:[%s1 + $0xc8] sm:$0xff]
  %v2297 = vld [vmem:[%s1 + $0xd0] sm:$0xff]
  %v2298 = vld [vmem:[%s1 + $0xd8] sm:$0xff]
  %v2299 = vld [vmem:[%s1 + $0xe0] sm:$0xff]
  %v2300 = vld [vmem:[%s1 + $0xe8] sm:$0xff]
  %v2301 = vld [vmem:[%s1 + $0xf0] sm:$0xff]
  %v2302 = vld [vmem:[%s1 + $0xf8] sm:$0xff]
  %v2303 = vld [vmem:[%s1 + $0x100] sm:$0xff]
  %v2304 = vld [vmem:[%s1 + $0x108] sm:$0xff]
  %v2305 = vld [vmem:[%s1 + $0x110] sm:$0xf]
  %v2306 = vld [vmem:[%s1 + $0x118] sm:$0xf]
  %v2308 = vsel %vm77, %v2270, 0
  %v2311 = vsel %vm81, %v2305, 0
  %v2314 = vsel %vm81, %v2306, 0
  %2316 = vmatprep.subr.mxu0 %v2272
  %2317 = vmatpush1.msra.mxu0 %v2271
  %2318 = vmatprep.subr.mxu0 %v2274
  %2319 = vmatpush1.msra.mxu0 %v2273
  %2320 = vmatprep.subr.mxu0 %v2276
  %2321 = vmatpush1.msra.mxu0 %v2275
  %2322 = vmatprep.subr.mxu0 %v2278
  %2323 = vmatpush1.msra.mxu0 %v2277
  %2324 = vmatprep.subr.mxu0 %v2280
  %2325 = vmatpush1.msra.mxu0 %v2279
  %2326 = vmatprep.subr.mxu0 %v2282
  %2327 = vmatpush1.msra.mxu0 %v2281
  %2328 = vmatprep.subr.mxu0 %v2284
  %2329 = vmatpush1.msra.mxu0 %v2283
  %2330 = vmatprep.subr.mxu0 %v2286
  %2331 = vmatpush1.msra.mxu0 %v2285
  %2332 = vmatprep.subr.mxu0 %v2288
  %2333 = vmatpush1.msra.mxu0 %v2287
  %2334 = vmatprep.subr.mxu0 %v2290
  %2335 = vmatpush1.msra.mxu0 %v2289
  %2336 = vmatprep.subr.mxu0 %v2292
  %2337 = vmatpush1.msra.mxu0 %v2291
  %2338 = vmatprep.subr.mxu0 %v2294
  %2339 = vmatpush1.msra.mxu0 %v2293
  %2340 = vmatprep.subr.mxu0 %v2296
  %2341 = vmatpush1.msra.mxu0 %v2295
  %2342 = vmatprep.subr.mxu0 %v2298
  %2343 = vmatpush1.msra.mxu0 %v2297
  %2344 = vmatprep.subr.mxu0 %v2300
  %2345 = vmatpush1.msra.mxu0 %v2299
  %2346 = vmatprep.subr.mxu0 %v2302
  %2347 = vmatpush1.msra.mxu0 %v2301
  %2348 = vmatprep.subr.mxu0 %v2304
  %2349 = vmatpush1.msra.mxu0 %v2303
  %2350 = vmatprep.subr.mxu0 %v2314
  %2351 = vmatpush1.msra.mxu0 %v2311
  %2352 = vmatprep.subr.mxu0 0.0
  %2353 = vmatpush1.msra.mxu0 0.0
  %2354 = vmatprep.subr.mxu0 0.0
  %2355 = vmatpush1.msra.mxu0 0.0
  %2356 = vmatprep.subr.mxu0 0.0
  %2357 = vmatpush1.msra.mxu0 0.0
  %2358 = vmatprep.subr.mxu0 0.0
  %2359 = vmatpush1.msra.mxu0 0.0
  %2360 = vmatprep.subr.mxu0 0.0
  %2361 = vmatpush1.msra.mxu0 0.0
  %2362 = vmatprep.subr.mxu0 0.0
  %2363 = vmatpush1.msra.mxu0 0.0
  %2364 = vmatprep.subr.mxu0 0.0
  %2365 = vmatpush1.msra.mxu0 0.0
  %2366 = vmatprep.subr.mxu0 0.0
  %2367 = vmatpush1.msra.mxu0 0.0
  %2368 = vmatprep.subr.mxu0 0.0
  %2369 = vmatpush1.msra.mxu0 0.0
  %2370 = vmatprep.subr.mxu0 0.0
  %2371 = vmatpush1.msra.mxu0 0.0
  %2372 = vmatprep.subr.mxu0 0.0
  %2373 = vmatpush1.msra.mxu0 0.0
  %2374 = vmatprep.subr.mxu0 0.0
  %2375 = vmatpush1.msra.mxu0 0.0
  %2376 = vmatprep.subr.mxu0 0.0
  %2377 = vmatpush1.msra.mxu0 0.0
  %2378 = vmatprep.subr.mxu0 0.0
  %2379 = vmatpush1.msra.mxu0 0.0
  %2380 = vmatprep.mubr.f32.mxu0 %v2308
  %2381 = vmatmul.mubr.f32.gmra.mrb[0].mxu0 %v2269
  %v2382 = vpop.f32.mrb[0].mxu0
  %v2383 = vadd.f32 0.0, %v2382
  %v2384 = vpop.f32.mrb[0].mxu0
  %v2385 = vadd.f32 0.0, %v2384
  %2386 = vdwg.mxu0
  %s2387 = scalar_lea.vmem %s0, 368
  %v2388 = vld [vmem:[%s2387] sm:$0xff]
  %v2389 = vld [vmem:[%s2387 + $0x8] sm:$0xff]
  %v2391 = vsel %vm77, %v2389, 0
  %2393 = vmatprep.subr.mxu0 %v2272
  %2394 = vmatpush1.msra.mxu0 %v2271
  %2395 = vmatprep.subr.mxu0 %v2274
  %2396 = vmatpush1.msra.mxu0 %v2273
  %2397 = vmatprep.subr.mxu0 %v2276
  %2398 = vmatpush1.msra.mxu0 %v2275
  %2399 = vmatprep.subr.mxu0 %v2278
  %2400 = vmatpush1.msra.mxu0 %v2277
  %2401 = vmatprep.subr.mxu0 %v2280
  %2402 = vmatpush1.msra.mxu0 %v2279
  %2403 = vmatprep.subr.mxu0 %v2282
  %2404 = vmatpush1.msra.mxu0 %v2281
  %2405 = vmatprep.subr.mxu0 %v2284
  %2406 = vmatpush1.msra.mxu0 %v2283
  %2407 = vmatprep.subr.mxu0 %v2286
  %2408 = vmatpush1.msra.mxu0 %v2285
  %2409 = vmatprep.subr.mxu0 %v2288
  %2410 = vmatpush1.msra.mxu0 %v2287
  %2411 = vmatprep.subr.mxu0 %v2290
  %2412 = vmatpush1.msra.mxu0 %v2289
  %2413 = vmatprep.subr.mxu0 %v2292
  %2414 = vmatpush1.msra.mxu0 %v2291
  %2415 = vmatprep.subr.mxu0 %v2294
  %2416 = vmatpush1.msra.mxu0 %v2293
  %2417 = vmatprep.subr.mxu0 %v2296
  %2418 = vmatpush1.msra.mxu0 %v2295
  %2419 = vmatprep.subr.mxu0 %v2298
  %2420 = vmatpush1.msra.mxu0 %v2297
  %2421 = vmatprep.subr.mxu0 %v2300
  %2422 = vmatpush1.msra.mxu0 %v2299
  %2423 = vmatprep.subr.mxu0 %v2302
  %2424 = vmatpush1.msra.mxu0 %v2301
  %2425 = vmatprep.subr.mxu0 %v2304
  %2426 = vmatpush1.msra.mxu0 %v2303
  %2427 = vmatprep.subr.mxu0 %v2314
  %2428 = vmatpush1.msra.mxu0 %v2311
  %2429 = vmatprep.subr.mxu0 0.0
  %2430 = vmatpush1.msra.mxu0 0.0
  %2431 = vmatprep.subr.mxu0 0.0
  %2432 = vmatpush1.msra.mxu0 0.0
  %2433 = vmatprep.subr.mxu0 0.0
  %2434 = vmatpush1.msra.mxu0 0.0
  %2435 = vmatprep.subr.mxu0 0.0
  %2436 = vmatpush1.msra.mxu0 0.0
  %2437 = vmatprep.subr.mxu0 0.0
  %2438 = vmatpush1.msra.mxu0 0.0
  %2439 = vmatprep.subr.mxu0 0.0
  %2440 = vmatpush1.msra.mxu0 0.0
  %2441 = vmatprep.subr.mxu0 0.0
  %2442 = vmatpush1.msra.mxu0 0.0
  %2443 = vmatprep.subr.mxu0 0.0
  %2444 = vmatpush1.msra.mxu0 0.0
  %2445 = vmatprep.subr.mxu0 0.0
  %2446 = vmatpush1.msra.mxu0 0.0
  %2447 = vmatprep.subr.mxu0 0.0
  %2448 = vmatpush1.msra.mxu0 0.0
  %2449 = vmatprep.subr.mxu0 0.0
  %2450 = vmatpush1.msra.mxu0 0.0
  %2451 = vmatprep.subr.mxu0 0.0
  %2452 = vmatpush1.msra.mxu0 0.0
  %2453 = vmatprep.subr.mxu0 0.0
  %2454 = vmatpush1.msra.mxu0 0.0
  %2455 = vmatprep.subr.mxu0 0.0
  %2456 = vmatpush1.msra.mxu0 0.0
  %2457 = vmatprep.mubr.f32.mxu0 %v2391
  %2458 = vmatmul.mubr.f32.gmra.mrb[0].mxu0 %v2388
  %v2459 = vpop.f32.mrb[0].mxu0
  %v2460 = vadd.f32 0.0, %v2459
  %v2461 = vpop.f32.mrb[0].mxu0
  %v2462 = vadd.f32 0.0, %v2461
  %2463 = vdwg.mxu0
  %v2464 = vmax.f32 %v2383, %v2460
  %v2465 = vmax.f32 %v2385, %v2462
  %v2466 = vmax.f32 %v2464, %v2465
  %v2467 = vadd.f32 %v2466, %v243
  %v2468 = vmax.f32 %v2467, 0.0
  %2469 = vst [vmem:[#allocation2 + $0x58] sm:$0xff] %v2468
  %v2470 = vld [vmem:[%s4] sm:$0x1]
  %v2471 = vld [vmem:[#allocation2] sm:$0xff]
  %v2472 = vld [vmem:[#allocation2 + $0x8] sm:$0xff]
  %v2473 = vld [vmem:[#allocation2 + $0x10] sm:$0xff]
  %v2474 = vld [vmem:[#allocation2 + $0x18] sm:$0xff]
  %v2475 = vld [vmem:[%s3] sm:$0xff]
  %v2476 = vld [vmem:[%s3 + $0x8] sm:$0xff]
  %v2477 = vld [vmem:[%s3 + $0x10] sm:$0xff]
  %v2478 = vld [vmem:[%s3 + $0x18] sm:$0xff]
  %v2479 = vld [vmem:[%s3 + $0x20] sm:$0xff]
  %v2480 = vld [vmem:[%s3 + $0x28] sm:$0xff]
  %v2481 = vld [vmem:[%s3 + $0x30] sm:$0xff]
  %v2482 = vld [vmem:[%s3 + $0x38] sm:$0xff]
  %v2483 = vld [vmem:[%s3 + $0x40] sm:$0xff]
  %v2484 = vld [vmem:[%s3 + $0x48] sm:$0xff]
  %v2485 = vld [vmem:[%s3 + $0x50] sm:$0xff]
  %v2486 = vld [vmem:[%s3 + $0x58] sm:$0xff]
  %v2487 = vld [vmem:[%s3 + $0x60] sm:$0xff]
  %v2488 = vld [vmem:[%s3 + $0x68] sm:$0xff]
  %v2489 = vld [vmem:[%s3 + $0x70] sm:$0xff]
  %v2490 = vld [vmem:[%s3 + $0x78] sm:$0xff]
  %v2491 = vld [vmem:[%s3 + $0x80] sm:$0xff]
  %v2492 = vld [vmem:[%s3 + $0x88] sm:$0xff]
  %v2493 = vld [vmem:[%s3 + $0x90] sm:$0xff]
  %v2494 = vld [vmem:[%s3 + $0x98] sm:$0xff]
  %v2495 = vld [vmem:[%s3 + $0xa0] sm:$0xff]
  %v2496 = vld [vmem:[%s3 + $0xa8] sm:$0xff]
  %v2497 = vld [vmem:[%s3 + $0xb0] sm:$0xff]
  %v2498 = vld [vmem:[%s3 + $0xb8] sm:$0xff]
  %v2499 = vld [vmem:[%s3 + $0xc0] sm:$0xff]
  %v2500 = vld [vmem:[%s3 + $0xc8] sm:$0xff]
  %v2501 = vld [vmem:[%s3 + $0xd0] sm:$0xff]
  %v2502 = vld [vmem:[%s3 + $0xd8] sm:$0xff]
  %v2503 = vld [vmem:[%s3 + $0xe0] sm:$0xff]
  %v2504 = vld [vmem:[%s3 + $0xe8] sm:$0xff]
  %v2505 = vld [vmem:[%s3 + $0xf0] sm:$0xff]
  %v2506 = vld [vmem:[%s3 + $0xf8] sm:$0xff]
  %v2507 = vld [vmem:[#allocation2 + $0x30] sm:$0xff]
  %v2508 = vld [vmem:[#allocation2 + $0x38] sm:$0xff]
  %v2509 = vld [vmem:[#allocation2 + $0x40] sm:$0xff]
  %v2510 = vld [vmem:[#allocation2 + $0x48] sm:$0xff]
  %s2511 = scalar_lea.vmem %s3, 256
  %v2512 = vld [vmem:[%s2511] sm:$0xff]
  %v2513 = vld [vmem:[%s2511 + $0x8] sm:$0xff]
  %v2514 = vld [vmem:[%s2511 + $0x10] sm:$0xff]
  %v2515 = vld [vmem:[%s2511 + $0x18] sm:$0xff]
  %v2516 = vld [vmem:[%s2511 + $0x20] sm:$0xff]
  %v2517 = vld [vmem:[%s2511 + $0x28] sm:$0xff]
  %v2518 = vld [vmem:[%s2511 + $0x30] sm:$0xff]
  %v2519 = vld [vmem:[%s2511 + $0x38] sm:$0xff]
  %v2520 = vld [vmem:[%s2511 + $0x40] sm:$0xff]
  %v2521 = vld [vmem:[%s2511 + $0x48] sm:$0xff]
  %v2522 = vld [vmem:[%s2511 + $0x50] sm:$0xff]
  %v2523 = vld [vmem:[%s2511 + $0x58] sm:$0xff]
  %v2524 = vld [vmem:[%s2511 + $0x60] sm:$0xff]
  %v2525 = vld [vmem:[%s2511 + $0x68] sm:$0xff]
  %v2526 = vld [vmem:[%s2511 + $0x70] sm:$0xff]
  %v2527 = vld [vmem:[%s2511 + $0x78] sm:$0xff]
  %v2528 = vld [vmem:[%s2511 + $0x80] sm:$0xff]
  %v2529 = vld [vmem:[%s2511 + $0x88] sm:$0xff]
  %v2530 = vld [vmem:[%s2511 + $0x90] sm:$0xff]
  %v2531 = vld [vmem:[%s2511 + $0x98] sm:$0xff]
  %v2532 = vld [vmem:[%s2511 + $0xa0] sm:$0xff]
  %v2533 = vld [vmem:[%s2511 + $0xa8] sm:$0xff]
  %v2534 = vld [vmem:[%s2511 + $0xb0] sm:$0xff]
  %v2535 = vld [vmem:[%s2511 + $0xb8] sm:$0xff]
  %v2536 = vld [vmem:[%s2511 + $0xc0] sm:$0xff]
  %v2537 = vld [vmem:[%s2511 + $0xc8] sm:$0xff]
  %v2538 = vld [vmem:[%s2511 + $0xd0] sm:$0xff]
  %v2539 = vld [vmem:[%s2511 + $0xd8] sm:$0xff]
  %v2540 = vld [vmem:[%s2511 + $0xe0] sm:$0xff]
  %v2541 = vld [vmem:[%s2511 + $0xe8] sm:$0xff]
  %v2542 = vld [vmem:[%s2511 + $0xf0] sm:$0xff]
  %v2543 = vld [vmem:[%s2511 + $0xf8] sm:$0xff]
  %2544 = vmatprep.subr.mxu0 %v2513
  %2545 = vmatpush1.msra.mxu0 %v2512
  %2546 = vmatprep.subr.mxu0 %v2515
  %2547 = vmatpush1.msra.mxu0 %v2514
  %2548 = vmatprep.subr.mxu0 %v2517
  %2549 = vmatpush1.msra.mxu0 %v2516
  %2550 = vmatprep.subr.mxu0 %v2519
  %2551 = vmatpush1.msra.mxu0 %v2518
  %2552 = vmatprep.subr.mxu0 %v2521
  %2553 = vmatpush1.msra.mxu0 %v2520
  %2554 = vmatprep.subr.mxu0 %v2523
  %2555 = vmatpush1.msra.mxu0 %v2522
  %2556 = vmatprep.subr.mxu0 %v2525
  %2557 = vmatpush1.msra.mxu0 %v2524
  %2558 = vmatprep.subr.mxu0 %v2527
  %2559 = vmatpush1.msra.mxu0 %v2526
  %2560 = vmatprep.subr.mxu0 %v2529
  %2561 = vmatpush1.msra.mxu0 %v2528
  %2562 = vmatprep.subr.mxu0 %v2531
  %2563 = vmatpush1.msra.mxu0 %v2530
  %2564 = vmatprep.subr.mxu0 %v2533
  %2565 = vmatpush1.msra.mxu0 %v2532
  %2566 = vmatprep.subr.mxu0 %v2535
  %2567 = vmatpush1.msra.mxu0 %v2534
  %2568 = vmatprep.subr.mxu0 %v2537
  %2569 = vmatpush1.msra.mxu0 %v2536
  %2570 = vmatprep.subr.mxu0 %v2539
  %2571 = vmatpush1.msra.mxu0 %v2538
  %2572 = vmatprep.subr.mxu0 %v2541
  %2573 = vmatpush1.msra.mxu0 %v2540
  %2574 = vmatprep.subr.mxu0 %v2543
  %2575 = vmatpush1.msra.mxu0 %v2542
  %2576 = vmatprep.subr.mxu0 0.0
  %2577 = vmatpush1.msra.mxu0 0.0
  %2578 = vmatprep.subr.mxu0 0.0
  %2579 = vmatpush1.msra.mxu0 0.0
  %2580 = vmatprep.subr.mxu0 0.0
  %2581 = vmatpush1.msra.mxu0 0.0
  %2582 = vmatprep.subr.mxu0 0.0
  %2583 = vmatpush1.msra.mxu0 0.0
  %2584 = vmatprep.subr.mxu0 0.0
  %2585 = vmatpush1.msra.mxu0 0.0
  %2586 = vmatprep.subr.mxu0 0.0
  %2587 = vmatpush1.msra.mxu0 0.0
  %2588 = vmatprep.subr.mxu0 0.0
  %2589 = vmatpush1.msra.mxu0 0.0
  %2590 = vmatprep.subr.mxu0 0.0
  %2591 = vmatpush1.msra.mxu0 0.0
  %2592 = vmatprep.subr.mxu0 0.0
  %2593 = vmatpush1.msra.mxu0 0.0
  %2594 = vmatprep.subr.mxu0 0.0
  %2595 = vmatpush1.msra.mxu0 0.0
  %2596 = vmatprep.subr.mxu0 0.0
  %2597 = vmatpush1.msra.mxu0 0.0
  %2598 = vmatprep.subr.mxu0 0.0
  %2599 = vmatpush1.msra.mxu0 0.0
  %2600 = vmatprep.subr.mxu0 0.0
  %2601 = vmatpush1.msra.mxu0 0.0
  %2602 = vmatprep.subr.mxu0 0.0
  %2603 = vmatpush1.msra.mxu0 0.0
  %2604 = vmatprep.subr.mxu0 0.0
  %2605 = vmatpush1.msra.mxu0 0.0
  %2606 = vmatprep.subr.mxu0 0.0
  %2607 = vmatpush1.msra.mxu0 0.0
  %2608 = vmatprep.mubr.f32.mxu0 0.0
  %2609 = vmatmul.mubr.f32.gmra.mrb[0].mxu0 %v2507
  %v2610 = vpop.f32.mrb[0].mxu0
  %v2611 = vadd.f32 0.0, %v2610
  %v2612 = vpop.f32.mrb[0].mxu0
  %v2613 = vadd.f32 0.0, %v2612
  %2614 = vmatprep.mubr.f32.mxu0 0.0
  %2615 = vmatmul.mubr.f32.gmra.mrb[0].mxu0 %v2508
  %v2616 = vpop.f32.mrb[0].mxu0
  %v2617 = vadd.f32 0.0, %v2616
  %v2618 = vpop.f32.mrb[0].mxu0
  %v2619 = vadd.f32 0.0, %v2618
  %2620 = vmatprep.mubr.f32.mxu0 0.0
  %2621 = vmatmul.mubr.f32.gmra.mrb[0].mxu0 %v2509
  %v2622 = vpop.f32.mrb[0].mxu0
  %v2623 = vadd.f32 0.0, %v2622
  %v2624 = vpop.f32.mrb[0].mxu0
  %v2625 = vadd.f32 0.0, %v2624
  %2626 = vmatprep.mubr.f32.mxu0 0.0
  %2627 = vmatmul.mubr.f32.gmra.mrb[0].mxu0 %v2510
  %v2628 = vpop.f32.mrb[0].mxu0
  %v2629 = vadd.f32 0.0, %v2628
  %v2630 = vpop.f32.mrb[0].mxu0
  %v2631 = vadd.f32 0.0, %v2630
  %2632 = vdwg.mxu0
  %2633 = vmatprep.subr.mxu0 %v2476
  %2634 = vmatpush1.msra.mxu0 %v2475
  %2635 = vmatprep.subr.mxu0 %v2478
  %2636 = vmatpush1.msra.mxu0 %v2477
  %2637 = vmatprep.subr.mxu0 %v2480
  %2638 = vmatpush1.msra.mxu0 %v2479
  %2639 = vmatprep.subr.mxu0 %v2482
  %2640 = vmatpush1.msra.mxu0 %v2481
  %2641 = vmatprep.subr.mxu0 %v2484
  %2642 = vmatpush1.msra.mxu0 %v2483
  %2643 = vmatprep.subr.mxu0 %v2486
  %2644 = vmatpush1.msra.mxu0 %v2485
  %2645 = vmatprep.subr.mxu0 %v2488
  %2646 = vmatpush1.msra.mxu0 %v2487
  %2647 = vmatprep.subr.mxu0 %v2490
  %2648 = vmatpush1.msra.mxu0 %v2489
  %2649 = vmatprep.subr.mxu0 %v2492
  %2650 = vmatpush1.msra.mxu0 %v2491
  %2651 = vmatprep.subr.mxu0 %v2494
  %2652 = vmatpush1.msra.mxu0 %v2493
  %2653 = vmatprep.subr.mxu0 %v2496
  %2654 = vmatpush1.msra.mxu0 %v2495
  %2655 = vmatprep.subr.mxu0 %v2498
  %2656 = vmatpush1.msra.mxu0 %v2497
  %2657 = vmatprep.subr.mxu0 %v2500
  %2658 = vmatpush1.msra.mxu0 %v2499
  %2659 = vmatprep.subr.mxu0 %v2502
  %2660 = vmatpush1.msra.mxu0 %v2501
  %2661 = vmatprep.subr.mxu0 %v2504
  %2662 = vmatpush1.msra.mxu0 %v2503
  %2663 = vmatprep.subr.mxu0 %v2506
  %2664 = vmatpush1.msra.mxu0 %v2505
  %2665 = vmatprep.subr.mxu0 0.0
  %2666 = vmatpush1.msra.mxu0 0.0
  %2667 = vmatprep.subr.mxu0 0.0
  %2668 = vmatpush1.msra.mxu0 0.0
  %2669 = vmatprep.subr.mxu0 0.0
  %2670 = vmatpush1.msra.mxu0 0.0
  %2671 = vmatprep.subr.mxu0 0.0
  %2672 = vmatpush1.msra.mxu0 0.0
  %2673 = vmatprep.subr.mxu0 0.0
  %2674 = vmatpush1.msra.mxu0 0.0
  %2675 = vmatprep.subr.mxu0 0.0
  %2676 = vmatpush1.msra.mxu0 0.0
  %2677 = vmatprep.subr.mxu0 0.0
  %2678 = vmatpush1.msra.mxu0 0.0
  %2679 = vmatprep.subr.mxu0 0.0
  %2680 = vmatpush1.msra.mxu0 0.0
  %2681 = vmatprep.subr.mxu0 0.0
  %2682 = vmatpush1.msra.mxu0 0.0
  %2683 = vmatprep.subr.mxu0 0.0
  %2684 = vmatpush1.msra.mxu0 0.0
  %2685 = vmatprep.subr.mxu0 0.0
  %2686 = vmatpush1.msra.mxu0 0.0
  %2687 = vmatprep.subr.mxu0 0.0
  %2688 = vmatpush1.msra.mxu0 0.0
  %2689 = vmatprep.subr.mxu0 0.0
  %2690 = vmatpush1.msra.mxu0 0.0
  %2691 = vmatprep.subr.mxu0 0.0
  %2692 = vmatpush1.msra.mxu0 0.0
  %2693 = vmatprep.subr.mxu0 0.0
  %2694 = vmatpush1.msra.mxu0 0.0
  %2695 = vmatprep.subr.mxu0 0.0
  %2696 = vmatpush1.msra.mxu0 0.0
  %2697 = vmatprep.mubr.f32.mxu0 0.0
  %2698 = vmatmul.mubr.f32.gmra.mrb[0].mxu0 %v2471
  %v2699 = vpop.f32.mrb[0].mxu0
  %v2700 = vadd.f32 %v2611, %v2699
  %v2701 = vpop.f32.mrb[0].mxu0
  %v2702 = vadd.f32 %v2613, %v2701
  %2703 = vmatprep.mubr.f32.mxu0 0.0
  %2704 = vmatmul.mubr.f32.gmra.mrb[0].mxu0 %v2472
  %v2705 = vpop.f32.mrb[0].mxu0
  %v2706 = vadd.f32 %v2617, %v2705
  %v2707 = vpop.f32.mrb[0].mxu0
  %v2708 = vadd.f32 %v2619, %v2707
  %2709 = vmatprep.mubr.f32.mxu0 0.0
  %2710 = vmatmul.mubr.f32.gmra.mrb[0].mxu0 %v2473
  %v2711 = vpop.f32.mrb[0].mxu0
  %v2712 = vadd.f32 %v2623, %v2711
  %v2713 = vpop.f32.mrb[0].mxu0
  %v2714 = vadd.f32 %v2625, %v2713
  %2715 = vmatprep.mubr.f32.mxu0 0.0
  %2716 = vmatmul.mubr.f32.gmra.mrb[0].mxu0 %v2474
  %v2717 = vpop.f32.mrb[0].mxu0
  %v2718 = vadd.f32 %v2629, %v2717
  %v2719 = vpop.f32.mrb[0].mxu0
  %v2720 = vadd.f32 %v2631, %v2719
  %2721 = vdwg.mxu0
  %v2722 = vld [vmem:[#allocation2 + $0x8] sm:$0xff]
  %v2723 = vld [vmem:[#allocation2 + $0x10] sm:$0xff]
  %v2724 = vld [vmem:[#allocation2 + $0x18] sm:$0xff]
  %v2725 = vld [vmem:[#allocation2 + $0x20] sm:$0xff]
  %s2726 = scalar_lea.vmem %s3, 512
  %v2727 = vld [vmem:[%s2726] sm:$0xff]
  %v2728 = vld [vmem:[%s2726 + $0x8] sm:$0xff]
  %v2729 = vld [vmem:[%s2726 + $0x10] sm:$0xff]
  %v2730 = vld [vmem:[%s2726 + $0x18] sm:$0xff]
  %v2731 = vld [vmem:[%s2726 + $0x20] sm:$0xff]
  %v2732 = vld [vmem:[%s2726 + $0x28] sm:$0xff]
  %v2733 = vld [vmem:[%s2726 + $0x30] sm:$0xff]
  %v2734 = vld [vmem:[%s2726 + $0x38] sm:$0xff]
  %v2735 = vld [vmem:[%s2726 + $0x40] sm:$0xff]
  %v2736 = vld [vmem:[%s2726 + $0x48] sm:$0xff]
  %v2737 = vld [vmem:[%s2726 + $0x50] sm:$0xff]
  %v2738 = vld [vmem:[%s2726 + $0x58] sm:$0xff]
  %v2739 = vld [vmem:[%s2726 + $0x60] sm:$0xff]
  %v2740 = vld [vmem:[%s2726 + $0x68] sm:$0xff]
  %v2741 = vld [vmem:[%s2726 + $0x70] sm:$0xff]
  %v2742 = vld [vmem:[%s2726 + $0x78] sm:$0xff]
  %v2743 = vld [vmem:[%s2726 + $0x80] sm:$0xff]
  %v2744 = vld [vmem:[%s2726 + $0x88] sm:$0xff]
  %v2745 = vld [vmem:[%s2726 + $0x90] sm:$0xff]
  %v2746 = vld [vmem:[%s2726 + $0x98] sm:$0xff]
  %v2747 = vld [vmem:[%s2726 + $0xa0] sm:$0xff]
  %v2748 = vld [vmem:[%s2726 + $0xa8] sm:$0xff]
  %v2749 = vld [vmem:[%s2726 + $0xb0] sm:$0xff]
  %v2750 = vld [vmem:[%s2726 + $0xb8] sm:$0xff]
  %v2751 = vld [vmem:[%s2726 + $0xc0] sm:$0xff]
  %v2752 = vld [vmem:[%s2726 + $0xc8] sm:$0xff]
  %v2753 = vld [vmem:[%s2726 + $0xd0] sm:$0xff]
  %v2754 = vld [vmem:[%s2726 + $0xd8] sm:$0xff]
  %v2755 = vld [vmem:[%s2726 + $0xe0] sm:$0xff]
  %v2756 = vld [vmem:[%s2726 + $0xe8] sm:$0xff]
  %v2757 = vld [vmem:[%s2726 + $0xf0] sm:$0xff]
  %v2758 = vld [vmem:[%s2726 + $0xf8] sm:$0xff]
  %2759 = vmatprep.subr.mxu0 %v2728
  %2760 = vmatpush1.msra.mxu0 %v2727
  %2761 = vmatprep.subr.mxu0 %v2730
  %2762 = vmatpush1.msra.mxu0 %v2729
  %2763 = vmatprep.subr.mxu0 %v2732
  %2764 = vmatpush1.msra.mxu0 %v2731
  %2765 = vmatprep.subr.mxu0 %v2734
  %2766 = vmatpush1.msra.mxu0 %v2733
  %2767 = vmatprep.subr.mxu0 %v2736
  %2768 = vmatpush1.msra.mxu0 %v2735
  %2769 = vmatprep.subr.mxu0 %v2738
  %2770 = vmatpush1.msra.mxu0 %v2737
  %2771 = vmatprep.subr.mxu0 %v2740
  %2772 = vmatpush1.msra.mxu0 %v2739
  %2773 = vmatprep.subr.mxu0 %v2742
  %2774 = vmatpush1.msra.mxu0 %v2741
  %2775 = vmatprep.subr.mxu0 %v2744
  %2776 = vmatpush1.msra.mxu0 %v2743
  %2777 = vmatprep.subr.mxu0 %v2746
  %2778 = vmatpush1.msra.mxu0 %v2745
  %2779 = vmatprep.subr.mxu0 %v2748
  %2780 = vmatpush1.msra.mxu0 %v2747
  %2781 = vmatprep.subr.mxu0 %v2750
  %2782 = vmatpush1.msra.mxu0 %v2749
  %2783 = vmatprep.subr.mxu0 %v2752
  %2784 = vmatpush1.msra.mxu0 %v2751
  %2785 = vmatprep.subr.mxu0 %v2754
  %2786 = vmatpush1.msra.mxu0 %v2753
  %2787 = vmatprep.subr.mxu0 %v2756
  %2788 = vmatpush1.msra.mxu0 %v2755
  %2789 = vmatprep.subr.mxu0 %v2758
  %2790 = vmatpush1.msra.mxu0 %v2757
  %2791 = vmatprep.subr.mxu0 0.0
  %2792 = vmatpush1.msra.mxu0 0.0
  %2793 = vmatprep.subr.mxu0 0.0
  %2794 = vmatpush1.msra.mxu0 0.0
  %2795 = vmatprep.subr.mxu0 0.0
  %2796 = vmatpush1.msra.mxu0 0.0
  %2797 = vmatprep.subr.mxu0 0.0
  %2798 = vmatpush1.msra.mxu0 0.0
  %2799 = vmatprep.subr.mxu0 0.0
  %2800 = vmatpush1.msra.mxu0 0.0
  %2801 = vmatprep.subr.mxu0 0.0
  %2802 = vmatpush1.msra.mxu0 0.0
  %2803 = vmatprep.subr.mxu0 0.0
  %2804 = vmatpush1.msra.mxu0 0.0
  %2805 = vmatprep.subr.mxu0 0.0
  %2806 = vmatpush1.msra.mxu0 0.0
  %2807 = vmatprep.subr.mxu0 0.0
  %2808 = vmatpush1.msra.mxu0 0.0
  %2809 = vmatprep.subr.mxu0 0.0
  %2810 = vmatpush1.msra.mxu0 0.0
  %2811 = vmatprep.subr.mxu0 0.0
  %2812 = vmatpush1.msra.mxu0 0.0
  %2813 = vmatprep.subr.mxu0 0.0
  %2814 = vmatpush1.msra.mxu0 0.0
  %2815 = vmatprep.subr.mxu0 0.0
  %2816 = vmatpush1.msra.mxu0 0.0
  %2817 = vmatprep.subr.mxu0 0.0
  %2818 = vmatpush1.msra.mxu0 0.0
  %2819 = vmatprep.subr.mxu0 0.0
  %2820 = vmatpush1.msra.mxu0 0.0
  %2821 = vmatprep.subr.mxu0 0.0
  %2822 = vmatpush1.msra.mxu0 0.0
  %2823 = vmatprep.mubr.f32.mxu0 0.0
  %2824 = vmatmul.mubr.f32.gmra.mrb[0].mxu0 %v2722
  %v2825 = vpop.f32.mrb[0].mxu0
  %v2826 = vadd.f32 0.0, %v2825
  %v2827 = vpop.f32.mrb[0].mxu0
  %v2828 = vadd.f32 0.0, %v2827
  %2829 = vmatprep.mubr.f32.mxu0 0.0
  %2830 = vmatmul.mubr.f32.gmra.mrb[0].mxu0 %v2723
  %v2831 = vpop.f32.mrb[0].mxu0
  %v2832 = vadd.f32 0.0, %v2831
  %v2833 = vpop.f32.mrb[0].mxu0
  %v2834 = vadd.f32 0.0, %v2833
  %2835 = vmatprep.mubr.f32.mxu0 0.0
  %2836 = vmatmul.mubr.f32.gmra.mrb[0].mxu0 %v2724
  %v2837 = vpop.f32.mrb[0].mxu0
  %v2838 = vadd.f32 0.0, %v2837
  %v2839 = vpop.f32.mrb[0].mxu0
  %v2840 = vadd.f32 0.0, %v2839
  %2841 = vmatprep.mubr.f32.mxu0 0.0
  %2842 = vmatmul.mubr.f32.gmra.mrb[0].mxu0 %v2725
  %v2843 = vpop.f32.mrb[0].mxu0
  %v2844 = vadd.f32 0.0, %v2843
  %v2845 = vpop.f32.mrb[0].mxu0
  %v2846 = vadd.f32 0.0, %v2845
  %2847 = vdwg.mxu0
  %v2848 = vadd.f32 %v2700, %v2826
  %v2849 = vadd.f32 %v2702, %v2828
  %v2850 = vadd.f32 %v2706, %v2832
  %v2851 = vadd.f32 %v2708, %v2834
  %v2852 = vadd.f32 %v2712, %v2838
  %v2853 = vadd.f32 %v2714, %v2840
  %v2854 = vadd.f32 %v2718, %v2844
  %v2855 = vadd.f32 %v2720, %v2846
  %v2856 = vld [vmem:[#allocation2 + $0x38] sm:$0xff]
  %v2857 = vld [vmem:[#allocation2 + $0x40] sm:$0xff]
  %v2858 = vld [vmem:[#allocation2 + $0x48] sm:$0xff]
  %v2859 = vld [vmem:[#allocation2 + $0x50] sm:$0xff]
  %s2860 = scalar_lea.vmem %s3, 768
  %v2861 = vld [vmem:[%s2860] sm:$0xff]
  %v2862 = vld [vmem:[%s2860 + $0x8] sm:$0xff]
  %v2863 = vld [vmem:[%s2860 + $0x10] sm:$0xff]
  %v2864 = vld [vmem:[%s2860 + $0x18] sm:$0xff]
  %v2865 = vld [vmem:[%s2860 + $0x20] sm:$0xff]
  %v2866 = vld [vmem:[%s2860 + $0x28] sm:$0xff]
  %v2867 = vld [vmem:[%s2860 + $0x30] sm:$0xff]
  %v2868 = vld [vmem:[%s2860 + $0x38] sm:$0xff]
  %v2869 = vld [vmem:[%s2860 + $0x40] sm:$0xff]
  %v2870 = vld [vmem:[%s2860 + $0x48] sm:$0xff]
  %v2871 = vld [vmem:[%s2860 + $0x50] sm:$0xff]
  %v2872 = vld [vmem:[%s2860 + $0x58] sm:$0xff]
  %v2873 = vld [vmem:[%s2860 + $0x60] sm:$0xff]
  %v2874 = vld [vmem:[%s2860 + $0x68] sm:$0xff]
  %v2875 = vld [vmem:[%s2860 + $0x70] sm:$0xff]
  %v2876 = vld [vmem:[%s2860 + $0x78] sm:$0xff]
  %v2877 = vld [vmem:[%s2860 + $0x80] sm:$0xff]
  %v2878 = vld [vmem:[%s2860 + $0x88] sm:$0xff]
  %v2879 = vld [vmem:[%s2860 + $0x90] sm:$0xff]
  %v2880 = vld [vmem:[%s2860 + $0x98] sm:$0xff]
  %v2881 = vld [vmem:[%s2860 + $0xa0] sm:$0xff]
  %v2882 = vld [vmem:[%s2860 + $0xa8] sm:$0xff]
  %v2883 = vld [vmem:[%s2860 + $0xb0] sm:$0xff]
  %v2884 = vld [vmem:[%s2860 + $0xb8] sm:$0xff]
  %v2885 = vld [vmem:[%s2860 + $0xc0] sm:$0xff]
  %v2886 = vld [vmem:[%s2860 + $0xc8] sm:$0xff]
  %v2887 = vld [vmem:[%s2860 + $0xd0] sm:$0xff]
  %v2888 = vld [vmem:[%s2860 + $0xd8] sm:$0xff]
  %v2889 = vld [vmem:[%s2860 + $0xe0] sm:$0xff]
  %v2890 = vld [vmem:[%s2860 + $0xe8] sm:$0xff]
  %v2891 = vld [vmem:[%s2860 + $0xf0] sm:$0xff]
  %v2892 = vld [vmem:[%s2860 + $0xf8] sm:$0xff]
  %2893 = vmatprep.subr.mxu0 %v2862
  %2894 = vmatpush1.msra.mxu0 %v2861
  %2895 = vmatprep.subr.mxu0 %v2864
  %2896 = vmatpush1.msra.mxu0 %v2863
  %2897 = vmatprep.subr.mxu0 %v2866
  %2898 = vmatpush1.msra.mxu0 %v2865
  %2899 = vmatprep.subr.mxu0 %v2868
  %2900 = vmatpush1.msra.mxu0 %v2867
  %2901 = vmatprep.subr.mxu0 %v2870
  %2902 = vmatpush1.msra.mxu0 %v2869
  %2903 = vmatprep.subr.mxu0 %v2872
  %2904 = vmatpush1.msra.mxu0 %v2871
  %2905 = vmatprep.subr.mxu0 %v2874
  %2906 = vmatpush1.msra.mxu0 %v2873
  %2907 = vmatprep.subr.mxu0 %v2876
  %2908 = vmatpush1.msra.mxu0 %v2875
  %2909 = vmatprep.subr.mxu0 %v2878
  %2910 = vmatpush1.msra.mxu0 %v2877
  %2911 = vmatprep.subr.mxu0 %v2880
  %2912 = vmatpush1.msra.mxu0 %v2879
  %2913 = vmatprep.subr.mxu0 %v2882
  %2914 = vmatpush1.msra.mxu0 %v2881
  %2915 = vmatprep.subr.mxu0 %v2884
  %2916 = vmatpush1.msra.mxu0 %v2883
  %2917 = vmatprep.subr.mxu0 %v2886
  %2918 = vmatpush1.msra.mxu0 %v2885
  %2919 = vmatprep.subr.mxu0 %v2888
  %2920 = vmatpush1.msra.mxu0 %v2887
  %2921 = vmatprep.subr.mxu0 %v2890
  %2922 = vmatpush1.msra.mxu0 %v2889
  %2923 = vmatprep.subr.mxu0 %v2892
  %2924 = vmatpush1.msra.mxu0 %v2891
  %2925 = vmatprep.subr.mxu0 0.0
  %2926 = vmatpush1.msra.mxu0 0.0
  %2927 = vmatprep.subr.mxu0 0.0
  %2928 = vmatpush1.msra.mxu0 0.0
  %2929 = vmatprep.subr.mxu0 0.0
  %2930 = vmatpush1.msra.mxu0 0.0
  %2931 = vmatprep.subr.mxu0 0.0
  %2932 = vmatpush1.msra.mxu0 0.0
  %2933 = vmatprep.subr.mxu0 0.0
  %2934 = vmatpush1.msra.mxu0 0.0
  %2935 = vmatprep.subr.mxu0 0.0
  %2936 = vmatpush1.msra.mxu0 0.0
  %2937 = vmatprep.subr.mxu0 0.0
  %2938 = vmatpush1.msra.mxu0 0.0
  %2939 = vmatprep.subr.mxu0 0.0
  %2940 = vmatpush1.msra.mxu0 0.0
  %2941 = vmatprep.subr.mxu0 0.0
  %2942 = vmatpush1.msra.mxu0 0.0
  %2943 = vmatprep.subr.mxu0 0.0
  %2944 = vmatpush1.msra.mxu0 0.0
  %2945 = vmatprep.subr.mxu0 0.0
  %2946 = vmatpush1.msra.mxu0 0.0
  %2947 = vmatprep.subr.mxu0 0.0
  %2948 = vmatpush1.msra.mxu0 0.0
  %2949 = vmatprep.subr.mxu0 0.0
  %2950 = vmatpush1.msra.mxu0 0.0
  %2951 = vmatprep.subr.mxu0 0.0
  %2952 = vmatpush1.msra.mxu0 0.0
  %2953 = vmatprep.subr.mxu0 0.0
  %2954 = vmatpush1.msra.mxu0 0.0
  %2955 = vmatprep.subr.mxu0 0.0
  %2956 = vmatpush1.msra.mxu0 0.0
  %2957 = vmatprep.mubr.f32.mxu0 0.0
  %2958 = vmatmul.mubr.f32.gmra.mrb[0].mxu0 %v2856
  %v2959 = vpop.f32.mrb[0].mxu0
  %v2960 = vadd.f32 0.0, %v2959
  %v2961 = vpop.f32.mrb[0].mxu0
  %v2962 = vadd.f32 0.0, %v2961
  %2963 = vmatprep.mubr.f32.mxu0 0.0
  %2964 = vmatmul.mubr.f32.gmra.mrb[0].mxu0 %v2857
  %v2965 = vpop.f32.mrb[0].mxu0
  %v2966 = vadd.f32 0.0, %v2965
  %v2967 = vpop.f32.mrb[0].mxu0
  %v2968 = vadd.f32 0.0, %v2967
  %2969 = vmatprep.mubr.f32.mxu0 0.0
  %2970 = vmatmul.mubr.f32.gmra.mrb[0].mxu0 %v2858
  %v2971 = vpop.f32.mrb[0].mxu0
  %v2972 = vadd.f32 0.0, %v2971
  %v2973 = vpop.f32.mrb[0].mxu0
  %v2974 = vadd.f32 0.0, %v2973
  %2975 = vmatprep.mubr.f32.mxu0 0.0
  %2976 = vmatmul.mubr.f32.gmra.mrb[0].mxu0 %v2859
  %v2977 = vpop.f32.mrb[0].mxu0
  %v2978 = vadd.f32 0.0, %v2977
  %v2979 = vpop.f32.mrb[0].mxu0
  %v2980 = vadd.f32 0.0, %v2979
  %2981 = vdwg.mxu0
  %v2982 = vadd.f32 %v2848, %v2960
  %v2983 = vadd.f32 %v2849, %v2962
  %v2984 = vadd.f32 %v2850, %v2966
  %v2985 = vadd.f32 %v2851, %v2968
  %v2986 = vadd.f32 %v2852, %v2972
  %v2987 = vadd.f32 %v2853, %v2974
  %v2988 = vadd.f32 %v2854, %v2978
  %v2989 = vadd.f32 %v2855, %v2980
  %v2990 = vld [vmem:[#allocation2 + $0x10] sm:$0xff]
  %v2991 = vld [vmem:[#allocation2 + $0x18] sm:$0xff]
  %v2992 = vld [vmem:[#allocation2 + $0x20] sm:$0xff]
  %v2993 = vld [vmem:[#allocation2 + $0x28] sm:$0xff]
  %s2994 = scalar_lea.vmem %s3, 1024
  %v2995 = vld [vmem:[%s2994] sm:$0xff]
  %v2996 = vld [vmem:[%s2994 + $0x8] sm:$0xff]
  %v2997 = vld [vmem:[%s2994 + $0x10] sm:$0xff]
  %v2998 = vld [vmem:[%s2994 + $0x18] sm:$0xff]
  %v2999 = vld [vmem:[%s2994 + $0x20] sm:$0xff]
  %v3000 = vld [vmem:[%s2994 + $0x28] sm:$0xff]
  %v3001 = vld [vmem:[%s2994 + $0x30] sm:$0xff]
  %v3002 = vld [vmem:[%s2994 + $0x38] sm:$0xff]
  %v3003 = vld [vmem:[%s2994 + $0x40] sm:$0xff]
  %v3004 = vld [vmem:[%s2994 + $0x48] sm:$0xff]
  %v3005 = vld [vmem:[%s2994 + $0x50] sm:$0xff]
  %v3006 = vld [vmem:[%s2994 + $0x58] sm:$0xff]
  %v3007 = vld [vmem:[%s2994 + $0x60] sm:$0xff]
  %v3008 = vld [vmem:[%s2994 + $0x68] sm:$0xff]
  %v3009 = vld [vmem:[%s2994 + $0x70] sm:$0xff]
  %v3010 = vld [vmem:[%s2994 + $0x78] sm:$0xff]
  %v3011 = vld [vmem:[%s2994 + $0x80] sm:$0xff]
  %v3012 = vld [vmem:[%s2994 + $0x88] sm:$0xff]
  %v3013 = vld [vmem:[%s2994 + $0x90] sm:$0xff]
  %v3014 = vld [vmem:[%s2994 + $0x98] sm:$0xff]
  %v3015 = vld [vmem:[%s2994 + $0xa0] sm:$0xff]
  %v3016 = vld [vmem:[%s2994 + $0xa8] sm:$0xff]
  %v3017 = vld [vmem:[%s2994 + $0xb0] sm:$0xff]
  %v3018 = vld [vmem:[%s2994 + $0xb8] sm:$0xff]
  %v3019 = vld [vmem:[%s2994 + $0xc0] sm:$0xff]
  %v3020 = vld [vmem:[%s2994 + $0xc8] sm:$0xff]
  %v3021 = vld [vmem:[%s2994 + $0xd0] sm:$0xff]
  %v3022 = vld [vmem:[%s2994 + $0xd8] sm:$0xff]
  %v3023 = vld [vmem:[%s2994 + $0xe0] sm:$0xff]
  %v3024 = vld [vmem:[%s2994 + $0xe8] sm:$0xff]
  %v3025 = vld [vmem:[%s2994 + $0xf0] sm:$0xff]
  %v3026 = vld [vmem:[%s2994 + $0xf8] sm:$0xff]
  %3027 = vmatprep.subr.mxu0 %v2996
  %3028 = vmatpush1.msra.mxu0 %v2995
  %3029 = vmatprep.subr.mxu0 %v2998
  %3030 = vmatpush1.msra.mxu0 %v2997
  %3031 = vmatprep.subr.mxu0 %v3000
  %3032 = vmatpush1.msra.mxu0 %v2999
  %3033 = vmatprep.subr.mxu0 %v3002
  %3034 = vmatpush1.msra.mxu0 %v3001
  %3035 = vmatprep.subr.mxu0 %v3004
  %3036 = vmatpush1.msra.mxu0 %v3003
  %3037 = vmatprep.subr.mxu0 %v3006
  %3038 = vmatpush1.msra.mxu0 %v3005
  %3039 = vmatprep.subr.mxu0 %v3008
  %3040 = vmatpush1.msra.mxu0 %v3007
  %3041 = vmatprep.subr.mxu0 %v3010
  %3042 = vmatpush1.msra.mxu0 %v3009
  %3043 = vmatprep.subr.mxu0 %v3012
  %3044 = vmatpush1.msra.mxu0 %v3011
  %3045 = vmatprep.subr.mxu0 %v3014
  %3046 = vmatpush1.msra.mxu0 %v3013
  %3047 = vmatprep.subr.mxu0 %v3016
  %3048 = vmatpush1.msra.mxu0 %v3015
  %3049 = vmatprep.subr.mxu0 %v3018
  %3050 = vmatpush1.msra.mxu0 %v3017
  %3051 = vmatprep.subr.mxu0 %v3020
  %3052 = vmatpush1.msra.mxu0 %v3019
  %3053 = vmatprep.subr.mxu0 %v3022
  %3054 = vmatpush1.msra.mxu0 %v3021
  %3055 = vmatprep.subr.mxu0 %v3024
  %3056 = vmatpush1.msra.mxu0 %v3023
  %3057 = vmatprep.subr.mxu0 %v3026
  %3058 = vmatpush1.msra.mxu0 %v3025
  %3059 = vmatprep.subr.mxu0 0.0
  %3060 = vmatpush1.msra.mxu0 0.0
  %3061 = vmatprep.subr.mxu0 0.0
  %3062 = vmatpush1.msra.mxu0 0.0
  %3063 = vmatprep.subr.mxu0 0.0
  %3064 = vmatpush1.msra.mxu0 0.0
  %3065 = vmatprep.subr.mxu0 0.0
  %3066 = vmatpush1.msra.mxu0 0.0
  %3067 = vmatprep.subr.mxu0 0.0
  %3068 = vmatpush1.msra.mxu0 0.0
  %3069 = vmatprep.subr.mxu0 0.0
  %3070 = vmatpush1.msra.mxu0 0.0
  %3071 = vmatprep.subr.mxu0 0.0
  %3072 = vmatpush1.msra.mxu0 0.0
  %3073 = vmatprep.subr.mxu0 0.0
  %3074 = vmatpush1.msra.mxu0 0.0
  %3075 = vmatprep.subr.mxu0 0.0
  %3076 = vmatpush1.msra.mxu0 0.0
  %3077 = vmatprep.subr.mxu0 0.0
  %3078 = vmatpush1.msra.mxu0 0.0
  %3079 = vmatprep.subr.mxu0 0.0
  %3080 = vmatpush1.msra.mxu0 0.0
  %3081 = vmatprep.subr.mxu0 0.0
  %3082 = vmatpush1.msra.mxu0 0.0
  %3083 = vmatprep.subr.mxu0 0.0
  %3084 = vmatpush1.msra.mxu0 0.0
  %3085 = vmatprep.subr.mxu0 0.0
  %3086 = vmatpush1.msra.mxu0 0.0
  %3087 = vmatprep.subr.mxu0 0.0
  %3088 = vmatpush1.msra.mxu0 0.0
  %3089 = vmatprep.subr.mxu0 0.0
  %3090 = vmatpush1.msra.mxu0 0.0
  %3091 = vmatprep.mubr.f32.mxu0 0.0
  %3092 = vmatmul.mubr.f32.gmra.mrb[0].mxu0 %v2990
  %v3093 = vpop.f32.mrb[0].mxu0
  %v3094 = vadd.f32 0.0, %v3093
  %v3095 = vpop.f32.mrb[0].mxu0
  %v3096 = vadd.f32 0.0, %v3095
  %3097 = vmatprep.mubr.f32.mxu0 0.0
  %3098 = vmatmul.mubr.f32.gmra.mrb[0].mxu0 %v2991
  %v3099 = vpop.f32.mrb[0].mxu0
  %v3100 = vadd.f32 0.0, %v3099
  %v3101 = vpop.f32.mrb[0].mxu0
  %v3102 = vadd.f32 0.0, %v3101
  %3103 = vmatprep.mubr.f32.mxu0 0.0
  %3104 = vmatmul.mubr.f32.gmra.mrb[0].mxu0 %v2992
  %v3105 = vpop.f32.mrb[0].mxu0
  %v3106 = vadd.f32 0.0, %v3105
  %v3107 = vpop.f32.mrb[0].mxu0
  %v3108 = vadd.f32 0.0, %v3107
  %3109 = vmatprep.mubr.f32.mxu0 0.0
  %3110 = vmatmul.mubr.f32.gmra.mrb[0].mxu0 %v2993
  %v3111 = vpop.f32.mrb[0].mxu0
  %v3112 = vadd.f32 0.0, %v3111
  %v3113 = vpop.f32.mrb[0].mxu0
  %v3114 = vadd.f32 0.0, %v3113
  %3115 = vdwg.mxu0
  %v3116 = vadd.f32 %v2982, %v3094
  %v3117 = vadd.f32 %v2983, %v3096
  %v3118 = vadd.f32 %v2984, %v3100
  %v3119 = vadd.f32 %v2985, %v3102
  %v3120 = vadd.f32 %v2986, %v3106
  %v3121 = vadd.f32 %v2987, %v3108
  %v3122 = vadd.f32 %v2988, %v3112
  %v3123 = vadd.f32 %v2989, %v3114
  %v3124 = vmax.f32 %v3116, %v3117
  %v3125 = vmax.f32 %v3118, %v3119
  %v3126 = vmax.f32 %v3120, %v3121
  %v3127 = vmax.f32 %v3122, %v3123
  %3128 = vmatprep.subr.mxu0 %v2513
  %3129 = vmatpush1.msra.mxu0 %v2512
  %3130 = vmatprep.subr.mxu0 %v2515
  %3131 = vmatpush1.msra.mxu0 %v2514
  %3132 = vmatprep.subr.mxu0 %v2517
  %3133 = vmatpush1.msra.mxu0 %v2516
  %3134 = vmatprep.subr.mxu0 %v2519
  %3135 = vmatpush1.msra.mxu0 %v2518
  %3136 = vmatprep.subr.mxu0 %v2521
  %3137 = vmatpush1.msra.mxu0 %v2520
  %3138 = vmatprep.subr.mxu0 %v2523
  %3139 = vmatpush1.msra.mxu0 %v2522
  %3140 = vmatprep.subr.mxu0 %v2525
  %3141 = vmatpush1.msra.mxu0 %v2524
  %3142 = vmatprep.subr.mxu0 %v2527
  %3143 = vmatpush1.msra.mxu0 %v2526
  %3144 = vmatprep.subr.mxu0 %v2529
  %3145 = vmatpush1.msra.mxu0 %v2528
  %3146 = vmatprep.subr.mxu0 %v2531
  %3147 = vmatpush1.msra.mxu0 %v2530
  %3148 = vmatprep.subr.mxu0 %v2533
  %3149 = vmatpush1.msra.mxu0 %v2532
  %3150 = vmatprep.subr.mxu0 %v2535
  %3151 = vmatpush1.msra.mxu0 %v2534
  %3152 = vmatprep.subr.mxu0 %v2537
  %3153 = vmatpush1.msra.mxu0 %v2536
  %3154 = vmatprep.subr.mxu0 %v2539
  %3155 = vmatpush1.msra.mxu0 %v2538
  %3156 = vmatprep.subr.mxu0 %v2541
  %3157 = vmatpush1.msra.mxu0 %v2540
  %3158 = vmatprep.subr.mxu0 %v2543
  %3159 = vmatpush1.msra.mxu0 %v2542
  %3160 = vmatprep.subr.mxu0 0.0
  %3161 = vmatpush1.msra.mxu0 0.0
  %3162 = vmatprep.subr.mxu0 0.0
  %3163 = vmatpush1.msra.mxu0 0.0
  %3164 = vmatprep.subr.mxu0 0.0
  %3165 = vmatpush1.msra.mxu0 0.0
  %3166 = vmatprep.subr.mxu0 0.0
  %3167 = vmatpush1.msra.mxu0 0.0
  %3168 = vmatprep.subr.mxu0 0.0
  %3169 = vmatpush1.msra.mxu0 0.0
  %3170 = vmatprep.subr.mxu0 0.0
  %3171 = vmatpush1.msra.mxu0 0.0
  %3172 = vmatprep.subr.mxu0 0.0
  %3173 = vmatpush1.msra.mxu0 0.0
  %3174 = vmatprep.subr.mxu0 0.0
  %3175 = vmatpush1.msra.mxu0 0.0
  %3176 = vmatprep.subr.mxu0 0.0
  %3177 = vmatpush1.msra.mxu0 0.0
  %3178 = vmatprep.subr.mxu0 0.0
  %3179 = vmatpush1.msra.mxu0 0.0
  %3180 = vmatprep.subr.mxu0 0.0
  %3181 = vmatpush1.msra.mxu0 0.0
  %3182 = vmatprep.subr.mxu0 0.0
  %3183 = vmatpush1.msra.mxu0 0.0
  %3184 = vmatprep.subr.mxu0 0.0
  %3185 = vmatpush1.msra.mxu0 0.0
  %3186 = vmatprep.subr.mxu0 0.0
  %3187 = vmatpush1.msra.mxu0 0.0
  %3188 = vmatprep.subr.mxu0 0.0
  %3189 = vmatpush1.msra.mxu0 0.0
  %3190 = vmatprep.subr.mxu0 0.0
  %3191 = vmatpush1.msra.mxu0 0.0
  %3192 = vmatprep.mubr.f32.mxu0 0.0
  %3193 = vmatmul.mubr.f32.gmra.mrb[0].mxu0 %v2722
  %v3194 = vpop.f32.mrb[0].mxu0
  %v3195 = vadd.f32 0.0, %v3194
  %v3196 = vpop.f32.mrb[0].mxu0
  %v3197 = vadd.f32 0.0, %v3196
  %3198 = vmatprep.mubr.f32.mxu0 0.0
  %3199 = vmatmul.mubr.f32.gmra.mrb[0].mxu0 %v2723
  %v3200 = vpop.f32.mrb[0].mxu0
  %v3201 = vadd.f32 0.0, %v3200
  %v3202 = vpop.f32.mrb[0].mxu0
  %v3203 = vadd.f32 0.0, %v3202
  %3204 = vmatprep.mubr.f32.mxu0 0.0
  %3205 = vmatmul.mubr.f32.gmra.mrb[0].mxu0 %v2724
  %v3206 = vpop.f32.mrb[0].mxu0
  %v3207 = vadd.f32 0.0, %v3206
  %v3208 = vpop.f32.mrb[0].mxu0
  %v3209 = vadd.f32 0.0, %v3208
  %3210 = vmatprep.mubr.f32.mxu0 0.0
  %3211 = vmatmul.mubr.f32.gmra.mrb[0].mxu0 %v2725
  %v3212 = vpop.f32.mrb[0].mxu0
  %v3213 = vadd.f32 0.0, %v3212
  %v3214 = vpop.f32.mrb[0].mxu0
  %v3215 = vadd.f32 0.0, %v3214
  %3216 = vdwg.mxu0
  %3217 = vmatprep.subr.mxu0 %v2476
  %3218 = vmatpush1.msra.mxu0 %v2475
  %3219 = vmatprep.subr.mxu0 %v2478
  %3220 = vmatpush1.msra.mxu0 %v2477
  %3221 = vmatprep.subr.mxu0 %v2480
  %3222 = vmatpush1.msra.mxu0 %v2479
  %3223 = vmatprep.subr.mxu0 %v2482
  %3224 = vmatpush1.msra.mxu0 %v2481
  %3225 = vmatprep.subr.mxu0 %v2484
  %3226 = vmatpush1.msra.mxu0 %v2483
  %3227 = vmatprep.subr.mxu0 %v2486
  %3228 = vmatpush1.msra.mxu0 %v2485
  %3229 = vmatprep.subr.mxu0 %v2488
  %3230 = vmatpush1.msra.mxu0 %v2487
  %3231 = vmatprep.subr.mxu0 %v2490
  %3232 = vmatpush1.msra.mxu0 %v2489
  %3233 = vmatprep.subr.mxu0 %v2492
  %3234 = vmatpush1.msra.mxu0 %v2491
  %3235 = vmatprep.subr.mxu0 %v2494
  %3236 = vmatpush1.msra.mxu0 %v2493
  %3237 = vmatprep.subr.mxu0 %v2496
  %3238 = vmatpush1.msra.mxu0 %v2495
  %3239 = vmatprep.subr.mxu0 %v2498
  %3240 = vmatpush1.msra.mxu0 %v2497
  %3241 = vmatprep.subr.mxu0 %v2500
  %3242 = vmatpush1.msra.mxu0 %v2499
  %3243 = vmatprep.subr.mxu0 %v2502
  %3244 = vmatpush1.msra.mxu0 %v2501
  %3245 = vmatprep.subr.mxu0 %v2504
  %3246 = vmatpush1.msra.mxu0 %v2503
  %3247 = vmatprep.subr.mxu0 %v2506
  %3248 = vmatpush1.msra.mxu0 %v2505
  %3249 = vmatprep.subr.mxu0 0.0
  %3250 = vmatpush1.msra.mxu0 0.0
  %3251 = vmatprep.subr.mxu0 0.0
  %3252 = vmatpush1.msra.mxu0 0.0
  %3253 = vmatprep.subr.mxu0 0.0
  %3254 = vmatpush1.msra.mxu0 0.0
  %3255 = vmatprep.subr.mxu0 0.0
  %3256 = vmatpush1.msra.mxu0 0.0
  %3257 = vmatprep.subr.mxu0 0.0
  %3258 = vmatpush1.msra.mxu0 0.0
  %3259 = vmatprep.subr.mxu0 0.0
  %3260 = vmatpush1.msra.mxu0 0.0
  %3261 = vmatprep.subr.mxu0 0.0
  %3262 = vmatpush1.msra.mxu0 0.0
  %3263 = vmatprep.subr.mxu0 0.0
  %3264 = vmatpush1.msra.mxu0 0.0
  %3265 = vmatprep.subr.mxu0 0.0
  %3266 = vmatpush1.msra.mxu0 0.0
  %3267 = vmatprep.subr.mxu0 0.0
  %3268 = vmatpush1.msra.mxu0 0.0
  %3269 = vmatprep.subr.mxu0 0.0
  %3270 = vmatpush1.msra.mxu0 0.0
  %3271 = vmatprep.subr.mxu0 0.0
  %3272 = vmatpush1.msra.mxu0 0.0
  %3273 = vmatprep.subr.mxu0 0.0
  %3274 = vmatpush1.msra.mxu0 0.0
  %3275 = vmatprep.subr.mxu0 0.0
  %3276 = vmatpush1.msra.mxu0 0.0
  %3277 = vmatprep.subr.mxu0 0.0
  %3278 = vmatpush1.msra.mxu0 0.0
  %3279 = vmatprep.subr.mxu0 0.0
  %3280 = vmatpush1.msra.mxu0 0.0
  %3281 = vmatprep.mubr.f32.mxu0 0.0
  %3282 = vmatmul.mubr.f32.gmra.mrb[0].mxu0 %v2507
  %v3283 = vpop.f32.mrb[0].mxu0
  %v3284 = vadd.f32 %v3195, %v3283
  %v3285 = vpop.f32.mrb[0].mxu0
  %v3286 = vadd.f32 %v3197, %v3285
  %3287 = vmatprep.mubr.f32.mxu0 0.0
  %3288 = vmatmul.mubr.f32.gmra.mrb[0].mxu0 %v2508
  %v3289 = vpop.f32.mrb[0].mxu0
  %v3290 = vadd.f32 %v3201, %v3289
  %v3291 = vpop.f32.mrb[0].mxu0
  %v3292 = vadd.f32 %v3203, %v3291
  %3293 = vmatprep.mubr.f32.mxu0 0.0
  %3294 = vmatmul.mubr.f32.gmra.mrb[0].mxu0 %v2509
  %v3295 = vpop.f32.mrb[0].mxu0
  %v3296 = vadd.f32 %v3207, %v3295
  %v3297 = vpop.f32.mrb[0].mxu0
  %v3298 = vadd.f32 %v3209, %v3297
  %3299 = vmatprep.mubr.f32.mxu0 0.0
  %3300 = vmatmul.mubr.f32.gmra.mrb[0].mxu0 %v2510
  %v3301 = vpop.f32.mrb[0].mxu0
  %v3302 = vadd.f32 %v3213, %v3301
  %v3303 = vpop.f32.mrb[0].mxu0
  %v3304 = vadd.f32 %v3215, %v3303
  %3305 = vdwg.mxu0
  %3306 = vmatprep.subr.mxu0 %v2728
  %3307 = vmatpush1.msra.mxu0 %v2727
  %3308 = vmatprep.subr.mxu0 %v2730
  %3309 = vmatpush1.msra.mxu0 %v2729
  %3310 = vmatprep.subr.mxu0 %v2732
  %3311 = vmatpush1.msra.mxu0 %v2731
  %3312 = vmatprep.subr.mxu0 %v2734
  %3313 = vmatpush1.msra.mxu0 %v2733
  %3314 = vmatprep.subr.mxu0 %v2736
  %3315 = vmatpush1.msra.mxu0 %v2735
  %3316 = vmatprep.subr.mxu0 %v2738
  %3317 = vmatpush1.msra.mxu0 %v2737
  %3318 = vmatprep.subr.mxu0 %v2740
  %3319 = vmatpush1.msra.mxu0 %v2739
  %3320 = vmatprep.subr.mxu0 %v2742
  %3321 = vmatpush1.msra.mxu0 %v2741
  %3322 = vmatprep.subr.mxu0 %v2744
  %3323 = vmatpush1.msra.mxu0 %v2743
  %3324 = vmatprep.subr.mxu0 %v2746
  %3325 = vmatpush1.msra.mxu0 %v2745
  %3326 = vmatprep.subr.mxu0 %v2748
  %3327 = vmatpush1.msra.mxu0 %v2747
  %3328 = vmatprep.subr.mxu0 %v2750
  %3329 = vmatpush1.msra.mxu0 %v2749
  %3330 = vmatprep.subr.mxu0 %v2752
  %3331 = vmatpush1.msra.mxu0 %v2751
  %3332 = vmatprep.subr.mxu0 %v2754
  %3333 = vmatpush1.msra.mxu0 %v2753
  %3334 = vmatprep.subr.mxu0 %v2756
  %3335 = vmatpush1.msra.mxu0 %v2755
  %3336 = vmatprep.subr.mxu0 %v2758
  %3337 = vmatpush1.msra.mxu0 %v2757
  %3338 = vmatprep.subr.mxu0 0.0
  %3339 = vmatpush1.msra.mxu0 0.0
  %3340 = vmatprep.subr.mxu0 0.0
  %3341 = vmatpush1.msra.mxu0 0.0
  %3342 = vmatprep.subr.mxu0 0.0
  %3343 = vmatpush1.msra.mxu0 0.0
  %3344 = vmatprep.subr.mxu0 0.0
  %3345 = vmatpush1.msra.mxu0 0.0
  %3346 = vmatprep.subr.mxu0 0.0
  %3347 = vmatpush1.msra.mxu0 0.0
  %3348 = vmatprep.subr.mxu0 0.0
  %3349 = vmatpush1.msra.mxu0 0.0
  %3350 = vmatprep.subr.mxu0 0.0
  %3351 = vmatpush1.msra.mxu0 0.0
  %3352 = vmatprep.subr.mxu0 0.0
  %3353 = vmatpush1.msra.mxu0 0.0
  %3354 = vmatprep.subr.mxu0 0.0
  %3355 = vmatpush1.msra.mxu0 0.0
  %3356 = vmatprep.subr.mxu0 0.0
  %3357 = vmatpush1.msra.mxu0 0.0
  %3358 = vmatprep.subr.mxu0 0.0
  %3359 = vmatpush1.msra.mxu0 0.0
  %3360 = vmatprep.subr.mxu0 0.0
  %3361 = vmatpush1.msra.mxu0 0.0
  %3362 = vmatprep.subr.mxu0 0.0
  %3363 = vmatpush1.msra.mxu0 0.0
  %3364 = vmatprep.subr.mxu0 0.0
  %3365 = vmatpush1.msra.mxu0 0.0
  %3366 = vmatprep.subr.mxu0 0.0
  %3367 = vmatpush1.msra.mxu0 0.0
  %3368 = vmatprep.subr.mxu0 0.0
  %3369 = vmatpush1.msra.mxu0 0.0
  %3370 = vmatprep.mubr.f32.mxu0 0.0
  %3371 = vmatmul.mubr.f32.gmra.mrb[0].mxu0 %v2856
  %v3372 = vpop.f32.mrb[0].mxu0
  %v3373 = vadd.f32 0.0, %v3372
  %v3374 = vpop.f32.mrb[0].mxu0
  %v3375 = vadd.f32 0.0, %v3374
  %3376 = vmatprep.mubr.f32.mxu0 0.0
  %3377 = vmatmul.mubr.f32.gmra.mrb[0].mxu0 %v2857
  %v3378 = vpop.f32.mrb[0].mxu0
  %v3379 = vadd.f32 0.0, %v3378
  %v3380 = vpop.f32.mrb[0].mxu0
  %v3381 = vadd.f32 0.0, %v3380
  %3382 = vmatprep.mubr.f32.mxu0 0.0
  %3383 = vmatmul.mubr.f32.gmra.mrb[0].mxu0 %v2858
  %v3384 = vpop.f32.mrb[0].mxu0
  %v3385 = vadd.f32 0.0, %v3384
  %v3386 = vpop.f32.mrb[0].mxu0
  %v3387 = vadd.f32 0.0, %v3386
  %3388 = vmatprep.mubr.f32.mxu0 0.0
  %3389 = vmatmul.mubr.f32.gmra.mrb[0].mxu0 %v2859
  %v3390 = vpop.f32.mrb[0].mxu0
  %v3391 = vadd.f32 0.0, %v3390
  %v3392 = vpop.f32.mrb[0].mxu0
  %v3393 = vadd.f32 0.0, %v3392
  %3394 = vdwg.mxu0
  %v3395 = vadd.f32 %v3284, %v3373
  %v3396 = vadd.f32 %v3286, %v3375
  %v3397 = vadd.f32 %v3290, %v3379
  %v3398 = vadd.f32 %v3292, %v3381
  %v3399 = vadd.f32 %v3296, %v3385
  %v3400 = vadd.f32 %v3298, %v3387
  %v3401 = vadd.f32 %v3302, %v3391
  %v3402 = vadd.f32 %v3304, %v3393
  %3403 = vmatprep.subr.mxu0 %v2862
  %3404 = vmatpush1.msra.mxu0 %v2861
  %3405 = vmatprep.subr.mxu0 %v2864
  %3406 = vmatpush1.msra.mxu0 %v2863
  %3407 = vmatprep.subr.mxu0 %v2866
  %3408 = vmatpush1.msra.mxu0 %v2865
  %3409 = vmatprep.subr.mxu0 %v2868
  %3410 = vmatpush1.msra.mxu0 %v2867
  %3411 = vmatprep.subr.mxu0 %v2870
  %3412 = vmatpush1.msra.mxu0 %v2869
  %3413 = vmatprep.subr.mxu0 %v2872
  %3414 = vmatpush1.msra.mxu0 %v2871
  %3415 = vmatprep.subr.mxu0 %v2874
  %3416 = vmatpush1.msra.mxu0 %v2873
  %3417 = vmatprep.subr.mxu0 %v2876
  %3418 = vmatpush1.msra.mxu0 %v2875
  %3419 = vmatprep.subr.mxu0 %v2878
  %3420 = vmatpush1.msra.mxu0 %v2877
  %3421 = vmatprep.subr.mxu0 %v2880
  %3422 = vmatpush1.msra.mxu0 %v2879
  %3423 = vmatprep.subr.mxu0 %v2882
  %3424 = vmatpush1.msra.mxu0 %v2881
  %3425 = vmatprep.subr.mxu0 %v2884
  %3426 = vmatpush1.msra.mxu0 %v2883
  %3427 = vmatprep.subr.mxu0 %v2886
  %3428 = vmatpush1.msra.mxu0 %v2885
  %3429 = vmatprep.subr.mxu0 %v2888
  %3430 = vmatpush1.msra.mxu0 %v2887
  %3431 = vmatprep.subr.mxu0 %v2890
  %3432 = vmatpush1.msra.mxu0 %v2889
  %3433 = vmatprep.subr.mxu0 %v2892
  %3434 = vmatpush1.msra.mxu0 %v2891
  %3435 = vmatprep.subr.mxu0 0.0
  %3436 = vmatpush1.msra.mxu0 0.0
  %3437 = vmatprep.subr.mxu0 0.0
  %3438 = vmatpush1.msra.mxu0 0.0
  %3439 = vmatprep.subr.mxu0 0.0
  %3440 = vmatpush1.msra.mxu0 0.0
  %3441 = vmatprep.subr.mxu0 0.0
  %3442 = vmatpush1.msra.mxu0 0.0
  %3443 = vmatprep.subr.mxu0 0.0
  %3444 = vmatpush1.msra.mxu0 0.0
  %3445 = vmatprep.subr.mxu0 0.0
  %3446 = vmatpush1.msra.mxu0 0.0
  %3447 = vmatprep.subr.mxu0 0.0
  %3448 = vmatpush1.msra.mxu0 0.0
  %3449 = vmatprep.subr.mxu0 0.0
  %3450 = vmatpush1.msra.mxu0 0.0
  %3451 = vmatprep.subr.mxu0 0.0
  %3452 = vmatpush1.msra.mxu0 0.0
  %3453 = vmatprep.subr.mxu0 0.0
  %3454 = vmatpush1.msra.mxu0 0.0
  %3455 = vmatprep.subr.mxu0 0.0
  %3456 = vmatpush1.msra.mxu0 0.0
  %3457 = vmatprep.subr.mxu0 0.0
  %3458 = vmatpush1.msra.mxu0 0.0
  %3459 = vmatprep.subr.mxu0 0.0
  %3460 = vmatpush1.msra.mxu0 0.0
  %3461 = vmatprep.subr.mxu0 0.0
  %3462 = vmatpush1.msra.mxu0 0.0
  %3463 = vmatprep.subr.mxu0 0.0
  %3464 = vmatpush1.msra.mxu0 0.0
  %3465 = vmatprep.subr.mxu0 0.0
  %3466 = vmatpush1.msra.mxu0 0.0
  %3467 = vmatprep.mubr.f32.mxu0 0.0
  %3468 = vmatmul.mubr.f32.gmra.mrb[0].mxu0 %v2990
  %v3469 = vpop.f32.mrb[0].mxu0
  %v3470 = vadd.f32 0.0, %v3469
  %v3471 = vpop.f32.mrb[0].mxu0
  %v3472 = vadd.f32 0.0, %v3471
  %3473 = vmatprep.mubr.f32.mxu0 0.0
  %3474 = vmatmul.mubr.f32.gmra.mrb[0].mxu0 %v2991
  %v3475 = vpop.f32.mrb[0].mxu0
  %v3476 = vadd.f32 0.0, %v3475
  %v3477 = vpop.f32.mrb[0].mxu0
  %v3478 = vadd.f32 0.0, %v3477
  %3479 = vmatprep.mubr.f32.mxu0 0.0
  %3480 = vmatmul.mubr.f32.gmra.mrb[0].mxu0 %v2992
  %v3481 = vpop.f32.mrb[0].mxu0
  %v3482 = vadd.f32 0.0, %v3481
  %v3483 = vpop.f32.mrb[0].mxu0
  %v3484 = vadd.f32 0.0, %v3483
  %3485 = vmatprep.mubr.f32.mxu0 0.0
  %3486 = vmatmul.mubr.f32.gmra.mrb[0].mxu0 %v2993
  %v3487 = vpop.f32.mrb[0].mxu0
  %v3488 = vadd.f32 0.0, %v3487
  %v3489 = vpop.f32.mrb[0].mxu0
  %v3490 = vadd.f32 0.0, %v3489
  %3491 = vdwg.mxu0
  %v3492 = vadd.f32 %v3395, %v3470
  %v3493 = vadd.f32 %v3396, %v3472
  %v3494 = vadd.f32 %v3397, %v3476
  %v3495 = vadd.f32 %v3398, %v3478
  %v3496 = vadd.f32 %v3399, %v3482
  %v3497 = vadd.f32 %v3400, %v3484
  %v3498 = vadd.f32 %v3401, %v3488
  %v3499 = vadd.f32 %v3402, %v3490
  %v3500 = vld [vmem:[#allocation2 + $0x40] sm:$0xff]
  %v3501 = vld [vmem:[#allocation2 + $0x48] sm:$0xff]
  %v3502 = vld [vmem:[#allocation2 + $0x50] sm:$0xff]
  %v3503 = vld [vmem:[#allocation2 + $0x58] sm:$0xff]
  %3504 = vmatprep.subr.mxu0 %v2996
  %3505 = vmatpush1.msra.mxu0 %v2995
  %3506 = vmatprep.subr.mxu0 %v2998
  %3507 = vmatpush1.msra.mxu0 %v2997
  %3508 = vmatprep.subr.mxu0 %v3000
  %3509 = vmatpush1.msra.mxu0 %v2999
  %3510 = vmatprep.subr.mxu0 %v3002
  %3511 = vmatpush1.msra.mxu0 %v3001
  %3512 = vmatprep.subr.mxu0 %v3004
  %3513 = vmatpush1.msra.mxu0 %v3003
  %3514 = vmatprep.subr.mxu0 %v3006
  %3515 = vmatpush1.msra.mxu0 %v3005
  %3516 = vmatprep.subr.mxu0 %v3008
  %3517 = vmatpush1.msra.mxu0 %v3007
  %3518 = vmatprep.subr.mxu0 %v3010
  %3519 = vmatpush1.msra.mxu0 %v3009
  %3520 = vmatprep.subr.mxu0 %v3012
  %3521 = vmatpush1.msra.mxu0 %v3011
  %3522 = vmatprep.subr.mxu0 %v3014
  %3523 = vmatpush1.msra.mxu0 %v3013
  %3524 = vmatprep.subr.mxu0 %v3016
  %3525 = vmatpush1.msra.mxu0 %v3015
  %3526 = vmatprep.subr.mxu0 %v3018
  %3527 = vmatpush1.msra.mxu0 %v3017
  %3528 = vmatprep.subr.mxu0 %v3020
  %3529 = vmatpush1.msra.mxu0 %v3019
  %3530 = vmatprep.subr.mxu0 %v3022
  %3531 = vmatpush1.msra.mxu0 %v3021
  %3532 = vmatprep.subr.mxu0 %v3024
  %3533 = vmatpush1.msra.mxu0 %v3023
  %3534 = vmatprep.subr.mxu0 %v3026
  %3535 = vmatpush1.msra.mxu0 %v3025
  %3536 = vmatprep.subr.mxu0 0.0
  %3537 = vmatpush1.msra.mxu0 0.0
  %3538 = vmatprep.subr.mxu0 0.0
  %3539 = vmatpush1.msra.mxu0 0.0
  %3540 = vmatprep.subr.mxu0 0.0
  %3541 = vmatpush1.msra.mxu0 0.0
  %3542 = vmatprep.subr.mxu0 0.0
  %3543 = vmatpush1.msra.mxu0 0.0
  %3544 = vmatprep.subr.mxu0 0.0
  %3545 = vmatpush1.msra.mxu0 0.0
  %3546 = vmatprep.subr.mxu0 0.0
  %3547 = vmatpush1.msra.mxu0 0.0
  %3548 = vmatprep.subr.mxu0 0.0
  %3549 = vmatpush1.msra.mxu0 0.0
  %3550 = vmatprep.subr.mxu0 0.0
  %3551 = vmatpush1.msra.mxu0 0.0
  %3552 = vmatprep.subr.mxu0 0.0
  %3553 = vmatpush1.msra.mxu0 0.0
  %3554 = vmatprep.subr.mxu0 0.0
  %3555 = vmatpush1.msra.mxu0 0.0
  %3556 = vmatprep.subr.mxu0 0.0
  %3557 = vmatpush1.msra.mxu0 0.0
  %3558 = vmatprep.subr.mxu0 0.0
  %3559 = vmatpush1.msra.mxu0 0.0
  %3560 = vmatprep.subr.mxu0 0.0
  %3561 = vmatpush1.msra.mxu0 0.0
  %3562 = vmatprep.subr.mxu0 0.0
  %3563 = vmatpush1.msra.mxu0 0.0
  %3564 = vmatprep.subr.mxu0 0.0
  %3565 = vmatpush1.msra.mxu0 0.0
  %3566 = vmatprep.subr.mxu0 0.0
  %3567 = vmatpush1.msra.mxu0 0.0
  %3568 = vmatprep.mubr.f32.mxu0 0.0
  %3569 = vmatmul.mubr.f32.gmra.mrb[0].mxu0 %v3500
  %v3570 = vpop.f32.mrb[0].mxu0
  %v3571 = vadd.f32 0.0, %v3570
  %v3572 = vpop.f32.mrb[0].mxu0
  %v3573 = vadd.f32 0.0, %v3572
  %3574 = vmatprep.mubr.f32.mxu0 0.0
  %3575 = vmatmul.mubr.f32.gmra.mrb[0].mxu0 %v3501
  %v3576 = vpop.f32.mrb[0].mxu0
  %v3577 = vadd.f32 0.0, %v3576
  %v3578 = vpop.f32.mrb[0].mxu0
  %v3579 = vadd.f32 0.0, %v3578
  %3580 = vmatprep.mubr.f32.mxu0 0.0
  %3581 = vmatmul.mubr.f32.gmra.mrb[0].mxu0 %v3502
  %v3582 = vpop.f32.mrb[0].mxu0
  %v3583 = vadd.f32 0.0, %v3582
  %v3584 = vpop.f32.mrb[0].mxu0
  %v3585 = vadd.f32 0.0, %v3584
  %3586 = vmatprep.mubr.f32.mxu0 0.0
  %3587 = vmatmul.mubr.f32.gmra.mrb[0].mxu0 %v3503
  %v3588 = vpop.f32.mrb[0].mxu0
  %v3589 = vadd.f32 0.0, %v3588
  %v3590 = vpop.f32.mrb[0].mxu0
  %v3591 = vadd.f32 0.0, %v3590
  %3592 = vdwg.mxu0
  %v3593 = vadd.f32 %v3492, %v3571
  %v3594 = vadd.f32 %v3493, %v3573
  %v3595 = vadd.f32 %v3494, %v3577
  %v3596 = vadd.f32 %v3495, %v3579
  %v3597 = vadd.f32 %v3496, %v3583
  %v3598 = vadd.f32 %v3497, %v3585
  %v3599 = vadd.f32 %v3498, %v3589
  %v3600 = vadd.f32 %v3499, %v3591
  %v3601 = vmax.f32 %v3593, %v3594
  %v3602 = vmax.f32 %v3595, %v3596
  %v3603 = vmax.f32 %v3597, %v3598
  %v3604 = vmax.f32 %v3599, %v3600
  %v3605 = vmax.f32 %v3124, %v3601
  %v3606 = vmax.f32 %v3125, %v3602
  %v3607 = vmax.f32 %v3126, %v3603
  %v3608 = vmax.f32 %v3127, %v3604
  %v3610 = vlaneseq
  %v3611 = vshrl.u32 %v3610, 7
  %v3612 = vsub.s32 0, %v3611
  %v3613 = vrot.slane %v2470, %v3612
  %v3615 = vadd.f32 %v3605, %v3613
  %v3616 = vadd.f32 %v3606, %v3613
  %v3617 = vadd.f32 %v3607, %v3613
  %v3618 = vadd.f32 %v3608, %v3613
  %v3619 = vmax.f32 %v3615, 0.0
  %v3620 = vmax.f32 %v3616, 0.0
  %v3621 = vmax.f32 %v3617, 0.0
  %v3622 = vmax.f32 %v3618, 0.0
  %3623 = vst [vmem:[#allocation3] sm:$0xff] %v3619
  %3624 = vst [vmem:[#allocation3 + $0x8] sm:$0xff] %v3620
  %3625 = vst [vmem:[#allocation3 + $0x10] sm:$0xff] %v3621
  %3626 = vst [vmem:[#allocation3 + $0x18] sm:$0xff] %v3622
  %v3627 = vld [vmem:[#allocation3] sm:$0xff]
  %v3628 = vld [vmem:[%s5] sm:$0xff]
  %v3629 = vld [vmem:[%s5 + $0x8] sm:$0xff]
  %v3630 = vld [vmem:[%s5 + $0x10] sm:$0xff]
  %v3631 = vld [vmem:[%s5 + $0x18] sm:$0xff]
  %v3632 = vld [vmem:[%s5 + $0x20] sm:$0xff]
  %v3633 = vld [vmem:[%s5 + $0x28] sm:$0xff]
  %v3634 = vld [vmem:[%s5 + $0x30] sm:$0xff]
  %v3635 = vld [vmem:[%s5 + $0x38] sm:$0xff]
  %v3636 = vld [vmem:[%s5 + $0x40] sm:$0xff]
  %v3637 = vld [vmem:[%s5 + $0x48] sm:$0xff]
  %v3638 = vld [vmem:[%s5 + $0x50] sm:$0xff]
  %v3639 = vld [vmem:[%s5 + $0x58] sm:$0xff]
  %v3640 = vld [vmem:[%s5 + $0x60] sm:$0xff]
  %v3641 = vld [vmem:[%s5 + $0x68] sm:$0xff]
  %v3642 = vld [vmem:[%s5 + $0x70] sm:$0xff]
  %v3643 = vld [vmem:[%s5 + $0x78] sm:$0xff]
  %v3644 = vld [vmem:[#allocation3 + $0x8] sm:$0xff]
  %s3645 = scalar_lea.vmem %s5, 128
  %v3646 = vld [vmem:[%s3645] sm:$0xff]
  %v3647 = vld [vmem:[%s3645 + $0x8] sm:$0xff]
  %v3648 = vld [vmem:[%s3645 + $0x10] sm:$0xff]
  %v3649 = vld [vmem:[%s3645 + $0x18] sm:$0xff]
  %v3650 = vld [vmem:[%s3645 + $0x20] sm:$0xff]
  %v3651 = vld [vmem:[%s3645 + $0x28] sm:$0xff]
  %v3652 = vld [vmem:[%s3645 + $0x30] sm:$0xff]
  %v3653 = vld [vmem:[%s3645 + $0x38] sm:$0xff]
  %v3654 = vld [vmem:[%s3645 + $0x40] sm:$0xff]
  %v3655 = vld [vmem:[%s3645 + $0x48] sm:$0xff]
  %v3656 = vld [vmem:[%s3645 + $0x50] sm:$0xff]
  %v3657 = vld [vmem:[%s3645 + $0x58] sm:$0xff]
  %v3658 = vld [vmem:[%s3645 + $0x60] sm:$0xff]
  %v3659 = vld [vmem:[%s3645 + $0x68] sm:$0xff]
  %v3660 = vld [vmem:[%s3645 + $0x70] sm:$0xff]
  %v3661 = vld [vmem:[%s3645 + $0x78] sm:$0xff]
  %3662 = vmatprep.subr.mxu0 0.0
  %3663 = vmatpush1.msra.mxu0 %v3646
  %3664 = vmatprep.subr.mxu0 0.0
  %3665 = vmatpush1.msra.mxu0 %v3647
  %3666 = vmatprep.subr.mxu0 0.0
  %3667 = vmatpush1.msra.mxu0 %v3648
  %3668 = vmatprep.subr.mxu0 0.0
  %3669 = vmatpush1.msra.mxu0 %v3649
  %3670 = vmatprep.subr.mxu0 0.0
  %3671 = vmatpush1.msra.mxu0 %v3650
  %3672 = vmatprep.subr.mxu0 0.0
  %3673 = vmatpush1.msra.mxu0 %v3651
  %3674 = vmatprep.subr.mxu0 0.0
  %3675 = vmatpush1.msra.mxu0 %v3652
  %3676 = vmatprep.subr.mxu0 0.0
  %3677 = vmatpush1.msra.mxu0 %v3653
  %3678 = vmatprep.subr.mxu0 0.0
  %3679 = vmatpush1.msra.mxu0 %v3654
  %3680 = vmatprep.subr.mxu0 0.0
  %3681 = vmatpush1.msra.mxu0 %v3655
  %3682 = vmatprep.subr.mxu0 0.0
  %3683 = vmatpush1.msra.mxu0 %v3656
  %3684 = vmatprep.subr.mxu0 0.0
  %3685 = vmatpush1.msra.mxu0 %v3657
  %3686 = vmatprep.subr.mxu0 0.0
  %3687 = vmatpush1.msra.mxu0 %v3658
  %3688 = vmatprep.subr.mxu0 0.0
  %3689 = vmatpush1.msra.mxu0 %v3659
  %3690 = vmatprep.subr.mxu0 0.0
  %3691 = vmatpush1.msra.mxu0 %v3660
  %3692 = vmatprep.subr.mxu0 0.0
  %3693 = vmatpush1.msra.mxu0 %v3661
  %3694 = vmatprep.subr.mxu0 0.0
  %3695 = vmatpush1.msra.mxu0 0.0
  %3696 = vmatprep.subr.mxu0 0.0
  %3697 = vmatpush1.msra.mxu0 0.0
  %3698 = vmatprep.subr.mxu0 0.0
  %3699 = vmatpush1.msra.mxu0 0.0
  %3700 = vmatprep.subr.mxu0 0.0
  %3701 = vmatpush1.msra.mxu0 0.0
  %3702 = vmatprep.subr.mxu0 0.0
  %3703 = vmatpush1.msra.mxu0 0.0
  %3704 = vmatprep.subr.mxu0 0.0
  %3705 = vmatpush1.msra.mxu0 0.0
  %3706 = vmatprep.subr.mxu0 0.0
  %3707 = vmatpush1.msra.mxu0 0.0
  %3708 = vmatprep.subr.mxu0 0.0
  %3709 = vmatpush1.msra.mxu0 0.0
  %3710 = vmatprep.subr.mxu0 0.0
  %3711 = vmatpush1.msra.mxu0 0.0
  %3712 = vmatprep.subr.mxu0 0.0
  %3713 = vmatpush1.msra.mxu0 0.0
  %3714 = vmatprep.subr.mxu0 0.0
  %3715 = vmatpush1.msra.mxu0 0.0
  %3716 = vmatprep.subr.mxu0 0.0
  %3717 = vmatpush1.msra.mxu0 0.0
  %3718 = vmatprep.subr.mxu0 0.0
  %3719 = vmatpush1.msra.mxu0 0.0
  %3720 = vmatprep.subr.mxu0 0.0
  %3721 = vmatpush1.msra.mxu0 0.0
  %3722 = vmatprep.subr.mxu0 0.0
  %3723 = vmatpush1.msra.mxu0 0.0
  %3724 = vmatprep.subr.mxu0 0.0
  %3725 = vmatpush1.msra.mxu0 0.0
  %3726 = vmatprep.mubr.f32.mxu0 0.0
  %3727 = vmatmul.mubr.f32.gmra.mrb[0].mxu0 %v3644
  %v3728 = vpop.f32.mrb[0].mxu0
  %v3729 = vadd.f32 0.0, %v3728
  %v3730 = vpop.f32.mrb[0].mxu0
  %3731 = vdwg.mxu0
  %3732 = vmatprep.subr.mxu0 0.0
  %3733 = vmatpush1.msra.mxu0 %v3628
  %3734 = vmatprep.subr.mxu0 0.0
  %3735 = vmatpush1.msra.mxu0 %v3629
  %3736 = vmatprep.subr.mxu0 0.0
  %3737 = vmatpush1.msra.mxu0 %v3630
  %3738 = vmatprep.subr.mxu0 0.0
  %3739 = vmatpush1.msra.mxu0 %v3631
  %3740 = vmatprep.subr.mxu0 0.0
  %3741 = vmatpush1.msra.mxu0 %v3632
  %3742 = vmatprep.subr.mxu0 0.0
  %3743 = vmatpush1.msra.mxu0 %v3633
  %3744 = vmatprep.subr.mxu0 0.0
  %3745 = vmatpush1.msra.mxu0 %v3634
  %3746 = vmatprep.subr.mxu0 0.0
  %3747 = vmatpush1.msra.mxu0 %v3635
  %3748 = vmatprep.subr.mxu0 0.0
  %3749 = vmatpush1.msra.mxu0 %v3636
  %3750 = vmatprep.subr.mxu0 0.0
  %3751 = vmatpush1.msra.mxu0 %v3637
  %3752 = vmatprep.subr.mxu0 0.0
  %3753 = vmatpush1.msra.mxu0 %v3638
  %3754 = vmatprep.subr.mxu0 0.0
  %3755 = vmatpush1.msra.mxu0 %v3639
  %3756 = vmatprep.subr.mxu0 0.0
  %3757 = vmatpush1.msra.mxu0 %v3640
  %3758 = vmatprep.subr.mxu0 0.0
  %3759 = vmatpush1.msra.mxu0 %v3641
  %3760 = vmatprep.subr.mxu0 0.0
  %3761 = vmatpush1.msra.mxu0 %v3642
  %3762 = vmatprep.subr.mxu0 0.0
  %3763 = vmatpush1.msra.mxu0 %v3643
  %3764 = vmatprep.subr.mxu0 0.0
  %3765 = vmatpush1.msra.mxu0 0.0
  %3766 = vmatprep.subr.mxu0 0.0
  %3767 = vmatpush1.msra.mxu0 0.0
  %3768 = vmatprep.subr.mxu0 0.0
  %3769 = vmatpush1.msra.mxu0 0.0
  %3770 = vmatprep.subr.mxu0 0.0
  %3771 = vmatpush1.msra.mxu0 0.0
  %3772 = vmatprep.subr.mxu0 0.0
  %3773 = vmatpush1.msra.mxu0 0.0
  %3774 = vmatprep.subr.mxu0 0.0
  %3775 = vmatpush1.msra.mxu0 0.0
  %3776 = vmatprep.subr.mxu0 0.0
  %3777 = vmatpush1.msra.mxu0 0.0
  %3778 = vmatprep.subr.mxu0 0.0
  %3779 = vmatpush1.msra.mxu0 0.0
  %3780 = vmatprep.subr.mxu0 0.0
  %3781 = vmatpush1.msra.mxu0 0.0
  %3782 = vmatprep.subr.mxu0 0.0
  %3783 = vmatpush1.msra.mxu0 0.0
  %3784 = vmatprep.subr.mxu0 0.0
  %3785 = vmatpush1.msra.mxu0 0.0
  %3786 = vmatprep.subr.mxu0 0.0
  %3787 = vmatpush1.msra.mxu0 0.0
  %3788 = vmatprep.subr.mxu0 0.0
  %3789 = vmatpush1.msra.mxu0 0.0
  %3790 = vmatprep.subr.mxu0 0.0
  %3791 = vmatpush1.msra.mxu0 0.0
  %3792 = vmatprep.subr.mxu0 0.0
  %3793 = vmatpush1.msra.mxu0 0.0
  %3794 = vmatprep.subr.mxu0 0.0
  %3795 = vmatpush1.msra.mxu0 0.0
  %3796 = vmatprep.mubr.f32.mxu0 0.0
  %3797 = vmatmul.mubr.f32.gmra.mrb[0].mxu0 %v3627
  %v3798 = vpop.f32.mrb[0].mxu0
  %v3799 = vadd.f32 %v3729, %v3798
  %v3800 = vpop.f32.mrb[0].mxu0
  %3801 = vdwg.mxu0
  %v3802 = vld [vmem:[#allocation3 + $0x10] sm:$0xff]
  %s3803 = scalar_lea.vmem %s5, 256
  %v3804 = vld [vmem:[%s3803] sm:$0xff]
  %v3805 = vld [vmem:[%s3803 + $0x8] sm:$0xff]
  %v3806 = vld [vmem:[%s3803 + $0x10] sm:$0xff]
  %v3807 = vld [vmem:[%s3803 + $0x18] sm:$0xff]
  %v3808 = vld [vmem:[%s3803 + $0x20] sm:$0xff]
  %v3809 = vld [vmem:[%s3803 + $0x28] sm:$0xff]
  %v3810 = vld [vmem:[%s3803 + $0x30] sm:$0xff]
  %v3811 = vld [vmem:[%s3803 + $0x38] sm:$0xff]
  %v3812 = vld [vmem:[%s3803 + $0x40] sm:$0xff]
  %v3813 = vld [vmem:[%s3803 + $0x48] sm:$0xff]
  %v3814 = vld [vmem:[%s3803 + $0x50] sm:$0xff]
  %v3815 = vld [vmem:[%s3803 + $0x58] sm:$0xff]
  %v3816 = vld [vmem:[%s3803 + $0x60] sm:$0xff]
  %v3817 = vld [vmem:[%s3803 + $0x68] sm:$0xff]
  %v3818 = vld [vmem:[%s3803 + $0x70] sm:$0xff]
  %v3819 = vld [vmem:[%s3803 + $0x78] sm:$0xff]
  %3820 = vmatprep.subr.mxu0 0.0
  %3821 = vmatpush1.msra.mxu0 %v3804
  %3822 = vmatprep.subr.mxu0 0.0
  %3823 = vmatpush1.msra.mxu0 %v3805
  %3824 = vmatprep.subr.mxu0 0.0
  %3825 = vmatpush1.msra.mxu0 %v3806
  %3826 = vmatprep.subr.mxu0 0.0
  %3827 = vmatpush1.msra.mxu0 %v3807
  %3828 = vmatprep.subr.mxu0 0.0
  %3829 = vmatpush1.msra.mxu0 %v3808
  %3830 = vmatprep.subr.mxu0 0.0
  %3831 = vmatpush1.msra.mxu0 %v3809
  %3832 = vmatprep.subr.mxu0 0.0
  %3833 = vmatpush1.msra.mxu0 %v3810
  %3834 = vmatprep.subr.mxu0 0.0
  %3835 = vmatpush1.msra.mxu0 %v3811
  %3836 = vmatprep.subr.mxu0 0.0
  %3837 = vmatpush1.msra.mxu0 %v3812
  %3838 = vmatprep.subr.mxu0 0.0
  %3839 = vmatpush1.msra.mxu0 %v3813
  %3840 = vmatprep.subr.mxu0 0.0
  %3841 = vmatpush1.msra.mxu0 %v3814
  %3842 = vmatprep.subr.mxu0 0.0
  %3843 = vmatpush1.msra.mxu0 %v3815
  %3844 = vmatprep.subr.mxu0 0.0
  %3845 = vmatpush1.msra.mxu0 %v3816
  %3846 = vmatprep.subr.mxu0 0.0
  %3847 = vmatpush1.msra.mxu0 %v3817
  %3848 = vmatprep.subr.mxu0 0.0
  %3849 = vmatpush1.msra.mxu0 %v3818
  %3850 = vmatprep.subr.mxu0 0.0
  %3851 = vmatpush1.msra.mxu0 %v3819
  %3852 = vmatprep.subr.mxu0 0.0
  %3853 = vmatpush1.msra.mxu0 0.0
  %3854 = vmatprep.subr.mxu0 0.0
  %3855 = vmatpush1.msra.mxu0 0.0
  %3856 = vmatprep.subr.mxu0 0.0
  %3857 = vmatpush1.msra.mxu0 0.0
  %3858 = vmatprep.subr.mxu0 0.0
  %3859 = vmatpush1.msra.mxu0 0.0
  %3860 = vmatprep.subr.mxu0 0.0
  %3861 = vmatpush1.msra.mxu0 0.0
  %3862 = vmatprep.subr.mxu0 0.0
  %3863 = vmatpush1.msra.mxu0 0.0
  %3864 = vmatprep.subr.mxu0 0.0
  %3865 = vmatpush1.msra.mxu0 0.0
  %3866 = vmatprep.subr.mxu0 0.0
  %3867 = vmatpush1.msra.mxu0 0.0
  %3868 = vmatprep.subr.mxu0 0.0
  %3869 = vmatpush1.msra.mxu0 0.0
  %3870 = vmatprep.subr.mxu0 0.0
  %3871 = vmatpush1.msra.mxu0 0.0
  %3872 = vmatprep.subr.mxu0 0.0
  %3873 = vmatpush1.msra.mxu0 0.0
  %3874 = vmatprep.subr.mxu0 0.0
  %3875 = vmatpush1.msra.mxu0 0.0
  %3876 = vmatprep.subr.mxu0 0.0
  %3877 = vmatpush1.msra.mxu0 0.0
  %3878 = vmatprep.subr.mxu0 0.0
  %3879 = vmatpush1.msra.mxu0 0.0
  %3880 = vmatprep.subr.mxu0 0.0
  %3881 = vmatpush1.msra.mxu0 0.0
  %3882 = vmatprep.subr.mxu0 0.0
  %3883 = vmatpush1.msra.mxu0 0.0
  %3884 = vmatprep.mubr.f32.mxu0 0.0
  %3885 = vmatmul.mubr.f32.gmra.mrb[0].mxu0 %v3802
  %v3886 = vpop.f32.mrb[0].mxu0
  %v3887 = vadd.f32 0.0, %v3886
  %v3888 = vpop.f32.mrb[0].mxu0
  %3889 = vdwg.mxu0
  %v3890 = vadd.f32 %v3799, %v3887
  %v3891 = vld [vmem:[#allocation3 + $0x18] sm:$0xff]
  %s3892 = scalar_lea.vmem %s5, 384
  %v3893 = vld [vmem:[%s3892] sm:$0xff]
  %v3894 = vld [vmem:[%s3892 + $0x8] sm:$0xff]
  %v3895 = vld [vmem:[%s3892 + $0x10] sm:$0xff]
  %v3896 = vld [vmem:[%s3892 + $0x18] sm:$0xff]
  %v3897 = vld [vmem:[%s3892 + $0x20] sm:$0xff]
  %v3898 = vld [vmem:[%s3892 + $0x28] sm:$0xff]
  %v3899 = vld [vmem:[%s3892 + $0x30] sm:$0xff]
  %v3900 = vld [vmem:[%s3892 + $0x38] sm:$0xff]
  %v3901 = vld [vmem:[%s3892 + $0x40] sm:$0xff]
  %v3902 = vld [vmem:[%s3892 + $0x48] sm:$0xff]
  %v3903 = vld [vmem:[%s3892 + $0x50] sm:$0xff]
  %v3904 = vld [vmem:[%s3892 + $0x58] sm:$0xff]
  %v3905 = vld [vmem:[%s3892 + $0x60] sm:$0xff]
  %v3906 = vld [vmem:[%s3892 + $0x68] sm:$0xff]
  %v3907 = vld [vmem:[%s3892 + $0x70] sm:$0xff]
  %v3908 = vld [vmem:[%s3892 + $0x78] sm:$0xff]
  %3909 = vmatprep.subr.mxu0 0.0
  %3910 = vmatpush1.msra.mxu0 %v3893
  %3911 = vmatprep.subr.mxu0 0.0
  %3912 = vmatpush1.msra.mxu0 %v3894
  %3913 = vmatprep.subr.mxu0 0.0
  %3914 = vmatpush1.msra.mxu0 %v3895
  %3915 = vmatprep.subr.mxu0 0.0
  %3916 = vmatpush1.msra.mxu0 %v3896
  %3917 = vmatprep.subr.mxu0 0.0
  %3918 = vmatpush1.msra.mxu0 %v3897
  %3919 = vmatprep.subr.mxu0 0.0
  %3920 = vmatpush1.msra.mxu0 %v3898
  %3921 = vmatprep.subr.mxu0 0.0
  %3922 = vmatpush1.msra.mxu0 %v3899
  %3923 = vmatprep.subr.mxu0 0.0
  %3924 = vmatpush1.msra.mxu0 %v3900
  %3925 = vmatprep.subr.mxu0 0.0
  %3926 = vmatpush1.msra.mxu0 %v3901
  %3927 = vmatprep.subr.mxu0 0.0
  %3928 = vmatpush1.msra.mxu0 %v3902
  %3929 = vmatprep.subr.mxu0 0.0
  %3930 = vmatpush1.msra.mxu0 %v3903
  %3931 = vmatprep.subr.mxu0 0.0
  %3932 = vmatpush1.msra.mxu0 %v3904
  %3933 = vmatprep.subr.mxu0 0.0
  %3934 = vmatpush1.msra.mxu0 %v3905
  %3935 = vmatprep.subr.mxu0 0.0
  %3936 = vmatpush1.msra.mxu0 %v3906
  %3937 = vmatprep.subr.mxu0 0.0
  %3938 = vmatpush1.msra.mxu0 %v3907
  %3939 = vmatprep.subr.mxu0 0.0
  %3940 = vmatpush1.msra.mxu0 %v3908
  %3941 = vmatprep.subr.mxu0 0.0
  %3942 = vmatpush1.msra.mxu0 0.0
  %3943 = vmatprep.subr.mxu0 0.0
  %3944 = vmatpush1.msra.mxu0 0.0
  %3945 = vmatprep.subr.mxu0 0.0
  %3946 = vmatpush1.msra.mxu0 0.0
  %3947 = vmatprep.subr.mxu0 0.0
  %3948 = vmatpush1.msra.mxu0 0.0
  %3949 = vmatprep.subr.mxu0 0.0
  %3950 = vmatpush1.msra.mxu0 0.0
  %3951 = vmatprep.subr.mxu0 0.0
  %3952 = vmatpush1.msra.mxu0 0.0
  %3953 = vmatprep.subr.mxu0 0.0
  %3954 = vmatpush1.msra.mxu0 0.0
  %3955 = vmatprep.subr.mxu0 0.0
  %3956 = vmatpush1.msra.mxu0 0.0
  %3957 = vmatprep.subr.mxu0 0.0
  %3958 = vmatpush1.msra.mxu0 0.0
  %3959 = vmatprep.subr.mxu0 0.0
  %3960 = vmatpush1.msra.mxu0 0.0
  %3961 = vmatprep.subr.mxu0 0.0
  %3962 = vmatpush1.msra.mxu0 0.0
  %3963 = vmatprep.subr.mxu0 0.0
  %3964 = vmatpush1.msra.mxu0 0.0
  %3965 = vmatprep.subr.mxu0 0.0
  %3966 = vmatpush1.msra.mxu0 0.0
  %3967 = vmatprep.subr.mxu0 0.0
  %3968 = vmatpush1.msra.mxu0 0.0
  %3969 = vmatprep.subr.mxu0 0.0
  %3970 = vmatpush1.msra.mxu0 0.0
  %3971 = vmatprep.subr.mxu0 0.0
  %3972 = vmatpush1.msra.mxu0 0.0
  %3973 = vmatprep.mubr.f32.mxu0 0.0
  %3974 = vmatmul.mubr.f32.gmra.mrb[0].mxu0 %v3891
  %v3975 = vpop.f32.mrb[0].mxu0
  %v3976 = vadd.f32 0.0, %v3975
  %v3977 = vpop.f32.mrb[0].mxu0
  %3978 = vdwg.mxu0
  %v3979 = vadd.f32 %v3890, %v3976
  %v3980 = vld [vmem:[%s6] sm:$0x1]
  %v3982 = vlaneseq
  %v3983 = vshrl.u32 %v3982, 7
  %v3984 = vsub.s32 0, %v3983
  %v3985 = vrot.slane %v3980, %v3984
  %v3987 = vadd.f32 %v3979, %v3985
  %v3988 = vmax.f32 %v3987, 0.0
  %v3989 = vld [vmem:[%s7] sm:$0xff]
  %v3990 = vld [vmem:[%s7 + $0x8] sm:$0xff]
  %v3991 = vld [vmem:[%s7 + $0x10] sm:$0xff]
  %v3992 = vld [vmem:[%s7 + $0x18] sm:$0xff]
  %v3993 = vld [vmem:[%s7 + $0x20] sm:$0xff]
  %v3994 = vld [vmem:[%s7 + $0x28] sm:$0xff]
  %v3995 = vld [vmem:[%s7 + $0x30] sm:$0xff]
  %v3996 = vld [vmem:[%s7 + $0x38] sm:$0xff]
  %v3997 = vld [vmem:[%s7 + $0x40] sm:$0xff]
  %v3998 = vld [vmem:[%s7 + $0x48] sm:$0xff]
  %v3999 = vld [vmem:[%s7 + $0x50] sm:$0xff]
  %v4000 = vld [vmem:[%s7 + $0x58] sm:$0xff]
  %v4001 = vld [vmem:[%s7 + $0x60] sm:$0xff]
  %v4002 = vld [vmem:[%s7 + $0x68] sm:$0xff]
  %v4003 = vld [vmem:[%s7 + $0x70] sm:$0xff]
  %v4004 = vld [vmem:[%s7 + $0x78] sm:$0xff]
  %v4005 = vld [vmem:[%s8] sm:$0x1]
  %v4007 = vlaneseq
  %v4008 = vshrl.u32 %v4007, 7
  %v4009 = vsub.s32 0, %v4008
  %v4010 = vrot.slane %v4005, %v4009
  %4012 = vmatprep.subr.mxu0 0.0
  %4013 = vmatpush1.msra.mxu0 %v3989
  %4014 = vmatprep.subr.mxu0 0.0
  %4015 = vmatpush1.msra.mxu0 %v3990
  %4016 = vmatprep.subr.mxu0 0.0
  %4017 = vmatpush1.msra.mxu0 %v3991
  %4018 = vmatprep.subr.mxu0 0.0
  %4019 = vmatpush1.msra.mxu0 %v3992
  %4020 = vmatprep.subr.mxu0 0.0
  %4021 = vmatpush1.msra.mxu0 %v3993
  %4022 = vmatprep.subr.mxu0 0.0
  %4023 = vmatpush1.msra.mxu0 %v3994
  %4024 = vmatprep.subr.mxu0 0.0
  %4025 = vmatpush1.msra.mxu0 %v3995
  %4026 = vmatprep.subr.mxu0 0.0
  %4027 = vmatpush1.msra.mxu0 %v3996
  %4028 = vmatprep.subr.mxu0 0.0
  %4029 = vmatpush1.msra.mxu0 %v3997
  %4030 = vmatprep.subr.mxu0 0.0
  %4031 = vmatpush1.msra.mxu0 %v3998
  %4032 = vmatprep.subr.mxu0 0.0
  %4033 = vmatpush1.msra.mxu0 %v3999
  %4034 = vmatprep.subr.mxu0 0.0
  %4035 = vmatpush1.msra.mxu0 %v4000
  %4036 = vmatprep.subr.mxu0 0.0
  %4037 = vmatpush1.msra.mxu0 %v4001
  %4038 = vmatprep.subr.mxu0 0.0
  %4039 = vmatpush1.msra.mxu0 %v4002
  %4040 = vmatprep.subr.mxu0 0.0
  %4041 = vmatpush1.msra.mxu0 %v4003
  %4042 = vmatprep.subr.mxu0 0.0
  %4043 = vmatpush1.msra.mxu0 %v4004
  %4044 = vmatprep.subr.mxu0 0.0
  %4045 = vmatpush1.msra.mxu0 0.0
  %4046 = vmatprep.subr.mxu0 0.0
  %4047 = vmatpush1.msra.mxu0 0.0
  %4048 = vmatprep.subr.mxu0 0.0
  %4049 = vmatpush1.msra.mxu0 0.0
  %4050 = vmatprep.subr.mxu0 0.0
  %4051 = vmatpush1.msra.mxu0 0.0
  %4052 = vmatprep.subr.mxu0 0.0
  %4053 = vmatpush1.msra.mxu0 0.0
  %4054 = vmatprep.subr.mxu0 0.0
  %4055 = vmatpush1.msra.mxu0 0.0
  %4056 = vmatprep.subr.mxu0 0.0
  %4057 = vmatpush1.msra.mxu0 0.0
  %4058 = vmatprep.subr.mxu0 0.0
  %4059 = vmatpush1.msra.mxu0 0.0
  %4060 = vmatprep.subr.mxu0 0.0
  %4061 = vmatpush1.msra.mxu0 0.0
  %4062 = vmatprep.subr.mxu0 0.0
  %4063 = vmatpush1.msra.mxu0 0.0
  %4064 = vmatprep.subr.mxu0 0.0
  %4065 = vmatpush1.msra.mxu0 0.0
  %4066 = vmatprep.subr.mxu0 0.0
  %4067 = vmatpush1.msra.mxu0 0.0
  %4068 = vmatprep.subr.mxu0 0.0
  %4069 = vmatpush1.msra.mxu0 0.0
  %4070 = vmatprep.subr.mxu0 0.0
  %4071 = vmatpush1.msra.mxu0 0.0
  %4072 = vmatprep.subr.mxu0 0.0
  %4073 = vmatpush1.msra.mxu0 0.0
  %4074 = vmatprep.subr.mxu0 0.0
  %4075 = vmatpush1.msra.mxu0 0.0
  %4076 = vmatprep.mubr.f32.mxu0 0.0
  %4077 = vmatmul.mubr.f32.gmra.mrb[0].mxu0 %v3988
  %v4078 = vpop.f32.mrb[0].mxu0
  %v4079 = vadd.f32 %v4010, %v4078
  %v4080 = vpop.f32.mrb[0].mxu0
  %4081 = vdwg.mxu0
  %v4082 = vmax.f32 %v4079, 0.0
  %v4083 = vld [vmem:[%s9] sm:$0xff]
  %v4084 = vld [vmem:[%s9 + $0x8] sm:$0xff]
  %v4085 = vld [vmem:[%s9 + $0x10] sm:$0xff]
  %v4086 = vld [vmem:[%s9 + $0x18] sm:$0xff]
  %v4087 = vld [vmem:[%s9 + $0x20] sm:$0xff]
  %v4088 = vld [vmem:[%s9 + $0x28] sm:$0xff]
  %v4089 = vld [vmem:[%s9 + $0x30] sm:$0xff]
  %v4090 = vld [vmem:[%s9 + $0x38] sm:$0xff]
  %v4091 = vld [vmem:[%s9 + $0x40] sm:$0xff]
  %v4092 = vld [vmem:[%s9 + $0x48] sm:$0xff]
  %v4093 = vld [vmem:[%s9 + $0x50] sm:$0xff]
  %v4094 = vld [vmem:[%s9 + $0x58] sm:$0xff]
  %v4095 = vld [vmem:[%s9 + $0x60] sm:$0xff]
  %v4096 = vld [vmem:[%s9 + $0x68] sm:$0xff]
  %v4097 = vld [vmem:[%s9 + $0x70] sm:$0xff]
  %v4098 = vld [vmem:[%s9 + $0x78] sm:$0xff]
  %v4099 = vld [vmem:[%s10] sm:$0x1]
  %v4101 = vlaneseq
  %v4102 = vshrl.u32 %v4101, 7
  %v4103 = vsub.s32 0, %v4102
  %v4104 = vrot.slane %v4099, %v4103
  %4106 = vmatprep.subr.mxu0 0.0
  %4107 = vmatpush1.msra.mxu0 %v4083
  %4108 = vmatprep.subr.mxu0 0.0
  %4109 = vmatpush1.msra.mxu0 %v4084
  %4110 = vmatprep.subr.mxu0 0.0
  %4111 = vmatpush1.msra.mxu0 %v4085
  %4112 = vmatprep.subr.mxu0 0.0
  %4113 = vmatpush1.msra.mxu0 %v4086
  %4114 = vmatprep.subr.mxu0 0.0
  %4115 = vmatpush1.msra.mxu0 %v4087
  %4116 = vmatprep.subr.mxu0 0.0
  %4117 = vmatpush1.msra.mxu0 %v4088
  %4118 = vmatprep.subr.mxu0 0.0
  %4119 = vmatpush1.msra.mxu0 %v4089
  %4120 = vmatprep.subr.mxu0 0.0
  %4121 = vmatpush1.msra.mxu0 %v4090
  %4122 = vmatprep.subr.mxu0 0.0
  %4123 = vmatpush1.msra.mxu0 %v4091
  %4124 = vmatprep.subr.mxu0 0.0
  %4125 = vmatpush1.msra.mxu0 %v4092
  %4126 = vmatprep.subr.mxu0 0.0
  %4127 = vmatpush1.msra.mxu0 %v4093
  %4128 = vmatprep.subr.mxu0 0.0
  %4129 = vmatpush1.msra.mxu0 %v4094
  %4130 = vmatprep.subr.mxu0 0.0
  %4131 = vmatpush1.msra.mxu0 %v4095
  %4132 = vmatprep.subr.mxu0 0.0
  %4133 = vmatpush1.msra.mxu0 %v4096
  %4134 = vmatprep.subr.mxu0 0.0
  %4135 = vmatpush1.msra.mxu0 %v4097
  %4136 = vmatprep.subr.mxu0 0.0
  %4137 = vmatpush1.msra.mxu0 %v4098
  %4138 = vmatprep.subr.mxu0 0.0
  %4139 = vmatpush1.msra.mxu0 0.0
  %4140 = vmatprep.subr.mxu0 0.0
  %4141 = vmatpush1.msra.mxu0 0.0
  %4142 = vmatprep.subr.mxu0 0.0
  %4143 = vmatpush1.msra.mxu0 0.0
  %4144 = vmatprep.subr.mxu0 0.0
  %4145 = vmatpush1.msra.mxu0 0.0
  %4146 = vmatprep.subr.mxu0 0.0
  %4147 = vmatpush1.msra.mxu0 0.0
  %4148 = vmatprep.subr.mxu0 0.0
  %4149 = vmatpush1.msra.mxu0 0.0
  %4150 = vmatprep.subr.mxu0 0.0
  %4151 = vmatpush1.msra.mxu0 0.0
  %4152 = vmatprep.subr.mxu0 0.0
  %4153 = vmatpush1.msra.mxu0 0.0
  %4154 = vmatprep.subr.mxu0 0.0
  %4155 = vmatpush1.msra.mxu0 0.0
  %4156 = vmatprep.subr.mxu0 0.0
  %4157 = vmatpush1.msra.mxu0 0.0
  %4158 = vmatprep.subr.mxu0 0.0
  %4159 = vmatpush1.msra.mxu0 0.0
  %4160 = vmatprep.subr.mxu0 0.0
  %4161 = vmatpush1.msra.mxu0 0.0
  %4162 = vmatprep.subr.mxu0 0.0
  %4163 = vmatpush1.msra.mxu0 0.0
  %4164 = vmatprep.subr.mxu0 0.0
  %4165 = vmatpush1.msra.mxu0 0.0
  %4166 = vmatprep.subr.mxu0 0.0
  %4167 = vmatpush1.msra.mxu0 0.0
  %4168 = vmatprep.subr.mxu0 0.0
  %4169 = vmatpush1.msra.mxu0 0.0
  %4170 = vmatprep.mubr.f32.mxu0 0.0
  %4171 = vmatmul.mubr.f32.gmra.mrb[0].mxu0 %v4082
  %v4172 = vpop.f32.mrb[0].mxu0
  %v4173 = vadd.f32 %v4104, %v4172
  %v4174 = vpop.f32.mrb[0].mxu0
  %4175 = vdwg.mxu0
  %4176 = vst [vmem:[%s11] sm:$0xff] %v4173
  // Predicated region
  $region46: #{network_forward.1} parent=0 // pred_check
    _
  $region47: #{network_forward.1} parent=0 // pred_check_branch
    %4178 = sbr.rel (0) target = $region49
  $region48: #{network_forward.1} parent=0 // pred_region
    _
  $region49: #{network_forward.1} parent=0 // pred_fallthru
    _
  // Predicated region
  $region50: #{network_forward.1} parent=0 // pred_check
    _
  $region51: #{network_forward.1} parent=0 // pred_check_branch
    %4180 = sbr.rel (0) target = $region53
  $region52: #{network_forward.1} parent=0 // pred_region
    _
  $region53: #{network_forward.1} parent=0 // pred_fallthru
    _

</llo_original>
